<compile_context>
chip_gen: v7x
topology: tpu7x:2x2x1
jax: 0.10.0
libtpu: 0.0.40
codegen_flags: <defaults>
</compile_context>

<pallas_src>
import functools
import math

import jax
import jax.numpy as jnp
from jax.experimental import pallas as pl
from jax.experimental.pallas import tpu as pltpu

# ---- small synthetic config (BERTweet-large is 24x1024; scaled down) ----
VOCAB      = 64
HIDDEN     = 128
N_HEADS    = 4
HEAD_DIM   = HIDDEN // N_HEADS
FFN        = 256
N_LAYERS   = 2
NUM_LABELS = 2          # HF default num_labels for SequenceClassification
LOGITS_PAD = 128        # pad logits to a full 128-lane vreg; slice outside
MAX_POS    = 32
PAD_IDX    = 1          # RoBERTa padding_idx (positions offset by it)
LN_EPS     = 1e-5


# ----------------------- fused full-model Pallas kernel ---------------------

def _encoder_kernel(nodes_ref, pos_ref, mask_ref,
                    word_emb_ref, pos_emb_ref, type_emb_ref,
                    emb_g_ref, emb_b_ref,
                    wqkv_ref, bqkv_ref, wo_ref, bo_ref,
                    ln1_g_ref, ln1_b_ref,
                    wi_ref, bi_ref, wf_ref, bf_ref,
                    ln2_g_ref, ln2_b_ref,
                    head_w_ref, head_b_ref, out_w_ref, out_b_ref,
                    logits_ref, *, B, S):
    T = B * S
    f32 = jnp.float32
    bf16 = jnp.bfloat16

    def layernorm(x, g, b):
        # single-pass stats: mean(x) and mean(x^2) are independent reductions
        mu = jnp.mean(x, axis=-1, keepdims=True)
        var = jnp.mean(x * x, axis=-1, keepdims=True) - mu * mu
        return (x - mu) * jax.lax.rsqrt(var + LN_EPS) * g + b

    # ---- embeddings in-kernel: one-hot matmuls on the MXU (tiny tables) ----
    tok_iota = jax.lax.broadcasted_iota(jnp.int32, (T, VOCAB), 1)
    pos_iota = jax.lax.broadcasted_iota(jnp.int32, (T, MAX_POS), 1)
    tok_oh = jnp.where(nodes_ref[...] == tok_iota, 1.0, 0.0).astype(bf16)
    pos_oh = jnp.where(pos_ref[...] == pos_iota, 1.0, 0.0).astype(bf16)
    x = (jnp.dot(tok_oh, word_emb_ref[...], preferred_element_type=f32)
         + jnp.dot(pos_oh, pos_emb_ref[...], preferred_element_type=f32)
         + type_emb_ref[...])
    h = layernorm(x, emb_g_ref[...], emb_b_ref[...])                 # (T, H) f32

    # additive attention-mask bias, replicated per head: (N_HEADS*B, 1, S)
    neg = ((mask_ref[...] - 1.0) * 1e9)[:, None, :]                  # (B, 1, S)
    bias = jnp.concatenate([neg] * N_HEADS, axis=0)                  # (NH*B, 1, S)
    scale = 1.0 / math.sqrt(HEAD_DIM)

    def split_heads(x2d):
        # (T, H) -> (N_HEADS*B, S, HEAD_DIM); head-major merged batch dim.
        heads = [x2d[:, hd * HEAD_DIM:(hd + 1) * HEAD_DIM].reshape(B, S, HEAD_DIM)
                 for hd in range(N_HEADS)]
        return jnp.concatenate(heads, axis=0)

    # ---- transformer encoder layers (statically unrolled) ----
    # TODO(synk): at real BERTweet-large sizes, stream weights per layer via a
    # grid=(N_LAYERS,...) with index_map l->(l,0,0) instead of full residency
    # (v7x has only 64 MiB VMEM), and shard the batch over the 2 v7x cores.
    for l in range(N_LAYERS):
        wo_l = wo_ref[l]                                             # (NH, D, H) bf16

        # fused QKV projection: bf16 operands, f32 accumulation
        qkv = (jnp.dot(h.astype(bf16), wqkv_ref[l],
                       preferred_element_type=f32) + bqkv_ref[l])    # (T, 3H) f32

        q = split_heads(qkv[:, :HIDDEN]).astype(bf16)                # (NH*B, S, D)
        k = split_heads(qkv[:, HIDDEN:2 * HIDDEN]).astype(bf16)
        v = split_heads(qkv[:, 2 * HIDDEN:]).astype(bf16)

        # one batched einsum over all (head, batch) pairs for scores / context
        s = jnp.einsum("bqd,bkd->bqk", q, k,
                       preferred_element_type=f32) * scale + bias    # (NH*B, S, S)
        s = s - jnp.max(s, axis=-1, keepdims=True)
        p = jnp.exp(s)
        p = p / jnp.sum(p, axis=-1, keepdims=True)                   # exact softmax
        ctx = jnp.einsum("bqk,bkd->bqd", p.astype(bf16), v,
                         preferred_element_type=f32).astype(bf16)    # (NH*B, S, D)

        # accumulated per-head output projection (no lane concat / merge relayout)
        attn = jnp.dot(ctx[0:B].reshape(T, HEAD_DIM), wo_l[0],
                       preferred_element_type=f32)
        for hd in range(1, N_HEADS):
            ch = ctx[hd * B:(hd + 1) * B].reshape(T, HEAD_DIM)
            attn = attn + jnp.dot(ch, wo_l[hd], preferred_element_type=f32)
        attn = attn + bo_ref[l]
        h = layernorm(attn + h, ln1_g_ref[l], ln1_b_ref[l])

        # feed-forward
        ff = (jnp.dot(h.astype(bf16), wi_ref[l],
                      preferred_element_type=f32) + bi_ref[l])
        # TODO(synk): HF RoBERTa uses exact erf-GELU; tanh-approx kept for a
        # guaranteed Mosaic lowering.
        ff = jax.nn.gelu(ff, approximate=True)
        ff = (jnp.dot(ff.astype(bf16), wf_ref[l],
                      preferred_element_type=f32) + bf_ref[l])
        h = layernorm(ff + h, ln2_g_ref[l], ln2_b_ref[l])

    # ---- RobertaClassificationHead: CLS token -> dense+tanh -> out_proj ----
    cls = h.reshape(B, S, HIDDEN)[:, 0, :]                           # (B, H)
    t = jnp.tanh(jnp.dot(cls.astype(bf16), head_w_ref[...],
                         preferred_element_type=f32) + head_b_ref[...])
    logits = (jnp.dot(t.astype(bf16), out_w_ref[...],
                      preferred_element_type=f32) + out_b_ref[...])  # (B, 128)
    logits_ref[...] = logits.astype(logits_ref.dtype)


# ----------------------------- parameters ----------------------------------

def init_params(key):
    keys = iter(jax.random.split(key, 64))

    def nrm(shape, dtype=jnp.bfloat16):
        return (jax.random.normal(next(keys), shape, jnp.float32) * 0.02).astype(dtype)

    def per_layer(fn):
        return jnp.stack([fn() for _ in range(N_LAYERS)])

    # padding_idx embedding rows zeroed, as in HF RoBERTa
    word_emb = nrm((VOCAB, HIDDEN)).at[PAD_IDX].set(0)
    pos_emb = nrm((MAX_POS, HIDDEN)).at[PAD_IDX].set(0)

    out_w = nrm((HIDDEN, NUM_LABELS), jnp.float32)
    out_w_pad = (jnp.zeros((HIDDEN, LOGITS_PAD), jnp.float32)
                 .at[:, :NUM_LABELS].set(out_w).astype(jnp.bfloat16))

    return {
        "word_emb": word_emb, "pos_emb": pos_emb,
        "type_emb": nrm((1, HIDDEN), jnp.float32),
        "emb_ln_g": jnp.ones((1, HIDDEN), jnp.float32),
        "emb_ln_b": jnp.zeros((1, HIDDEN), jnp.float32),
        "wqkv": per_layer(lambda: nrm((HIDDEN, 3 * HIDDEN))),
        "bqkv": jnp.zeros((N_LAYERS, 1, 3 * HIDDEN), jnp.float32),
        # attention output projection pre-split per head: (L, NH, D, H)
        "wo": per_layer(lambda: nrm((N_HEADS, HEAD_DIM, HIDDEN))),
        "bo": jnp.zeros((N_LAYERS, 1, HIDDEN), jnp.float32),
        "ln1_g": jnp.ones((N_LAYERS, 1, HIDDEN), jnp.float32),
        "ln1_b": jnp.zeros((N_LAYERS, 1, HIDDEN), jnp.float32),
        "wi": per_layer(lambda: nrm((HIDDEN, FFN))),
        "bi": jnp.zeros((N_LAYERS, 1, FFN), jnp.float32),
        "wf": per_layer(lambda: nrm((FFN, HIDDEN))),
        "bf": jnp.zeros((N_LAYERS, 1, HIDDEN), jnp.float32),
        "ln2_g": jnp.ones((N_LAYERS, 1, HIDDEN), jnp.float32),
        "ln2_b": jnp.zeros((N_LAYERS, 1, HIDDEN), jnp.float32),
        # RobertaClassificationHead: dense(H,H)+tanh, out_proj(H,num_labels)
        "head_w": nrm((HIDDEN, HIDDEN)),
        "head_b": jnp.zeros((1, HIDDEN), jnp.float32),
        "out_w_pad": out_w_pad,
        "out_b_pad": jnp.zeros((1, LOGITS_PAD), jnp.float32),
    }


# ----------------------------- forward pass --------------------------------

def forward(params, nodes, mask):
    """nodes: int32 (B, S) token ids; mask: (B, S) 1/0 attention mask.
    Returns logits (B, NUM_LABELS) — matches `self.bert(nodes, mask).logits`."""
    B, S = nodes.shape
    T = B * S
    maskf = mask.astype(jnp.float32)
    # RoBERTa position ids: cumsum of mask (1-based), offset by padding_idx
    pos_ids = (jnp.cumsum(mask, axis=1) * mask + PAD_IDX).astype(jnp.int32)

    args = (nodes.reshape(T, 1).astype(jnp.int32),
            pos_ids.reshape(T, 1),
            maskf,
            params["word_emb"], params["pos_emb"], params["type_emb"],
            params["emb_ln_g"], params["emb_ln_b"],
            params["wqkv"], params["bqkv"], params["wo"], params["bo"],
            params["ln1_g"], params["ln1_b"],
            params["wi"], params["bi"], params["wf"], params["bf"],
            params["ln2_g"], params["ln2_b"],
            params["head_w"], params["head_b"],
            params["out_w_pad"], params["out_b_pad"])

    # rough static cost so XLA can schedule around the fused call
    flops = (2 * T * VOCAB * HIDDEN + 2 * T * MAX_POS * HIDDEN
             + N_LAYERS * (2 * T * HIDDEN * 3 * HIDDEN
                           + 2 * 2 * N_HEADS * B * S * S * HEAD_DIM
                           + 2 * T * HIDDEN * HIDDEN
                           + 2 * 2 * T * HIDDEN * FFN)
             + 2 * B * HIDDEN * HIDDEN + 2 * B * HIDDEN * LOGITS_PAD)
    transcendentals = N_LAYERS * (N_HEADS * B * S * S + T * FFN) + B * HIDDEN
    bytes_accessed = (sum(int(a.size) * a.dtype.itemsize for a in args)
                      + B * LOGITS_PAD * 4)

    logits_pad = pl.pallas_call(
        functools.partial(_encoder_kernel, B=B, S=S),
        out_shape=jax.ShapeDtypeStruct((B, LOGITS_PAD), jnp.float32),
        in_specs=[pl.BlockSpec(memory_space=pltpu.MemorySpace.VMEM) for _ in args],
        out_specs=pl.BlockSpec(memory_space=pltpu.MemorySpace.VMEM),
        compiler_params=pltpu.CompilerParams(vmem_limit_bytes=32 * 1024 * 1024),
        cost_estimate=pl.CostEstimate(flops=int(flops),
                                      transcendentals=int(transcendentals),
                                      bytes_accessed=int(bytes_accessed)),
    )(*args)

    return logits_pad[:, :NUM_LABELS]


# --------------------------------- main -------------------------------------

if __name__ == "__main__":
    B, S = 2, 8
    key = jax.random.PRNGKey(0)
    k_param, k_tok = jax.random.split(key)

    params = init_params(k_param)
    nodes = jax.random.randint(k_tok, (B, S), 2, VOCAB, dtype=jnp.int32)
    # deterministic attention mask: batch 0 full, batch 1 padded at the tail
    mask = jnp.array([[1, 1, 1, 1, 1, 1, 1, 1],
                      [1, 1, 1, 1, 1, 0, 0, 0]], dtype=jnp.int32)

    logits = jax.jit(forward)(params, nodes, mask)
    jax.block_until_ready(logits)
    assert logits.shape == (B, NUM_LABELS) and logits.dtype == jnp.float32
    print("KERNEL_OK")
</pallas_src>

<mosaic_0001>
module attributes {stable_mosaic.version = 11 : i64} {
  func.func @_encoder_kernel(%arg0: memref<16x1xi32, #tpu.memory_space<vmem>>, %arg1: memref<16x1xi32, #tpu.memory_space<vmem>>, %arg2: memref<2x8xf32, #tpu.memory_space<vmem>>, %arg3: memref<64x128xbf16, #tpu.memory_space<vmem>>, %arg4: memref<32x128xbf16, #tpu.memory_space<vmem>>, %arg5: memref<1x128xf32, #tpu.memory_space<vmem>>, %arg6: memref<1x128xf32, #tpu.memory_space<vmem>>, %arg7: memref<1x128xf32, #tpu.memory_space<vmem>>, %arg8: memref<2x128x384xbf16, #tpu.memory_space<vmem>>, %arg9: memref<2x1x384xf32, #tpu.memory_space<vmem>>, %arg10: memref<2x4x32x128xbf16, #tpu.memory_space<vmem>>, %arg11: memref<2x1x128xf32, #tpu.memory_space<vmem>>, %arg12: memref<2x1x128xf32, #tpu.memory_space<vmem>>, %arg13: memref<2x1x128xf32, #tpu.memory_space<vmem>>, %arg14: memref<2x128x256xbf16, #tpu.memory_space<vmem>>, %arg15: memref<2x1x256xf32, #tpu.memory_space<vmem>>, %arg16: memref<2x256x128xbf16, #tpu.memory_space<vmem>>, %arg17: memref<2x1x128xf32, #tpu.memory_space<vmem>>, %arg18: memref<2x1x128xf32, #tpu.memory_space<vmem>>, %arg19: memref<2x1x128xf32, #tpu.memory_space<vmem>>, %arg20: memref<128x128xbf16, #tpu.memory_space<vmem>>, %arg21: memref<1x128xf32, #tpu.memory_space<vmem>>, %arg22: memref<128x128xbf16, #tpu.memory_space<vmem>>, %arg23: memref<1x128xf32, #tpu.memory_space<vmem>>, %arg24: memref<2x128xf32, #tpu.memory_space<vmem>>) attributes {dimension_semantics = [], scalar_prefetch = 0 : i64, scratch_operands = 0 : i64, tpu.core_type = #tpu.core_type<tc>} {
    %0 = tpu.iota {dimensions = array<i32: 1>} : vector<16x64xi32>
    %1 = tpu.iota {dimensions = array<i32: 1>} : vector<16x32xi32>
    %c0 = arith.constant 0 : index
    %c0_0 = arith.constant 0 : index
    %2 = vector.load %arg0[%c0, %c0_0] : memref<16x1xi32, #tpu.memory_space<vmem>>, vector<16x1xi32>
    %3 = vector.broadcast %2 : vector<16x1xi32> to vector<16x64xi32>
    %4 = arith.cmpi eq, %3, %0 : vector<16x64xi32>
    %cst = arith.constant 1.000000e+00 : f32
    %cst_1 = arith.constant 0.000000e+00 : f32
    %5 = vector.broadcast %cst : f32 to vector<16x64xf32>
    %6 = vector.broadcast %cst_1 : f32 to vector<16x64xf32>
    %7 = arith.select %4, %5, %6 : vector<16x64xi1>, vector<16x64xf32>
    %8 = arith.truncf %7 : vector<16x64xf32> to vector<16x64xbf16>
    %c0_2 = arith.constant 0 : index
    %c0_3 = arith.constant 0 : index
    %9 = vector.load %arg1[%c0_2, %c0_3] : memref<16x1xi32, #tpu.memory_space<vmem>>, vector<16x1xi32>
    %10 = vector.broadcast %9 : vector<16x1xi32> to vector<16x32xi32>
    %11 = arith.cmpi eq, %10, %1 : vector<16x32xi32>
    %cst_4 = arith.constant 1.000000e+00 : f32
    %cst_5 = arith.constant 0.000000e+00 : f32
    %12 = vector.broadcast %cst_4 : f32 to vector<16x32xf32>
    %13 = vector.broadcast %cst_5 : f32 to vector<16x32xf32>
    %14 = arith.select %11, %12, %13 : vector<16x32xi1>, vector<16x32xf32>
    %15 = arith.truncf %14 : vector<16x32xf32> to vector<16x32xbf16>
    %c0_6 = arith.constant 0 : index
    %c0_7 = arith.constant 0 : index
    %16 = vector.load %arg3[%c0_6, %c0_7] : memref<64x128xbf16, #tpu.memory_space<vmem>>, vector<64x128xbf16>
    %cst_8 = arith.constant dense<0.000000e+00> : vector<16x128xf32>
    %17 = tpu.matmul %8, %16, %cst_8 {dimension_numbers = #tpu.dot_dimension_numbers<[1], [0], [0], [1], [0, 0, 1, 1], [], []>} : vector<16x64xbf16>, vector<64x128xbf16>, vector<16x128xf32> -> vector<16x128xf32>
    %c0_9 = arith.constant 0 : index
    %c0_10 = arith.constant 0 : index
    %18 = vector.load %arg4[%c0_9, %c0_10] : memref<32x128xbf16, #tpu.memory_space<vmem>>, vector<32x128xbf16>
    %cst_11 = arith.constant dense<0.000000e+00> : vector<16x128xf32>
    %19 = tpu.matmul %15, %18, %cst_11 {dimension_numbers = #tpu.dot_dimension_numbers<[1], [0], [0], [1], [0, 0, 1, 1], [], []>} : vector<16x32xbf16>, vector<32x128xbf16>, vector<16x128xf32> -> vector<16x128xf32>
    %20 = arith.addf %17, %19 : vector<16x128xf32>
    %c0_12 = arith.constant 0 : index
    %c0_13 = arith.constant 0 : index
    %21 = vector.load %arg5[%c0_12, %c0_13] : memref<1x128xf32, #tpu.memory_space<vmem>>, vector<1x128xf32>
    %22 = vector.broadcast %21 : vector<1x128xf32> to vector<16x128xf32>
    %23 = arith.addf %20, %22 : vector<16x128xf32>
    %c0_14 = arith.constant 0 : index
    %c0_15 = arith.constant 0 : index
    %24 = vector.load %arg6[%c0_14, %c0_15] : memref<1x128xf32, #tpu.memory_space<vmem>>, vector<1x128xf32>
    %c0_16 = arith.constant 0 : index
    %c0_17 = arith.constant 0 : index
    %25 = vector.load %arg7[%c0_16, %c0_17] : memref<1x128xf32, #tpu.memory_space<vmem>>, vector<1x128xf32>
    %cst_18 = arith.constant dense<0.000000e+00> : vector<16xf32>
    %26 = vector.multi_reduction <add>, %23, %cst_18 [1] : vector<16x128xf32> to vector<16xf32>
    %27 = vector.shape_cast %26 : vector<16xf32> to vector<16x1xf32>
    %cst_19 = arith.constant 1.280000e+02 : f32
    %28 = vector.broadcast %cst_19 : f32 to vector<16x1xf32>
    %29 = arith.divf %27, %28 : vector<16x1xf32>
    %30 = arith.mulf %23, %23 : vector<16x128xf32>
    %cst_20 = arith.constant dense<0.000000e+00> : vector<16xf32>
    %31 = vector.multi_reduction <add>, %30, %cst_20 [1] : vector<16x128xf32> to vector<16xf32>
    %32 = vector.shape_cast %31 : vector<16xf32> to vector<16x1xf32>
    %cst_21 = arith.constant 1.280000e+02 : f32
    %33 = vector.broadcast %cst_21 : f32 to vector<16x1xf32>
    %34 = arith.divf %32, %33 : vector<16x1xf32>
    %35 = arith.mulf %29, %29 : vector<16x1xf32>
    %36 = arith.subf %34, %35 : vector<16x1xf32>
    %37 = vector.broadcast %29 : vector<16x1xf32> to vector<16x128xf32>
    %38 = arith.subf %23, %37 : vector<16x128xf32>
    %cst_22 = arith.constant 9.99999974E-6 : f32
    %39 = vector.broadcast %cst_22 : f32 to vector<16x1xf32>
    %40 = arith.addf %36, %39 : vector<16x1xf32>
    %41 = math.rsqrt %40 : vector<16x1xf32>
    %42 = vector.broadcast %41 : vector<16x1xf32> to vector<16x128xf32>
    %43 = arith.mulf %38, %42 : vector<16x128xf32>
    %44 = vector.broadcast %24 : vector<1x128xf32> to vector<16x128xf32>
    %45 = arith.mulf %43, %44 : vector<16x128xf32>
    %46 = vector.broadcast %25 : vector<1x128xf32> to vector<16x128xf32>
    %47 = arith.addf %45, %46 : vector<16x128xf32>
    %c0_23 = arith.constant 0 : index
    %c0_24 = arith.constant 0 : index
    %48 = vector.load %arg2[%c0_23, %c0_24] : memref<2x8xf32, #tpu.memory_space<vmem>>, vector<2x8xf32>
    %cst_25 = arith.constant 1.000000e+00 : f32
    %49 = vector.broadcast %cst_25 : f32 to vector<2x8xf32>
    %50 = arith.subf %48, %49 : vector<2x8xf32>
    %cst_26 = arith.constant 1.000000e+09 : f32
    %51 = vector.broadcast %cst_26 : f32 to vector<2x8xf32>
    %52 = arith.mulf %50, %51 : vector<2x8xf32>
    %53 = vector.shape_cast %52 : vector<2x8xf32> to vector<2x1x8xf32>
    %54 = tpu.concatenate %53, %53, %53, %53 in 0 : vector<2x1x8xf32>, vector<2x1x8xf32>, vector<2x1x8xf32>, vector<2x1x8xf32> -> vector<8x1x8xf32>
    %c0_27 = arith.constant 0 : index
    %c0_28 = arith.constant 0 : index
    %c0_29 = arith.constant 0 : index
    %c0_30 = arith.constant 0 : index
    %55 = vector.load %arg10[%c0_27, %c0_28, %c0_29, %c0_30] : memref<2x4x32x128xbf16, #tpu.memory_space<vmem>>, vector<1x4x32x128xbf16>
    %56 = vector.shape_cast %55 : vector<1x4x32x128xbf16> to vector<4x32x128xbf16>
    %57 = arith.truncf %47 : vector<16x128xf32> to vector<16x128xbf16>
    %c0_31 = arith.constant 0 : index
    %c0_32 = arith.constant 0 : index
    %c0_33 = arith.constant 0 : index
    %58 = vector.load %arg8[%c0_31, %c0_32, %c0_33] : memref<2x128x384xbf16, #tpu.memory_space<vmem>>, vector<1x128x384xbf16>
    %59 = vector.shape_cast %58 : vector<1x128x384xbf16> to vector<128x384xbf16>
    %cst_34 = arith.constant dense<0.000000e+00> : vector<16x384xf32>
    %60 = tpu.matmul %57, %59, %cst_34 {dimension_numbers = #tpu.dot_dimension_numbers<[1], [0], [0], [1], [0, 0, 1, 1], [], []>} : vector<16x128xbf16>, vector<128x384xbf16>, vector<16x384xf32> -> vector<16x384xf32>
    %c0_35 = arith.constant 0 : index
    %c0_36 = arith.constant 0 : index
    %c0_37 = arith.constant 0 : index
    %61 = vector.load %arg9[%c0_35, %c0_36, %c0_37] : memref<2x1x384xf32, #tpu.memory_space<vmem>>, vector<1x1x384xf32>
    %62 = vector.shape_cast %61 : vector<1x1x384xf32> to vector<1x384xf32>
    %63 = vector.broadcast %62 : vector<1x384xf32> to vector<16x384xf32>
    %64 = arith.addf %60, %63 : vector<16x384xf32>
    %65 = vector.extract_strided_slice %64 {offsets = [0, 0], sizes = [16, 128], strides = [1, 1]} : vector<16x384xf32> to vector<16x128xf32>
    %66 = vector.extract_strided_slice %65 {offsets = [0, 0], sizes = [16, 32], strides = [1, 1]} : vector<16x128xf32> to vector<16x32xf32>
    %67 = vector.shape_cast %66 : vector<16x32xf32> to vector<2x8x32xf32>
    %68 = vector.extract_strided_slice %65 {offsets = [0, 32], sizes = [16, 32], strides = [1, 1]} : vector<16x128xf32> to vector<16x32xf32>
    %69 = vector.shape_cast %68 : vector<16x32xf32> to vector<2x8x32xf32>
    %70 = vector.extract_strided_slice %65 {offsets = [0, 64], sizes = [16, 32], strides = [1, 1]} : vector<16x128xf32> to vector<16x32xf32>
    %71 = vector.shape_cast %70 : vector<16x32xf32> to vector<2x8x32xf32>
    %72 = vector.extract_strided_slice %65 {offsets = [0, 96], sizes = [16, 32], strides = [1, 1]} : vector<16x128xf32> to vector<16x32xf32>
    %73 = vector.shape_cast %72 : vector<16x32xf32> to vector<2x8x32xf32>
    %74 = tpu.concatenate %67, %69, %71, %73 in 0 : vector<2x8x32xf32>, vector<2x8x32xf32>, vector<2x8x32xf32>, vector<2x8x32xf32> -> vector<8x8x32xf32>
    %75 = arith.truncf %74 : vector<8x8x32xf32> to vector<8x8x32xbf16>
    %76 = vector.extract_strided_slice %64 {offsets = [0, 128], sizes = [16, 128], strides = [1, 1]} : vector<16x384xf32> to vector<16x128xf32>
    %77 = vector.extract_strided_slice %76 {offsets = [0, 0], sizes = [16, 32], strides = [1, 1]} : vector<16x128xf32> to vector<16x32xf32>
    %78 = vector.shape_cast %77 : vector<16x32xf32> to vector<2x8x32xf32>
    %79 = vector.extract_strided_slice %76 {offsets = [0, 32], sizes = [16, 32], strides = [1, 1]} : vector<16x128xf32> to vector<16x32xf32>
    %80 = vector.shape_cast %79 : vector<16x32xf32> to vector<2x8x32xf32>
    %81 = vector.extract_strided_slice %76 {offsets = [0, 64], sizes = [16, 32], strides = [1, 1]} : vector<16x128xf32> to vector<16x32xf32>
    %82 = vector.shape_cast %81 : vector<16x32xf32> to vector<2x8x32xf32>
    %83 = vector.extract_strided_slice %76 {offsets = [0, 96], sizes = [16, 32], strides = [1, 1]} : vector<16x128xf32> to vector<16x32xf32>
    %84 = vector.shape_cast %83 : vector<16x32xf32> to vector<2x8x32xf32>
    %85 = tpu.concatenate %78, %80, %82, %84 in 0 : vector<2x8x32xf32>, vector<2x8x32xf32>, vector<2x8x32xf32>, vector<2x8x32xf32> -> vector<8x8x32xf32>
    %86 = arith.truncf %85 : vector<8x8x32xf32> to vector<8x8x32xbf16>
    %87 = vector.extract_strided_slice %64 {offsets = [0, 256], sizes = [16, 128], strides = [1, 1]} : vector<16x384xf32> to vector<16x128xf32>
    %88 = vector.extract_strided_slice %87 {offsets = [0, 0], sizes = [16, 32], strides = [1, 1]} : vector<16x128xf32> to vector<16x32xf32>
    %89 = vector.shape_cast %88 : vector<16x32xf32> to vector<2x8x32xf32>
    %90 = vector.extract_strided_slice %87 {offsets = [0, 32], sizes = [16, 32], strides = [1, 1]} : vector<16x128xf32> to vector<16x32xf32>
    %91 = vector.shape_cast %90 : vector<16x32xf32> to vector<2x8x32xf32>
    %92 = vector.extract_strided_slice %87 {offsets = [0, 64], sizes = [16, 32], strides = [1, 1]} : vector<16x128xf32> to vector<16x32xf32>
    %93 = vector.shape_cast %92 : vector<16x32xf32> to vector<2x8x32xf32>
    %94 = vector.extract_strided_slice %87 {offsets = [0, 96], sizes = [16, 32], strides = [1, 1]} : vector<16x128xf32> to vector<16x32xf32>
    %95 = vector.shape_cast %94 : vector<16x32xf32> to vector<2x8x32xf32>
    %96 = tpu.concatenate %89, %91, %93, %95 in 0 : vector<2x8x32xf32>, vector<2x8x32xf32>, vector<2x8x32xf32>, vector<2x8x32xf32> -> vector<8x8x32xf32>
    %97 = arith.truncf %96 : vector<8x8x32xf32> to vector<8x8x32xbf16>
    "tpu.trace_start"() <{level = 10 : i32, message = "bqd,bkd->bqk"}> : () -> ()
    %cst_38 = arith.constant dense<0.000000e+00> : vector<8x8x8xf32>
    %98 = tpu.matmul %75, %86, %cst_38 {dimension_numbers = #tpu.dot_dimension_numbers<[2], [2], [1], [1], [0, 0, 0, 1, 1, 1], [0], [0]>} : vector<8x8x32xbf16>, vector<8x8x32xbf16>, vector<8x8x8xf32> -> vector<8x8x8xf32>
    "tpu.trace_stop"() : () -> ()
    %cst_39 = arith.constant 0.176776692 : f32
    %99 = vector.broadcast %cst_39 : f32 to vector<8x8x8xf32>
    %100 = arith.mulf %98, %99 : vector<8x8x8xf32>
    %101 = vector.broadcast %54 : vector<8x1x8xf32> to vector<8x8x8xf32>
    %102 = arith.addf %100, %101 : vector<8x8x8xf32>
    %cst_40 = arith.constant dense<0xFF800000> : vector<8x8xf32>
    %103 = vector.multi_reduction <maximumf>, %102, %cst_40 [2] : vector<8x8x8xf32> to vector<8x8xf32>
    %104 = vector.shape_cast %103 : vector<8x8xf32> to vector<8x8x1xf32>
    %105 = vector.broadcast %104 : vector<8x8x1xf32> to vector<8x8x8xf32>
    %106 = arith.subf %102, %105 : vector<8x8x8xf32>
    %107 = math.exp %106 : vector<8x8x8xf32>
    %cst_41 = arith.constant dense<0.000000e+00> : vector<8x8xf32>
    %108 = vector.multi_reduction <add>, %107, %cst_41 [2] : vector<8x8x8xf32> to vector<8x8xf32>
    %109 = vector.shape_cast %108 : vector<8x8xf32> to vector<8x8x1xf32>
    %110 = vector.broadcast %109 : vector<8x8x1xf32> to vector<8x8x8xf32>
    %111 = arith.divf %107, %110 : vector<8x8x8xf32>
    %112 = arith.truncf %111 : vector<8x8x8xf32> to vector<8x8x8xbf16>
    "tpu.trace_start"() <{level = 10 : i32, message = "bqk,bkd->bqd"}> : () -> ()
    %cst_42 = arith.constant dense<0.000000e+00> : vector<8x8x32xf32>
    %113 = tpu.matmul %112, %97, %cst_42 {dimension_numbers = #tpu.dot_dimension_numbers<[2], [1], [1], [2], [0, 0, 0, 1, 1, 2], [0], [0]>} : vector<8x8x8xbf16>, vector<8x8x32xbf16>, vector<8x8x32xf32> -> vector<8x8x32xf32>
    "tpu.trace_stop"() : () -> ()
    %114 = arith.truncf %113 : vector<8x8x32xf32> to vector<8x8x32xbf16>
    %115 = vector.extract_strided_slice %114 {offsets = [0, 0, 0], sizes = [2, 8, 32], strides = [1, 1, 1]} : vector<8x8x32xbf16> to vector<2x8x32xbf16>
    %116 = vector.shape_cast %115 : vector<2x8x32xbf16> to vector<16x32xbf16>
    %117 = vector.extract_strided_slice %56 {offsets = [0, 0, 0], sizes = [1, 32, 128], strides = [1, 1, 1]} : vector<4x32x128xbf16> to vector<1x32x128xbf16>
    %118 = vector.shape_cast %117 : vector<1x32x128xbf16> to vector<32x128xbf16>
    %cst_43 = arith.constant dense<0.000000e+00> : vector<16x128xf32>
    %119 = tpu.matmul %116, %118, %cst_43 {dimension_numbers = #tpu.dot_dimension_numbers<[1], [0], [0], [1], [0, 0, 1, 1], [], []>} : vector<16x32xbf16>, vector<32x128xbf16>, vector<16x128xf32> -> vector<16x128xf32>
    %120 = vector.extract_strided_slice %114 {offsets = [2, 0, 0], sizes = [2, 8, 32], strides = [1, 1, 1]} : vector<8x8x32xbf16> to vector<2x8x32xbf16>
    %121 = vector.shape_cast %120 : vector<2x8x32xbf16> to vector<16x32xbf16>
    %122 = vector.extract_strided_slice %56 {offsets = [1, 0, 0], sizes = [1, 32, 128], strides = [1, 1, 1]} : vector<4x32x128xbf16> to vector<1x32x128xbf16>
    %123 = vector.shape_cast %122 : vector<1x32x128xbf16> to vector<32x128xbf16>
    %cst_44 = arith.constant dense<0.000000e+00> : vector<16x128xf32>
    %124 = tpu.matmul %121, %123, %cst_44 {dimension_numbers = #tpu.dot_dimension_numbers<[1], [0], [0], [1], [0, 0, 1, 1], [], []>} : vector<16x32xbf16>, vector<32x128xbf16>, vector<16x128xf32> -> vector<16x128xf32>
    %125 = arith.addf %119, %124 : vector<16x128xf32>
    %126 = vector.extract_strided_slice %114 {offsets = [4, 0, 0], sizes = [2, 8, 32], strides = [1, 1, 1]} : vector<8x8x32xbf16> to vector<2x8x32xbf16>
    %127 = vector.shape_cast %126 : vector<2x8x32xbf16> to vector<16x32xbf16>
    %128 = vector.extract_strided_slice %56 {offsets = [2, 0, 0], sizes = [1, 32, 128], strides = [1, 1, 1]} : vector<4x32x128xbf16> to vector<1x32x128xbf16>
    %129 = vector.shape_cast %128 : vector<1x32x128xbf16> to vector<32x128xbf16>
    %cst_45 = arith.constant dense<0.000000e+00> : vector<16x128xf32>
    %130 = tpu.matmul %127, %129, %cst_45 {dimension_numbers = #tpu.dot_dimension_numbers<[1], [0], [0], [1], [0, 0, 1, 1], [], []>} : vector<16x32xbf16>, vector<32x128xbf16>, vector<16x128xf32> -> vector<16x128xf32>
    %131 = arith.addf %125, %130 : vector<16x128xf32>
    %132 = vector.extract_strided_slice %114 {offsets = [6, 0, 0], sizes = [2, 8, 32], strides = [1, 1, 1]} : vector<8x8x32xbf16> to vector<2x8x32xbf16>
    %133 = vector.shape_cast %132 : vector<2x8x32xbf16> to vector<16x32xbf16>
    %134 = vector.extract_strided_slice %56 {offsets = [3, 0, 0], sizes = [1, 32, 128], strides = [1, 1, 1]} : vector<4x32x128xbf16> to vector<1x32x128xbf16>
    %135 = vector.shape_cast %134 : vector<1x32x128xbf16> to vector<32x128xbf16>
    %cst_46 = arith.constant dense<0.000000e+00> : vector<16x128xf32>
    %136 = tpu.matmul %133, %135, %cst_46 {dimension_numbers = #tpu.dot_dimension_numbers<[1], [0], [0], [1], [0, 0, 1, 1], [], []>} : vector<16x32xbf16>, vector<32x128xbf16>, vector<16x128xf32> -> vector<16x128xf32>
    %137 = arith.addf %131, %136 : vector<16x128xf32>
    %c0_47 = arith.constant 0 : index
    %c0_48 = arith.constant 0 : index
    %c0_49 = arith.constant 0 : index
    %138 = vector.load %arg11[%c0_47, %c0_48, %c0_49] : memref<2x1x128xf32, #tpu.memory_space<vmem>>, vector<1x1x128xf32>
    %139 = vector.shape_cast %138 : vector<1x1x128xf32> to vector<1x128xf32>
    %140 = vector.broadcast %139 : vector<1x128xf32> to vector<16x128xf32>
    %141 = arith.addf %137, %140 : vector<16x128xf32>
    %142 = arith.addf %141, %47 : vector<16x128xf32>
    %c0_50 = arith.constant 0 : index
    %c0_51 = arith.constant 0 : index
    %c0_52 = arith.constant 0 : index
    %143 = vector.load %arg12[%c0_50, %c0_51, %c0_52] : memref<2x1x128xf32, #tpu.memory_space<vmem>>, vector<1x1x128xf32>
    %144 = vector.shape_cast %143 : vector<1x1x128xf32> to vector<1x128xf32>
    %c0_53 = arith.constant 0 : index
    %c0_54 = arith.constant 0 : index
    %c0_55 = arith.constant 0 : index
    %145 = vector.load %arg13[%c0_53, %c0_54, %c0_55] : memref<2x1x128xf32, #tpu.memory_space<vmem>>, vector<1x1x128xf32>
    %146 = vector.shape_cast %145 : vector<1x1x128xf32> to vector<1x128xf32>
    %cst_56 = arith.constant dense<0.000000e+00> : vector<16xf32>
    %147 = vector.multi_reduction <add>, %142, %cst_56 [1] : vector<16x128xf32> to vector<16xf32>
    %148 = vector.shape_cast %147 : vector<16xf32> to vector<16x1xf32>
    %cst_57 = arith.constant 1.280000e+02 : f32
    %149 = vector.broadcast %cst_57 : f32 to vector<16x1xf32>
    %150 = arith.divf %148, %149 : vector<16x1xf32>
    %151 = arith.mulf %142, %142 : vector<16x128xf32>
    %cst_58 = arith.constant dense<0.000000e+00> : vector<16xf32>
    %152 = vector.multi_reduction <add>, %151, %cst_58 [1] : vector<16x128xf32> to vector<16xf32>
    %153 = vector.shape_cast %152 : vector<16xf32> to vector<16x1xf32>
    %cst_59 = arith.constant 1.280000e+02 : f32
    %154 = vector.broadcast %cst_59 : f32 to vector<16x1xf32>
    %155 = arith.divf %153, %154 : vector<16x1xf32>
    %156 = arith.mulf %150, %150 : vector<16x1xf32>
    %157 = arith.subf %155, %156 : vector<16x1xf32>
    %158 = vector.broadcast %150 : vector<16x1xf32> to vector<16x128xf32>
    %159 = arith.subf %142, %158 : vector<16x128xf32>
    %cst_60 = arith.constant 9.99999974E-6 : f32
    %160 = vector.broadcast %cst_60 : f32 to vector<16x1xf32>
    %161 = arith.addf %157, %160 : vector<16x1xf32>
    %162 = math.rsqrt %161 : vector<16x1xf32>
    %163 = vector.broadcast %162 : vector<16x1xf32> to vector<16x128xf32>
    %164 = arith.mulf %159, %163 : vector<16x128xf32>
    %165 = vector.broadcast %144 : vector<1x128xf32> to vector<16x128xf32>
    %166 = arith.mulf %164, %165 : vector<16x128xf32>
    %167 = vector.broadcast %146 : vector<1x128xf32> to vector<16x128xf32>
    %168 = arith.addf %166, %167 : vector<16x128xf32>
    %169 = arith.truncf %168 : vector<16x128xf32> to vector<16x128xbf16>
    %c0_61 = arith.constant 0 : index
    %c0_62 = arith.constant 0 : index
    %c0_63 = arith.constant 0 : index
    %170 = vector.load %arg14[%c0_61, %c0_62, %c0_63] : memref<2x128x256xbf16, #tpu.memory_space<vmem>>, vector<1x128x256xbf16>
    %171 = vector.shape_cast %170 : vector<1x128x256xbf16> to vector<128x256xbf16>
    %cst_64 = arith.constant dense<0.000000e+00> : vector<16x256xf32>
    %172 = tpu.matmul %169, %171, %cst_64 {dimension_numbers = #tpu.dot_dimension_numbers<[1], [0], [0], [1], [0, 0, 1, 1], [], []>} : vector<16x128xbf16>, vector<128x256xbf16>, vector<16x256xf32> -> vector<16x256xf32>
    %c0_65 = arith.constant 0 : index
    %c0_66 = arith.constant 0 : index
    %c0_67 = arith.constant 0 : index
    %173 = vector.load %arg15[%c0_65, %c0_66, %c0_67] : memref<2x1x256xf32, #tpu.memory_space<vmem>>, vector<1x1x256xf32>
    %174 = vector.shape_cast %173 : vector<1x1x256xf32> to vector<1x256xf32>
    %175 = vector.broadcast %174 : vector<1x256xf32> to vector<16x256xf32>
    %176 = arith.addf %172, %175 : vector<16x256xf32>
    %177 = arith.mulf %176, %176 : vector<16x256xf32>
    %178 = arith.mulf %176, %177 : vector<16x256xf32>
    %cst_68 = arith.constant 4.471500e-02 : f32
    %179 = vector.broadcast %cst_68 : f32 to vector<16x256xf32>
    %180 = arith.mulf %179, %178 : vector<16x256xf32>
    %181 = arith.addf %176, %180 : vector<16x256xf32>
    %cst_69 = arith.constant 0.797884583 : f32
    %182 = vector.broadcast %cst_69 : f32 to vector<16x256xf32>
    %183 = arith.mulf %182, %181 : vector<16x256xf32>
    %184 = math.tanh %183 : vector<16x256xf32>
    %cst_70 = arith.constant 1.000000e+00 : f32
    %185 = vector.broadcast %cst_70 : f32 to vector<16x256xf32>
    %186 = arith.addf %185, %184 : vector<16x256xf32>
    %cst_71 = arith.constant 5.000000e-01 : f32
    %187 = vector.broadcast %cst_71 : f32 to vector<16x256xf32>
    %188 = arith.mulf %187, %186 : vector<16x256xf32>
    %189 = arith.mulf %176, %188 : vector<16x256xf32>
    %190 = arith.truncf %189 : vector<16x256xf32> to vector<16x256xbf16>
    %c0_72 = arith.constant 0 : index
    %c0_73 = arith.constant 0 : index
    %c0_74 = arith.constant 0 : index
    %191 = vector.load %arg16[%c0_72, %c0_73, %c0_74] : memref<2x256x128xbf16, #tpu.memory_space<vmem>>, vector<1x256x128xbf16>
    %192 = vector.shape_cast %191 : vector<1x256x128xbf16> to vector<256x128xbf16>
    %cst_75 = arith.constant dense<0.000000e+00> : vector<16x128xf32>
    %193 = tpu.matmul %190, %192, %cst_75 {dimension_numbers = #tpu.dot_dimension_numbers<[1], [0], [0], [1], [0, 0, 1, 1], [], []>} : vector<16x256xbf16>, vector<256x128xbf16>, vector<16x128xf32> -> vector<16x128xf32>
    %c0_76 = arith.constant 0 : index
    %c0_77 = arith.constant 0 : index
    %c0_78 = arith.constant 0 : index
    %194 = vector.load %arg17[%c0_76, %c0_77, %c0_78] : memref<2x1x128xf32, #tpu.memory_space<vmem>>, vector<1x1x128xf32>
    %195 = vector.shape_cast %194 : vector<1x1x128xf32> to vector<1x128xf32>
    %196 = vector.broadcast %195 : vector<1x128xf32> to vector<16x128xf32>
    %197 = arith.addf %193, %196 : vector<16x128xf32>
    %198 = arith.addf %197, %168 : vector<16x128xf32>
    %c0_79 = arith.constant 0 : index
    %c0_80 = arith.constant 0 : index
    %c0_81 = arith.constant 0 : index
    %199 = vector.load %arg18[%c0_79, %c0_80, %c0_81] : memref<2x1x128xf32, #tpu.memory_space<vmem>>, vector<1x1x128xf32>
    %200 = vector.shape_cast %199 : vector<1x1x128xf32> to vector<1x128xf32>
    %c0_82 = arith.constant 0 : index
    %c0_83 = arith.constant 0 : index
    %c0_84 = arith.constant 0 : index
    %201 = vector.load %arg19[%c0_82, %c0_83, %c0_84] : memref<2x1x128xf32, #tpu.memory_space<vmem>>, vector<1x1x128xf32>
    %202 = vector.shape_cast %201 : vector<1x1x128xf32> to vector<1x128xf32>
    %cst_85 = arith.constant dense<0.000000e+00> : vector<16xf32>
    %203 = vector.multi_reduction <add>, %198, %cst_85 [1] : vector<16x128xf32> to vector<16xf32>
    %204 = vector.shape_cast %203 : vector<16xf32> to vector<16x1xf32>
    %cst_86 = arith.constant 1.280000e+02 : f32
    %205 = vector.broadcast %cst_86 : f32 to vector<16x1xf32>
    %206 = arith.divf %204, %205 : vector<16x1xf32>
    %207 = arith.mulf %198, %198 : vector<16x128xf32>
    %cst_87 = arith.constant dense<0.000000e+00> : vector<16xf32>
    %208 = vector.multi_reduction <add>, %207, %cst_87 [1] : vector<16x128xf32> to vector<16xf32>
    %209 = vector.shape_cast %208 : vector<16xf32> to vector<16x1xf32>
    %cst_88 = arith.constant 1.280000e+02 : f32
    %210 = vector.broadcast %cst_88 : f32 to vector<16x1xf32>
    %211 = arith.divf %209, %210 : vector<16x1xf32>
    %212 = arith.mulf %206, %206 : vector<16x1xf32>
    %213 = arith.subf %211, %212 : vector<16x1xf32>
    %214 = vector.broadcast %206 : vector<16x1xf32> to vector<16x128xf32>
    %215 = arith.subf %198, %214 : vector<16x128xf32>
    %cst_89 = arith.constant 9.99999974E-6 : f32
    %216 = vector.broadcast %cst_89 : f32 to vector<16x1xf32>
    %217 = arith.addf %213, %216 : vector<16x1xf32>
    %218 = math.rsqrt %217 : vector<16x1xf32>
    %219 = vector.broadcast %218 : vector<16x1xf32> to vector<16x128xf32>
    %220 = arith.mulf %215, %219 : vector<16x128xf32>
    %221 = vector.broadcast %200 : vector<1x128xf32> to vector<16x128xf32>
    %222 = arith.mulf %220, %221 : vector<16x128xf32>
    %223 = vector.broadcast %202 : vector<1x128xf32> to vector<16x128xf32>
    %224 = arith.addf %222, %223 : vector<16x128xf32>
    %c1 = arith.constant 1 : index
    %c0_90 = arith.constant 0 : index
    %c0_91 = arith.constant 0 : index
    %c0_92 = arith.constant 0 : index
    %225 = vector.load %arg10[%c1, %c0_90, %c0_91, %c0_92] : memref<2x4x32x128xbf16, #tpu.memory_space<vmem>>, vector<1x4x32x128xbf16>
    %226 = vector.shape_cast %225 : vector<1x4x32x128xbf16> to vector<4x32x128xbf16>
    %227 = arith.truncf %224 : vector<16x128xf32> to vector<16x128xbf16>
    %c1_93 = arith.constant 1 : index
    %c0_94 = arith.constant 0 : index
    %c0_95 = arith.constant 0 : index
    %228 = vector.load %arg8[%c1_93, %c0_94, %c0_95] : memref<2x128x384xbf16, #tpu.memory_space<vmem>>, vector<1x128x384xbf16>
    %229 = vector.shape_cast %228 : vector<1x128x384xbf16> to vector<128x384xbf16>
    %cst_96 = arith.constant dense<0.000000e+00> : vector<16x384xf32>
    %230 = tpu.matmul %227, %229, %cst_96 {dimension_numbers = #tpu.dot_dimension_numbers<[1], [0], [0], [1], [0, 0, 1, 1], [], []>} : vector<16x128xbf16>, vector<128x384xbf16>, vector<16x384xf32> -> vector<16x384xf32>
    %c1_97 = arith.constant 1 : index
    %c0_98 = arith.constant 0 : index
    %c0_99 = arith.constant 0 : index
    %231 = vector.load %arg9[%c1_97, %c0_98, %c0_99] : memref<2x1x384xf32, #tpu.memory_space<vmem>>, vector<1x1x384xf32>
    %232 = vector.shape_cast %231 : vector<1x1x384xf32> to vector<1x384xf32>
    %233 = vector.broadcast %232 : vector<1x384xf32> to vector<16x384xf32>
    %234 = arith.addf %230, %233 : vector<16x384xf32>
    %235 = vector.extract_strided_slice %234 {offsets = [0, 0], sizes = [16, 128], strides = [1, 1]} : vector<16x384xf32> to vector<16x128xf32>
    %236 = vector.extract_strided_slice %235 {offsets = [0, 0], sizes = [16, 32], strides = [1, 1]} : vector<16x128xf32> to vector<16x32xf32>
    %237 = vector.shape_cast %236 : vector<16x32xf32> to vector<2x8x32xf32>
    %238 = vector.extract_strided_slice %235 {offsets = [0, 32], sizes = [16, 32], strides = [1, 1]} : vector<16x128xf32> to vector<16x32xf32>
    %239 = vector.shape_cast %238 : vector<16x32xf32> to vector<2x8x32xf32>
    %240 = vector.extract_strided_slice %235 {offsets = [0, 64], sizes = [16, 32], strides = [1, 1]} : vector<16x128xf32> to vector<16x32xf32>
    %241 = vector.shape_cast %240 : vector<16x32xf32> to vector<2x8x32xf32>
    %242 = vector.extract_strided_slice %235 {offsets = [0, 96], sizes = [16, 32], strides = [1, 1]} : vector<16x128xf32> to vector<16x32xf32>
    %243 = vector.shape_cast %242 : vector<16x32xf32> to vector<2x8x32xf32>
    %244 = tpu.concatenate %237, %239, %241, %243 in 0 : vector<2x8x32xf32>, vector<2x8x32xf32>, vector<2x8x32xf32>, vector<2x8x32xf32> -> vector<8x8x32xf32>
    %245 = arith.truncf %244 : vector<8x8x32xf32> to vector<8x8x32xbf16>
    %246 = vector.extract_strided_slice %234 {offsets = [0, 128], sizes = [16, 128], strides = [1, 1]} : vector<16x384xf32> to vector<16x128xf32>
    %247 = vector.extract_strided_slice %246 {offsets = [0, 0], sizes = [16, 32], strides = [1, 1]} : vector<16x128xf32> to vector<16x32xf32>
    %248 = vector.shape_cast %247 : vector<16x32xf32> to vector<2x8x32xf32>
    %249 = vector.extract_strided_slice %246 {offsets = [0, 32], sizes = [16, 32], strides = [1, 1]} : vector<16x128xf32> to vector<16x32xf32>
    %250 = vector.shape_cast %249 : vector<16x32xf32> to vector<2x8x32xf32>
    %251 = vector.extract_strided_slice %246 {offsets = [0, 64], sizes = [16, 32], strides = [1, 1]} : vector<16x128xf32> to vector<16x32xf32>
    %252 = vector.shape_cast %251 : vector<16x32xf32> to vector<2x8x32xf32>
    %253 = vector.extract_strided_slice %246 {offsets = [0, 96], sizes = [16, 32], strides = [1, 1]} : vector<16x128xf32> to vector<16x32xf32>
    %254 = vector.shape_cast %253 : vector<16x32xf32> to vector<2x8x32xf32>
    %255 = tpu.concatenate %248, %250, %252, %254 in 0 : vector<2x8x32xf32>, vector<2x8x32xf32>, vector<2x8x32xf32>, vector<2x8x32xf32> -> vector<8x8x32xf32>
    %256 = arith.truncf %255 : vector<8x8x32xf32> to vector<8x8x32xbf16>
    %257 = vector.extract_strided_slice %234 {offsets = [0, 256], sizes = [16, 128], strides = [1, 1]} : vector<16x384xf32> to vector<16x128xf32>
    %258 = vector.extract_strided_slice %257 {offsets = [0, 0], sizes = [16, 32], strides = [1, 1]} : vector<16x128xf32> to vector<16x32xf32>
    %259 = vector.shape_cast %258 : vector<16x32xf32> to vector<2x8x32xf32>
    %260 = vector.extract_strided_slice %257 {offsets = [0, 32], sizes = [16, 32], strides = [1, 1]} : vector<16x128xf32> to vector<16x32xf32>
    %261 = vector.shape_cast %260 : vector<16x32xf32> to vector<2x8x32xf32>
    %262 = vector.extract_strided_slice %257 {offsets = [0, 64], sizes = [16, 32], strides = [1, 1]} : vector<16x128xf32> to vector<16x32xf32>
    %263 = vector.shape_cast %262 : vector<16x32xf32> to vector<2x8x32xf32>
    %264 = vector.extract_strided_slice %257 {offsets = [0, 96], sizes = [16, 32], strides = [1, 1]} : vector<16x128xf32> to vector<16x32xf32>
    %265 = vector.shape_cast %264 : vector<16x32xf32> to vector<2x8x32xf32>
    %266 = tpu.concatenate %259, %261, %263, %265 in 0 : vector<2x8x32xf32>, vector<2x8x32xf32>, vector<2x8x32xf32>, vector<2x8x32xf32> -> vector<8x8x32xf32>
    %267 = arith.truncf %266 : vector<8x8x32xf32> to vector<8x8x32xbf16>
    "tpu.trace_start"() <{level = 10 : i32, message = "bqd,bkd->bqk"}> : () -> ()
    %cst_100 = arith.constant dense<0.000000e+00> : vector<8x8x8xf32>
    %268 = tpu.matmul %245, %256, %cst_100 {dimension_numbers = #tpu.dot_dimension_numbers<[2], [2], [1], [1], [0, 0, 0, 1, 1, 1], [0], [0]>} : vector<8x8x32xbf16>, vector<8x8x32xbf16>, vector<8x8x8xf32> -> vector<8x8x8xf32>
    "tpu.trace_stop"() : () -> ()
    %cst_101 = arith.constant 0.176776692 : f32
    %269 = vector.broadcast %cst_101 : f32 to vector<8x8x8xf32>
    %270 = arith.mulf %268, %269 : vector<8x8x8xf32>
    %271 = vector.broadcast %54 : vector<8x1x8xf32> to vector<8x8x8xf32>
    %272 = arith.addf %270, %271 : vector<8x8x8xf32>
    %cst_102 = arith.constant dense<0xFF800000> : vector<8x8xf32>
    %273 = vector.multi_reduction <maximumf>, %272, %cst_102 [2] : vector<8x8x8xf32> to vector<8x8xf32>
    %274 = vector.shape_cast %273 : vector<8x8xf32> to vector<8x8x1xf32>
    %275 = vector.broadcast %274 : vector<8x8x1xf32> to vector<8x8x8xf32>
    %276 = arith.subf %272, %275 : vector<8x8x8xf32>
    %277 = math.exp %276 : vector<8x8x8xf32>
    %cst_103 = arith.constant dense<0.000000e+00> : vector<8x8xf32>
    %278 = vector.multi_reduction <add>, %277, %cst_103 [2] : vector<8x8x8xf32> to vector<8x8xf32>
    %279 = vector.shape_cast %278 : vector<8x8xf32> to vector<8x8x1xf32>
    %280 = vector.broadcast %279 : vector<8x8x1xf32> to vector<8x8x8xf32>
    %281 = arith.divf %277, %280 : vector<8x8x8xf32>
    %282 = arith.truncf %281 : vector<8x8x8xf32> to vector<8x8x8xbf16>
    "tpu.trace_start"() <{level = 10 : i32, message = "bqk,bkd->bqd"}> : () -> ()
    %cst_104 = arith.constant dense<0.000000e+00> : vector<8x8x32xf32>
    %283 = tpu.matmul %282, %267, %cst_104 {dimension_numbers = #tpu.dot_dimension_numbers<[2], [1], [1], [2], [0, 0, 0, 1, 1, 2], [0], [0]>} : vector<8x8x8xbf16>, vector<8x8x32xbf16>, vector<8x8x32xf32> -> vector<8x8x32xf32>
    "tpu.trace_stop"() : () -> ()
    %284 = arith.truncf %283 : vector<8x8x32xf32> to vector<8x8x32xbf16>
    %285 = vector.extract_strided_slice %284 {offsets = [0, 0, 0], sizes = [2, 8, 32], strides = [1, 1, 1]} : vector<8x8x32xbf16> to vector<2x8x32xbf16>
    %286 = vector.shape_cast %285 : vector<2x8x32xbf16> to vector<16x32xbf16>
    %287 = vector.extract_strided_slice %226 {offsets = [0, 0, 0], sizes = [1, 32, 128], strides = [1, 1, 1]} : vector<4x32x128xbf16> to vector<1x32x128xbf16>
    %288 = vector.shape_cast %287 : vector<1x32x128xbf16> to vector<32x128xbf16>
    %cst_105 = arith.constant dense<0.000000e+00> : vector<16x128xf32>
    %289 = tpu.matmul %286, %288, %cst_105 {dimension_numbers = #tpu.dot_dimension_numbers<[1], [0], [0], [1], [0, 0, 1, 1], [], []>} : vector<16x32xbf16>, vector<32x128xbf16>, vector<16x128xf32> -> vector<16x128xf32>
    %290 = vector.extract_strided_slice %284 {offsets = [2, 0, 0], sizes = [2, 8, 32], strides = [1, 1, 1]} : vector<8x8x32xbf16> to vector<2x8x32xbf16>
    %291 = vector.shape_cast %290 : vector<2x8x32xbf16> to vector<16x32xbf16>
    %292 = vector.extract_strided_slice %226 {offsets = [1, 0, 0], sizes = [1, 32, 128], strides = [1, 1, 1]} : vector<4x32x128xbf16> to vector<1x32x128xbf16>
    %293 = vector.shape_cast %292 : vector<1x32x128xbf16> to vector<32x128xbf16>
    %cst_106 = arith.constant dense<0.000000e+00> : vector<16x128xf32>
    %294 = tpu.matmul %291, %293, %cst_106 {dimension_numbers = #tpu.dot_dimension_numbers<[1], [0], [0], [1], [0, 0, 1, 1], [], []>} : vector<16x32xbf16>, vector<32x128xbf16>, vector<16x128xf32> -> vector<16x128xf32>
    %295 = arith.addf %289, %294 : vector<16x128xf32>
    %296 = vector.extract_strided_slice %284 {offsets = [4, 0, 0], sizes = [2, 8, 32], strides = [1, 1, 1]} : vector<8x8x32xbf16> to vector<2x8x32xbf16>
    %297 = vector.shape_cast %296 : vector<2x8x32xbf16> to vector<16x32xbf16>
    %298 = vector.extract_strided_slice %226 {offsets = [2, 0, 0], sizes = [1, 32, 128], strides = [1, 1, 1]} : vector<4x32x128xbf16> to vector<1x32x128xbf16>
    %299 = vector.shape_cast %298 : vector<1x32x128xbf16> to vector<32x128xbf16>
    %cst_107 = arith.constant dense<0.000000e+00> : vector<16x128xf32>
    %300 = tpu.matmul %297, %299, %cst_107 {dimension_numbers = #tpu.dot_dimension_numbers<[1], [0], [0], [1], [0, 0, 1, 1], [], []>} : vector<16x32xbf16>, vector<32x128xbf16>, vector<16x128xf32> -> vector<16x128xf32>
    %301 = arith.addf %295, %300 : vector<16x128xf32>
    %302 = vector.extract_strided_slice %284 {offsets = [6, 0, 0], sizes = [2, 8, 32], strides = [1, 1, 1]} : vector<8x8x32xbf16> to vector<2x8x32xbf16>
    %303 = vector.shape_cast %302 : vector<2x8x32xbf16> to vector<16x32xbf16>
    %304 = vector.extract_strided_slice %226 {offsets = [3, 0, 0], sizes = [1, 32, 128], strides = [1, 1, 1]} : vector<4x32x128xbf16> to vector<1x32x128xbf16>
    %305 = vector.shape_cast %304 : vector<1x32x128xbf16> to vector<32x128xbf16>
    %cst_108 = arith.constant dense<0.000000e+00> : vector<16x128xf32>
    %306 = tpu.matmul %303, %305, %cst_108 {dimension_numbers = #tpu.dot_dimension_numbers<[1], [0], [0], [1], [0, 0, 1, 1], [], []>} : vector<16x32xbf16>, vector<32x128xbf16>, vector<16x128xf32> -> vector<16x128xf32>
    %307 = arith.addf %301, %306 : vector<16x128xf32>
    %c1_109 = arith.constant 1 : index
    %c0_110 = arith.constant 0 : index
    %c0_111 = arith.constant 0 : index
    %308 = vector.load %arg11[%c1_109, %c0_110, %c0_111] : memref<2x1x128xf32, #tpu.memory_space<vmem>>, vector<1x1x128xf32>
    %309 = vector.shape_cast %308 : vector<1x1x128xf32> to vector<1x128xf32>
    %310 = vector.broadcast %309 : vector<1x128xf32> to vector<16x128xf32>
    %311 = arith.addf %307, %310 : vector<16x128xf32>
    %312 = arith.addf %311, %224 : vector<16x128xf32>
    %c1_112 = arith.constant 1 : index
    %c0_113 = arith.constant 0 : index
    %c0_114 = arith.constant 0 : index
    %313 = vector.load %arg12[%c1_112, %c0_113, %c0_114] : memref<2x1x128xf32, #tpu.memory_space<vmem>>, vector<1x1x128xf32>
    %314 = vector.shape_cast %313 : vector<1x1x128xf32> to vector<1x128xf32>
    %c1_115 = arith.constant 1 : index
    %c0_116 = arith.constant 0 : index
    %c0_117 = arith.constant 0 : index
    %315 = vector.load %arg13[%c1_115, %c0_116, %c0_117] : memref<2x1x128xf32, #tpu.memory_space<vmem>>, vector<1x1x128xf32>
    %316 = vector.shape_cast %315 : vector<1x1x128xf32> to vector<1x128xf32>
    %cst_118 = arith.constant dense<0.000000e+00> : vector<16xf32>
    %317 = vector.multi_reduction <add>, %312, %cst_118 [1] : vector<16x128xf32> to vector<16xf32>
    %318 = vector.shape_cast %317 : vector<16xf32> to vector<16x1xf32>
    %cst_119 = arith.constant 1.280000e+02 : f32
    %319 = vector.broadcast %cst_119 : f32 to vector<16x1xf32>
    %320 = arith.divf %318, %319 : vector<16x1xf32>
    %321 = arith.mulf %312, %312 : vector<16x128xf32>
    %cst_120 = arith.constant dense<0.000000e+00> : vector<16xf32>
    %322 = vector.multi_reduction <add>, %321, %cst_120 [1] : vector<16x128xf32> to vector<16xf32>
    %323 = vector.shape_cast %322 : vector<16xf32> to vector<16x1xf32>
    %cst_121 = arith.constant 1.280000e+02 : f32
    %324 = vector.broadcast %cst_121 : f32 to vector<16x1xf32>
    %325 = arith.divf %323, %324 : vector<16x1xf32>
    %326 = arith.mulf %320, %320 : vector<16x1xf32>
    %327 = arith.subf %325, %326 : vector<16x1xf32>
    %328 = vector.broadcast %320 : vector<16x1xf32> to vector<16x128xf32>
    %329 = arith.subf %312, %328 : vector<16x128xf32>
    %cst_122 = arith.constant 9.99999974E-6 : f32
    %330 = vector.broadcast %cst_122 : f32 to vector<16x1xf32>
    %331 = arith.addf %327, %330 : vector<16x1xf32>
    %332 = math.rsqrt %331 : vector<16x1xf32>
    %333 = vector.broadcast %332 : vector<16x1xf32> to vector<16x128xf32>
    %334 = arith.mulf %329, %333 : vector<16x128xf32>
    %335 = vector.broadcast %314 : vector<1x128xf32> to vector<16x128xf32>
    %336 = arith.mulf %334, %335 : vector<16x128xf32>
    %337 = vector.broadcast %316 : vector<1x128xf32> to vector<16x128xf32>
    %338 = arith.addf %336, %337 : vector<16x128xf32>
    %339 = arith.truncf %338 : vector<16x128xf32> to vector<16x128xbf16>
    %c1_123 = arith.constant 1 : index
    %c0_124 = arith.constant 0 : index
    %c0_125 = arith.constant 0 : index
    %340 = vector.load %arg14[%c1_123, %c0_124, %c0_125] : memref<2x128x256xbf16, #tpu.memory_space<vmem>>, vector<1x128x256xbf16>
    %341 = vector.shape_cast %340 : vector<1x128x256xbf16> to vector<128x256xbf16>
    %cst_126 = arith.constant dense<0.000000e+00> : vector<16x256xf32>
    %342 = tpu.matmul %339, %341, %cst_126 {dimension_numbers = #tpu.dot_dimension_numbers<[1], [0], [0], [1], [0, 0, 1, 1], [], []>} : vector<16x128xbf16>, vector<128x256xbf16>, vector<16x256xf32> -> vector<16x256xf32>
    %c1_127 = arith.constant 1 : index
    %c0_128 = arith.constant 0 : index
    %c0_129 = arith.constant 0 : index
    %343 = vector.load %arg15[%c1_127, %c0_128, %c0_129] : memref<2x1x256xf32, #tpu.memory_space<vmem>>, vector<1x1x256xf32>
    %344 = vector.shape_cast %343 : vector<1x1x256xf32> to vector<1x256xf32>
    %345 = vector.broadcast %344 : vector<1x256xf32> to vector<16x256xf32>
    %346 = arith.addf %342, %345 : vector<16x256xf32>
    %347 = arith.mulf %346, %346 : vector<16x256xf32>
    %348 = arith.mulf %346, %347 : vector<16x256xf32>
    %cst_130 = arith.constant 4.471500e-02 : f32
    %349 = vector.broadcast %cst_130 : f32 to vector<16x256xf32>
    %350 = arith.mulf %349, %348 : vector<16x256xf32>
    %351 = arith.addf %346, %350 : vector<16x256xf32>
    %cst_131 = arith.constant 0.797884583 : f32
    %352 = vector.broadcast %cst_131 : f32 to vector<16x256xf32>
    %353 = arith.mulf %352, %351 : vector<16x256xf32>
    %354 = math.tanh %353 : vector<16x256xf32>
    %cst_132 = arith.constant 1.000000e+00 : f32
    %355 = vector.broadcast %cst_132 : f32 to vector<16x256xf32>
    %356 = arith.addf %355, %354 : vector<16x256xf32>
    %cst_133 = arith.constant 5.000000e-01 : f32
    %357 = vector.broadcast %cst_133 : f32 to vector<16x256xf32>
    %358 = arith.mulf %357, %356 : vector<16x256xf32>
    %359 = arith.mulf %346, %358 : vector<16x256xf32>
    %360 = arith.truncf %359 : vector<16x256xf32> to vector<16x256xbf16>
    %c1_134 = arith.constant 1 : index
    %c0_135 = arith.constant 0 : index
    %c0_136 = arith.constant 0 : index
    %361 = vector.load %arg16[%c1_134, %c0_135, %c0_136] : memref<2x256x128xbf16, #tpu.memory_space<vmem>>, vector<1x256x128xbf16>
    %362 = vector.shape_cast %361 : vector<1x256x128xbf16> to vector<256x128xbf16>
    %cst_137 = arith.constant dense<0.000000e+00> : vector<16x128xf32>
    %363 = tpu.matmul %360, %362, %cst_137 {dimension_numbers = #tpu.dot_dimension_numbers<[1], [0], [0], [1], [0, 0, 1, 1], [], []>} : vector<16x256xbf16>, vector<256x128xbf16>, vector<16x128xf32> -> vector<16x128xf32>
    %c1_138 = arith.constant 1 : index
    %c0_139 = arith.constant 0 : index
    %c0_140 = arith.constant 0 : index
    %364 = vector.load %arg17[%c1_138, %c0_139, %c0_140] : memref<2x1x128xf32, #tpu.memory_space<vmem>>, vector<1x1x128xf32>
    %365 = vector.shape_cast %364 : vector<1x1x128xf32> to vector<1x128xf32>
    %366 = vector.broadcast %365 : vector<1x128xf32> to vector<16x128xf32>
    %367 = arith.addf %363, %366 : vector<16x128xf32>
    %368 = arith.addf %367, %338 : vector<16x128xf32>
    %c1_141 = arith.constant 1 : index
    %c0_142 = arith.constant 0 : index
    %c0_143 = arith.constant 0 : index
    %369 = vector.load %arg18[%c1_141, %c0_142, %c0_143] : memref<2x1x128xf32, #tpu.memory_space<vmem>>, vector<1x1x128xf32>
    %370 = vector.shape_cast %369 : vector<1x1x128xf32> to vector<1x128xf32>
    %c1_144 = arith.constant 1 : index
    %c0_145 = arith.constant 0 : index
    %c0_146 = arith.constant 0 : index
    %371 = vector.load %arg19[%c1_144, %c0_145, %c0_146] : memref<2x1x128xf32, #tpu.memory_space<vmem>>, vector<1x1x128xf32>
    %372 = vector.shape_cast %371 : vector<1x1x128xf32> to vector<1x128xf32>
    %cst_147 = arith.constant dense<0.000000e+00> : vector<16xf32>
    %373 = vector.multi_reduction <add>, %368, %cst_147 [1] : vector<16x128xf32> to vector<16xf32>
    %374 = vector.shape_cast %373 : vector<16xf32> to vector<16x1xf32>
    %cst_148 = arith.constant 1.280000e+02 : f32
    %375 = vector.broadcast %cst_148 : f32 to vector<16x1xf32>
    %376 = arith.divf %374, %375 : vector<16x1xf32>
    %377 = arith.mulf %368, %368 : vector<16x128xf32>
    %cst_149 = arith.constant dense<0.000000e+00> : vector<16xf32>
    %378 = vector.multi_reduction <add>, %377, %cst_149 [1] : vector<16x128xf32> to vector<16xf32>
    %379 = vector.shape_cast %378 : vector<16xf32> to vector<16x1xf32>
    %cst_150 = arith.constant 1.280000e+02 : f32
    %380 = vector.broadcast %cst_150 : f32 to vector<16x1xf32>
    %381 = arith.divf %379, %380 : vector<16x1xf32>
    %382 = arith.mulf %376, %376 : vector<16x1xf32>
    %383 = arith.subf %381, %382 : vector<16x1xf32>
    %384 = vector.broadcast %376 : vector<16x1xf32> to vector<16x128xf32>
    %385 = arith.subf %368, %384 : vector<16x128xf32>
    %cst_151 = arith.constant 9.99999974E-6 : f32
    %386 = vector.broadcast %cst_151 : f32 to vector<16x1xf32>
    %387 = arith.addf %383, %386 : vector<16x1xf32>
    %388 = math.rsqrt %387 : vector<16x1xf32>
    %389 = vector.broadcast %388 : vector<16x1xf32> to vector<16x128xf32>
    %390 = arith.mulf %385, %389 : vector<16x128xf32>
    %391 = vector.broadcast %370 : vector<1x128xf32> to vector<16x128xf32>
    %392 = arith.mulf %390, %391 : vector<16x128xf32>
    %393 = vector.broadcast %372 : vector<1x128xf32> to vector<16x128xf32>
    %394 = arith.addf %392, %393 : vector<16x128xf32>
    %395 = vector.shape_cast %394 : vector<16x128xf32> to vector<2x8x128xf32>
    %396 = vector.extract_strided_slice %395 {offsets = [0, 0, 0], sizes = [2, 1, 128], strides = [1, 1, 1]} : vector<2x8x128xf32> to vector<2x1x128xf32>
    %397 = vector.shape_cast %396 : vector<2x1x128xf32> to vector<2x128xf32>
    %398 = arith.truncf %397 : vector<2x128xf32> to vector<2x128xbf16>
    %c0_152 = arith.constant 0 : index
    %c0_153 = arith.constant 0 : index
    %399 = vector.load %arg20[%c0_152, %c0_153] : memref<128x128xbf16, #tpu.memory_space<vmem>>, vector<128x128xbf16>
    %cst_154 = arith.constant dense<0.000000e+00> : vector<2x128xf32>
    %400 = tpu.matmul %398, %399, %cst_154 {dimension_numbers = #tpu.dot_dimension_numbers<[1], [0], [0], [1], [0, 0, 1, 1], [], []>} : vector<2x128xbf16>, vector<128x128xbf16>, vector<2x128xf32> -> vector<2x128xf32>
    %c0_155 = arith.constant 0 : index
    %c0_156 = arith.constant 0 : index
    %401 = vector.load %arg21[%c0_155, %c0_156] : memref<1x128xf32, #tpu.memory_space<vmem>>, vector<1x128xf32>
    %402 = vector.broadcast %401 : vector<1x128xf32> to vector<2x128xf32>
    %403 = arith.addf %400, %402 : vector<2x128xf32>
    %404 = math.tanh %403 : vector<2x128xf32>
    %405 = arith.truncf %404 : vector<2x128xf32> to vector<2x128xbf16>
    %c0_157 = arith.constant 0 : index
    %c0_158 = arith.constant 0 : index
    %406 = vector.load %arg22[%c0_157, %c0_158] : memref<128x128xbf16, #tpu.memory_space<vmem>>, vector<128x128xbf16>
    %cst_159 = arith.constant dense<0.000000e+00> : vector<2x128xf32>
    %407 = tpu.matmul %405, %406, %cst_159 {dimension_numbers = #tpu.dot_dimension_numbers<[1], [0], [0], [1], [0, 0, 1, 1], [], []>} : vector<2x128xbf16>, vector<128x128xbf16>, vector<2x128xf32> -> vector<2x128xf32>
    %c0_160 = arith.constant 0 : index
    %c0_161 = arith.constant 0 : index
    %408 = vector.load %arg23[%c0_160, %c0_161] : memref<1x128xf32, #tpu.memory_space<vmem>>, vector<1x128xf32>
    %409 = vector.broadcast %408 : vector<1x128xf32> to vector<2x128xf32>
    %410 = arith.addf %407, %409 : vector<2x128xf32>
    %c0_162 = arith.constant 0 : index
    %c0_163 = arith.constant 0 : index
    %411 = vector.load %arg24[%c0_162, %c0_163] : memref<2x128xf32, #tpu.memory_space<vmem>>, vector<2x128xf32>
    tpu.vector_store %arg24[%c0_162, %c0_163], %410 {strides = array<i32>} : memref<2x128xf32, #tpu.memory_space<vmem>>, vector<2x128xf32>,
    return
  }
}

</mosaic_0001>

<llo_original>
// kernel: forward.1
$region0: #{forward.1}
  #allocation0 [shape = 'u32[]', space=smem, size = 0x4, offset = 0x4, fixed_abs, tag = 'smem constant byte address 0x4 - core index']
  #allocation1 [shape = 'u32[144,128]{1,0:T(1,128)}', space=vmem, size = 0x12000, scoped, tag = 'internal scratch']
  %s0 = inlined_call_operand.vmem [shape: s32[16,1], index: 0, kind: input, shape index: {}]
  %s1 = inlined_call_operand.vmem [shape: s32[16,1], index: 1, kind: input, shape index: {}]
  %s2 = inlined_call_operand.vmem [shape: f32[2,8], index: 2, kind: input, shape index: {}]
  %s3 = inlined_call_operand.vmem [shape: bf16[64,128], index: 3, kind: input, shape index: {}]
  %s4 = inlined_call_operand.hbm [shape: bf16[32,128], index: 4, kind: input, shape index: {}]
  %s5 = inlined_call_operand.vmem [shape: f32[1,128], index: 5, kind: input, shape index: {}]
  %s6 = inlined_call_operand.hbm [shape: f32[1,128], index: 6, kind: input, shape index: {}]
  %s7 = inlined_call_operand.hbm [shape: f32[1,128], index: 7, kind: input, shape index: {}]
  %s8 = inlined_call_operand.hbm [shape: bf16[2,128,384], index: 8, kind: input, shape index: {}]
  %s9 = inlined_call_operand.hbm [shape: f32[2,1,384], index: 9, kind: input, shape index: {}]
  %s10 = inlined_call_operand.hbm [shape: bf16[2,4,32,128], index: 10, kind: input, shape index: {}]
  %s11 = inlined_call_operand.hbm [shape: f32[2,1,128], index: 11, kind: input, shape index: {}]
  %s12 = inlined_call_operand.hbm [shape: f32[2,1,128], index: 12, kind: input, shape index: {}]
  %s13 = inlined_call_operand.hbm [shape: f32[2,1,128], index: 13, kind: input, shape index: {}]
  %s14 = inlined_call_operand.hbm [shape: bf16[2,128,256], index: 14, kind: input, shape index: {}]
  %s15 = inlined_call_operand.hbm [shape: f32[2,1,256], index: 15, kind: input, shape index: {}]
  %s16 = inlined_call_operand.hbm [shape: bf16[2,256,128], index: 16, kind: input, shape index: {}]
  %s17 = inlined_call_operand.hbm [shape: f32[2,1,128], index: 17, kind: input, shape index: {}]
  %s18 = inlined_call_operand.hbm [shape: f32[2,1,128], index: 18, kind: input, shape index: {}]
  %s19 = inlined_call_operand.hbm [shape: f32[2,1,128], index: 19, kind: input, shape index: {}]
  %s20 = inlined_call_operand.vmem [shape: bf16[128,128], index: 20, kind: input, shape index: {}]
  %s21 = inlined_call_operand.hbm [shape: f32[1,128], index: 21, kind: input, shape index: {}]
  %s22 = inlined_call_operand.hbm [shape: bf16[128,128], index: 22, kind: input, shape index: {}]
  %s23 = inlined_call_operand.hbm [shape: f32[1,128], index: 23, kind: input, shape index: {}]
  %s24 = inlined_call_operand.hbm [shape: f32[2,128], index: 24, kind: output, shape index: {}]
  %s25 = sld [smem:[#allocation0]]
  $region178: #{forward.1} parent=0
    _
  %s27 = ssub.s32 1, %s25
  %s28 = scalar_select 0, %s27, %s25
  $region1: #{forward.1} parent=0
    #allocation2 [shape = 'u8[8192]{0}', space=vmem, size = 0x2000, scoped, tag = 'input window, operand 4, single buffered']
    #allocation3 [shape = 's32[1]{0}', space=sflag, size = 0x4, scoped, tag = 'scoped memory for forward.1']
    #allocation4 [shape = 's32[1]{0}', space=sflag, size = 0x4, scoped, tag = 'scoped memory for forward.1']
    #allocation5 [shape = 'u8[512]{0}', space=vmem, size = 0x400, scoped, tag = 'input window, operand 6, single buffered']
    #allocation6 [shape = 's32[1]{0}', space=sflag, size = 0x4, scoped, tag = 'scoped memory for forward.1']
    #allocation7 [shape = 'u8[512]{0}', space=vmem, size = 0x400, scoped, tag = 'input window, operand 7, single buffered']
    #allocation8 [shape = 'u8[196608]{0}', space=vmem, size = 0x30000, scoped, tag = 'input window, operand 8, single buffered']
    #allocation9 [shape = 's32[1]{0}', space=sflag, size = 0x4, scoped, tag = 'scoped memory for forward.1']
    #allocation10 [shape = 'u8[3072]{0}', space=vmem, size = 0xc00, scoped, tag = 'input window, operand 9, single buffered']
    #allocation11 [shape = 'u8[65536]{0}', space=vmem, size = 0x10000, scoped, tag = 'input window, operand 10, single buffered']
    #allocation12 [shape = 's32[1]{0}', space=sflag, size = 0x4, scoped, tag = 'scoped memory for forward.1']
    #allocation13 [shape = 'u8[1024]{0}', space=vmem, size = 0x400, scoped, tag = 'input window, operand 11, single buffered']
    #allocation14 [shape = 'u8[1024]{0}', space=vmem, size = 0x400, scoped, tag = 'input window, operand 12, single buffered']
    #allocation15 [shape = 's32[1]{0}', space=sflag, size = 0x4, scoped, tag = 'scoped memory for forward.1']
    #allocation16 [shape = 'u8[1024]{0}', space=vmem, size = 0x400, scoped, tag = 'input window, operand 13, single buffered']
    #allocation17 [shape = 'u8[131072]{0}', space=vmem, size = 0x20000, scoped, tag = 'input window, operand 14, single buffered']
    #allocation18 [shape = 's32[1]{0}', space=sflag, size = 0x4, scoped, tag = 'scoped memory for forward.1']
    #allocation19 [shape = 'u8[2048]{0}', space=vmem, size = 0x800, scoped, tag = 'input window, operand 15, single buffered']
    #allocation20 [shape = 'u8[131072]{0}', space=vmem, size = 0x20000, scoped, tag = 'input window, operand 16, single buffered']
    #allocation21 [shape = 's32[1]{0}', space=sflag, size = 0x4, scoped, tag = 'scoped memory for forward.1']
    #allocation22 [shape = 'u8[1024]{0}', space=vmem, size = 0x400, scoped, tag = 'input window, operand 17, single buffered']
    #allocation23 [shape = 'u8[1024]{0}', space=vmem, size = 0x400, scoped, tag = 'input window, operand 18, single buffered']
    #allocation24 [shape = 's32[1]{0}', space=sflag, size = 0x4, scoped, tag = 'scoped memory for forward.1']
    #allocation25 [shape = 'u8[1024]{0}', space=vmem, size = 0x400, scoped, tag = 'input window, operand 19, single buffered']
    #allocation26 [shape = 'u8[512]{0}', space=vmem, size = 0x400, scoped, tag = 'input window, operand 21, single buffered']
    #allocation27 [shape = 's32[1]{0}', space=sflag, size = 0x4, scoped, tag = 'scoped memory for forward.1']
    #allocation28 [shape = 'u8[32768]{0}', space=vmem, size = 0x8000, scoped, tag = 'input window, operand 22, single buffered']
    #allocation29 [shape = 'u8[512]{0}', space=vmem, size = 0x400, scoped, tag = 'input window, operand 23, single buffered']
    #allocation30 [shape = 's32[1]{0}', space=sflag, size = 0x4, scoped, tag = 'scoped memory for forward.1']
    #allocation31 [shape = 'u8[1024]{0}', space=vmem, size = 0x400, scoped, tag = 'output window, operand 0, single buffered']
    %29 = vsyncpa [#allocation3], 0
    %30 = vsyncpa [#allocation6], 0
    %31 = vsyncpa [#allocation9], 0
    %32 = vsyncpa [#allocation12], 0
    %33 = vsyncpa [#allocation15], 0
    %34 = vsyncpa [#allocation18], 0
    %35 = vsyncpa [#allocation21], 0
    %36 = vsyncpa [#allocation24], 0
    %37 = vsyncpa [#allocation27], 0
    %38 = vsyncpa [#allocation30], 0
    %39 = vsyncpa [#allocation4], 0
    // Predicated region
    $region2: #{forward.1} parent=1 // pred_check
      _
    $region3: #{forward.1} parent=1 // pred_check_branch
      %41 = sbr.rel (0) target = $region5
    $region4: #{forward.1} parent=1 // pred_region
      _
    $region5: #{forward.1} parent=1 // pred_fallthru
      _
    // Predicated region
    $region6: #{forward.1} parent=1 // pred_check
      _
    $region7: #{forward.1} parent=1 // pred_check_branch
      %43 = sbr.rel (0) target = $region9
    $region8: #{forward.1} parent=1 // pred_region
      _
    $region9: #{forward.1} parent=1 // pred_fallthru
      _
    // Predicated region
    $region10: #{forward.1} parent=1 // pred_check
      _
    $region11: #{forward.1} parent=1 // pred_check_branch
      %45 = sbr.rel (0) target = $region13
    $region12: #{forward.1} parent=1 // pred_region
      _
    $region13: #{forward.1} parent=1 // pred_fallthru
      _
    // Predicated region
    $region14: #{forward.1} parent=1 // pred_check
      _
    $region15: #{forward.1} parent=1 // pred_check_branch
      %47 = sbr.rel (0) target = $region17
    $region16: #{forward.1} parent=1 // pred_region
      _
    $region17: #{forward.1} parent=1 // pred_fallthru
      _
    // Predicated region
    $region18: #{forward.1} parent=1 // pred_check
      _
    $region19: #{forward.1} parent=1 // pred_check_branch
      %49 = sbr.rel (0) target = $region21
    $region20: #{forward.1} parent=1 // pred_region
      %s51 = ssub.s32 256, 256
      %52 = vsyncadd [#allocation3], %s51
      %s53 = sshll.u32 [#allocation2], 4
      %s54 = int_to_ptr.vmem [resolvable:$true] %s53
      %59 = dma.hbm_to_vmem [thread:$0]  %s4, 256, %s54, [#allocation3], 64, 64, 4
    $region21: #{forward.1} parent=1 // pred_fallthru
      _
    // Predicated region
    $region22: #{forward.1} parent=1 // pred_check
      _
    $region23: #{forward.1} parent=1 // pred_check_branch
      %61 = sbr.rel (0) target = $region25
    $region24: #{forward.1} parent=1 // pred_region
      _
    $region25: #{forward.1} parent=1 // pred_fallthru
      _
    // Predicated region
    $region26: #{forward.1} parent=1 // pred_check
      _
    $region27: #{forward.1} parent=1 // pred_check_branch
      %63 = sbr.rel (0) target = $region29
    $region28: #{forward.1} parent=1 // pred_region
      %s65 = ssub.s32 16, 16
      %66 = vsyncadd [#allocation6], %s65
      %s68 = sshll.u32 [#allocation5], 4
      %s69 = int_to_ptr.vmem [resolvable:$true] %s68
      %71 = dma.hbm_to_vmem [thread:$0]  %s6, 16, %s69, [#allocation6]
    $region29: #{forward.1} parent=1 // pred_fallthru
      _
    // Predicated region
    $region30: #{forward.1} parent=1 // pred_check
      _
    $region31: #{forward.1} parent=1 // pred_check_branch
      %73 = sbr.rel (0) target = $region33
    $region32: #{forward.1} parent=1 // pred_region
      %s75 = ssub.s32 16, 16
      %76 = vsyncadd [#allocation6], %s75
      %s78 = sshll.u32 [#allocation7], 4
      %s79 = int_to_ptr.vmem [resolvable:$true] %s78
      %81 = dma.hbm_to_vmem [thread:$0]  %s7, 16, %s79, [#allocation6]
    $region33: #{forward.1} parent=1 // pred_fallthru
      _
    // Predicated region
    $region34: #{forward.1} parent=1 // pred_check
      _
    $region35: #{forward.1} parent=1 // pred_check_branch
      %83 = sbr.rel (0) target = $region37
    $region36: #{forward.1} parent=1 // pred_region
      %s85 = ssub.s32 6144, 6144
      %86 = vsyncadd [#allocation9], %s85
      %s87 = sshll.u32 [#allocation8], 4
      %s88 = int_to_ptr.vmem [resolvable:$true] %s87
      %93 = dma.hbm_to_vmem [thread:$0]  %s8, 6144, %s88, [#allocation9], 192, 192, 12
    $region37: #{forward.1} parent=1 // pred_fallthru
      _
    // Predicated region
    $region38: #{forward.1} parent=1 // pred_check
      _
    $region39: #{forward.1} parent=1 // pred_check_branch
      %95 = sbr.rel (0) target = $region41
    $region40: #{forward.1} parent=1 // pred_region
      %s97 = ssub.s32 96, 96
      %98 = vsyncadd [#allocation9], %s97
      %s99 = sshll.u32 [#allocation10], 4
      %s100 = int_to_ptr.vmem [resolvable:$true] %s99
      %105 = dma.hbm_to_vmem [thread:$0]  %s9, 96, %s100, [#allocation9], 48, 48, 3
    $region41: #{forward.1} parent=1 // pred_fallthru
      _
    // Predicated region
    $region42: #{forward.1} parent=1 // pred_check
      _
    $region43: #{forward.1} parent=1 // pred_check_branch
      %107 = sbr.rel (0) target = $region45
    $region44: #{forward.1} parent=1 // pred_region
      %s109 = ssub.s32 2048, 2048
      %110 = vsyncadd [#allocation12], %s109
      %s111 = sshll.u32 [#allocation11], 4
      %s112 = int_to_ptr.vmem [resolvable:$true] %s111
      %117 = dma.hbm_to_vmem [thread:$0]  %s10, 2048, %s112, [#allocation12], 64, 64, 4
    $region45: #{forward.1} parent=1 // pred_fallthru
      _
    // Predicated region
    $region46: #{forward.1} parent=1 // pred_check
      _
    $region47: #{forward.1} parent=1 // pred_check_branch
      %119 = sbr.rel (0) target = $region49
    $region48: #{forward.1} parent=1 // pred_region
      %s121 = ssub.s32 32, 32
      %122 = vsyncadd [#allocation12], %s121
      %s123 = sshll.u32 [#allocation13], 4
      %s124 = int_to_ptr.vmem [resolvable:$true] %s123
      %129 = dma.hbm_to_vmem [thread:$0]  %s11, 32, %s124, [#allocation12], 16, 16, 1
    $region49: #{forward.1} parent=1 // pred_fallthru
      _
    // Predicated region
    $region50: #{forward.1} parent=1 // pred_check
      _
    $region51: #{forward.1} parent=1 // pred_check_branch
      %131 = sbr.rel (0) target = $region53
    $region52: #{forward.1} parent=1 // pred_region
      %s133 = ssub.s32 32, 32
      %134 = vsyncadd [#allocation15], %s133
      %s135 = sshll.u32 [#allocation14], 4
      %s136 = int_to_ptr.vmem [resolvable:$true] %s135
      %141 = dma.hbm_to_vmem [thread:$0]  %s12, 32, %s136, [#allocation15], 16, 16, 1
    $region53: #{forward.1} parent=1 // pred_fallthru
      _
    // Predicated region
    $region54: #{forward.1} parent=1 // pred_check
      _
    $region55: #{forward.1} parent=1 // pred_check_branch
      %143 = sbr.rel (0) target = $region57
    $region56: #{forward.1} parent=1 // pred_region
      %s145 = ssub.s32 32, 32
      %146 = vsyncadd [#allocation15], %s145
      %s147 = sshll.u32 [#allocation16], 4
      %s148 = int_to_ptr.vmem [resolvable:$true] %s147
      %153 = dma.hbm_to_vmem [thread:$0]  %s13, 32, %s148, [#allocation15], 16, 16, 1
    $region57: #{forward.1} parent=1 // pred_fallthru
      _
    // Predicated region
    $region58: #{forward.1} parent=1 // pred_check
      _
    $region59: #{forward.1} parent=1 // pred_check_branch
      %155 = sbr.rel (0) target = $region61
    $region60: #{forward.1} parent=1 // pred_region
      %s157 = ssub.s32 4096, 4096
      %158 = vsyncadd [#allocation18], %s157
      %s159 = sshll.u32 [#allocation17], 4
      %s160 = int_to_ptr.vmem [resolvable:$true] %s159
      %165 = dma.hbm_to_vmem [thread:$0]  %s14, 4096, %s160, [#allocation18], 128, 128, 8
    $region61: #{forward.1} parent=1 // pred_fallthru
      _
    // Predicated region
    $region62: #{forward.1} parent=1 // pred_check
      _
    $region63: #{forward.1} parent=1 // pred_check_branch
      %167 = sbr.rel (0) target = $region65
    $region64: #{forward.1} parent=1 // pred_region
      %s169 = ssub.s32 64, 64
      %170 = vsyncadd [#allocation18], %s169
      %s171 = sshll.u32 [#allocation19], 4
      %s172 = int_to_ptr.vmem [resolvable:$true] %s171
      %177 = dma.hbm_to_vmem [thread:$0]  %s15, 64, %s172, [#allocation18], 32, 32, 2
    $region65: #{forward.1} parent=1 // pred_fallthru
      _
    // Predicated region
    $region66: #{forward.1} parent=1 // pred_check
      _
    $region67: #{forward.1} parent=1 // pred_check_branch
      %179 = sbr.rel (0) target = $region69
    $region68: #{forward.1} parent=1 // pred_region
      %s181 = ssub.s32 4096, 4096
      %182 = vsyncadd [#allocation21], %s181
      %s183 = sshll.u32 [#allocation20], 4
      %s184 = int_to_ptr.vmem [resolvable:$true] %s183
      %189 = dma.hbm_to_vmem [thread:$0]  %s16, 4096, %s184, [#allocation21], 64, 64, 4
    $region69: #{forward.1} parent=1 // pred_fallthru
      _
    // Predicated region
    $region70: #{forward.1} parent=1 // pred_check
      _
    $region71: #{forward.1} parent=1 // pred_check_branch
      %191 = sbr.rel (0) target = $region73
    $region72: #{forward.1} parent=1 // pred_region
      %s193 = ssub.s32 32, 32
      %194 = vsyncadd [#allocation21], %s193
      %s195 = sshll.u32 [#allocation22], 4
      %s196 = int_to_ptr.vmem [resolvable:$true] %s195
      %201 = dma.hbm_to_vmem [thread:$0]  %s17, 32, %s196, [#allocation21], 16, 16, 1
    $region73: #{forward.1} parent=1 // pred_fallthru
      _
    // Predicated region
    $region74: #{forward.1} parent=1 // pred_check
      _
    $region75: #{forward.1} parent=1 // pred_check_branch
      %203 = sbr.rel (0) target = $region77
    $region76: #{forward.1} parent=1 // pred_region
      %s205 = ssub.s32 32, 32
      %206 = vsyncadd [#allocation24], %s205
      %s207 = sshll.u32 [#allocation23], 4
      %s208 = int_to_ptr.vmem [resolvable:$true] %s207
      %213 = dma.hbm_to_vmem [thread:$0]  %s18, 32, %s208, [#allocation24], 16, 16, 1
    $region77: #{forward.1} parent=1 // pred_fallthru
      _
    // Predicated region
    $region78: #{forward.1} parent=1 // pred_check
      _
    $region79: #{forward.1} parent=1 // pred_check_branch
      %215 = sbr.rel (0) target = $region81
    $region80: #{forward.1} parent=1 // pred_region
      %s217 = ssub.s32 32, 32
      %218 = vsyncadd [#allocation24], %s217
      %s219 = sshll.u32 [#allocation25], 4
      %s220 = int_to_ptr.vmem [resolvable:$true] %s219
      %225 = dma.hbm_to_vmem [thread:$0]  %s19, 32, %s220, [#allocation24], 16, 16, 1
    $region81: #{forward.1} parent=1 // pred_fallthru
      _
    // Predicated region
    $region82: #{forward.1} parent=1 // pred_check
      _
    $region83: #{forward.1} parent=1 // pred_check_branch
      %227 = sbr.rel (0) target = $region85
    $region84: #{forward.1} parent=1 // pred_region
      _
    $region85: #{forward.1} parent=1 // pred_fallthru
      _
    // Predicated region
    $region86: #{forward.1} parent=1 // pred_check
      _
    $region87: #{forward.1} parent=1 // pred_check_branch
      %229 = sbr.rel (0) target = $region89
    $region88: #{forward.1} parent=1 // pred_region
      %s231 = ssub.s32 16, 16
      %232 = vsyncadd [#allocation27], %s231
      %s234 = sshll.u32 [#allocation26], 4
      %s235 = int_to_ptr.vmem [resolvable:$true] %s234
      %237 = dma.hbm_to_vmem [thread:$0]  %s21, 16, %s235, [#allocation27]
    $region89: #{forward.1} parent=1 // pred_fallthru
      _
    // Predicated region
    $region90: #{forward.1} parent=1 // pred_check
      _
    $region91: #{forward.1} parent=1 // pred_check_branch
      %239 = sbr.rel (0) target = $region93
    $region92: #{forward.1} parent=1 // pred_region
      %s241 = ssub.s32 1024, 1024
      %242 = vsyncadd [#allocation27], %s241
      %s243 = sshll.u32 [#allocation28], 4
      %s244 = int_to_ptr.vmem [resolvable:$true] %s243
      %249 = dma.hbm_to_vmem [thread:$0]  %s22, 1024, %s244, [#allocation27], 64, 64, 4
    $region93: #{forward.1} parent=1 // pred_fallthru
      _
    // Predicated region
    $region94: #{forward.1} parent=1 // pred_check
      _
    $region95: #{forward.1} parent=1 // pred_check_branch
      %251 = sbr.rel (0) target = $region97
    $region96: #{forward.1} parent=1 // pred_region
      %s253 = ssub.s32 16, 16
      %254 = vsyncadd [#allocation30], %s253
      %s256 = sshll.u32 [#allocation29], 4
      %s257 = int_to_ptr.vmem [resolvable:$true] %s256
      %259 = dma.hbm_to_vmem [thread:$0]  %s23, 16, %s257, [#allocation30]
    $region97: #{forward.1} parent=1 // pred_fallthru
      _
    // Predicated region
    $region98: #{forward.1} parent=1 // pred_check
      _
    $region99: #{forward.1} parent=1 // pred_check_branch
      %261 = sbr.rel (0) target = $region101
    $region100: #{forward.1} parent=1 // pred_region
      %262 = dma.done [#allocation3], 256
    $region101: #{forward.1} parent=1 // pred_fallthru
      _
    // Predicated region
    $region102: #{forward.1} parent=1 // pred_check
      _
    $region103: #{forward.1} parent=1 // pred_check_branch
      %264 = sbr.rel (0) target = $region105
    $region104: #{forward.1} parent=1 // pred_region
      %265 = dma.done [#allocation6], 16
    $region105: #{forward.1} parent=1 // pred_fallthru
      _
    // Predicated region
    $region106: #{forward.1} parent=1 // pred_check
      _
    $region107: #{forward.1} parent=1 // pred_check_branch
      %267 = sbr.rel (0) target = $region109
    $region108: #{forward.1} parent=1 // pred_region
      %268 = dma.done [#allocation6], 16
    $region109: #{forward.1} parent=1 // pred_fallthru
      _
    // Predicated region
    $region110: #{forward.1} parent=1 // pred_check
      _
    $region111: #{forward.1} parent=1 // pred_check_branch
      %270 = sbr.rel (0) target = $region113
    $region112: #{forward.1} parent=1 // pred_region
      %271 = dma.done [#allocation9], 6144
    $region113: #{forward.1} parent=1 // pred_fallthru
      _
    // Predicated region
    $region114: #{forward.1} parent=1 // pred_check
      _
    $region115: #{forward.1} parent=1 // pred_check_branch
      %273 = sbr.rel (0) target = $region117
    $region116: #{forward.1} parent=1 // pred_region
      %274 = dma.done [#allocation9], 96
    $region117: #{forward.1} parent=1 // pred_fallthru
      _
    // Predicated region
    $region118: #{forward.1} parent=1 // pred_check
      _
    $region119: #{forward.1} parent=1 // pred_check_branch
      %276 = sbr.rel (0) target = $region121
    $region120: #{forward.1} parent=1 // pred_region
      %277 = dma.done [#allocation12], 2048
    $region121: #{forward.1} parent=1 // pred_fallthru
      _
    // Predicated region
    $region122: #{forward.1} parent=1 // pred_check
      _
    $region123: #{forward.1} parent=1 // pred_check_branch
      %279 = sbr.rel (0) target = $region125
    $region124: #{forward.1} parent=1 // pred_region
      %280 = dma.done [#allocation12], 32
    $region125: #{forward.1} parent=1 // pred_fallthru
      _
    // Predicated region
    $region126: #{forward.1} parent=1 // pred_check
      _
    $region127: #{forward.1} parent=1 // pred_check_branch
      %282 = sbr.rel (0) target = $region129
    $region128: #{forward.1} parent=1 // pred_region
      %283 = dma.done [#allocation15], 32
    $region129: #{forward.1} parent=1 // pred_fallthru
      _
    // Predicated region
    $region130: #{forward.1} parent=1 // pred_check
      _
    $region131: #{forward.1} parent=1 // pred_check_branch
      %285 = sbr.rel (0) target = $region133
    $region132: #{forward.1} parent=1 // pred_region
      %286 = dma.done [#allocation15], 32
    $region133: #{forward.1} parent=1 // pred_fallthru
      _
    // Predicated region
    $region134: #{forward.1} parent=1 // pred_check
      _
    $region135: #{forward.1} parent=1 // pred_check_branch
      %288 = sbr.rel (0) target = $region137
    $region136: #{forward.1} parent=1 // pred_region
      %289 = dma.done [#allocation18], 4096
    $region137: #{forward.1} parent=1 // pred_fallthru
      _
    // Predicated region
    $region138: #{forward.1} parent=1 // pred_check
      _
    $region139: #{forward.1} parent=1 // pred_check_branch
      %291 = sbr.rel (0) target = $region141
    $region140: #{forward.1} parent=1 // pred_region
      %292 = dma.done [#allocation18], 64
    $region141: #{forward.1} parent=1 // pred_fallthru
      _
    // Predicated region
    $region142: #{forward.1} parent=1 // pred_check
      _
    $region143: #{forward.1} parent=1 // pred_check_branch
      %294 = sbr.rel (0) target = $region145
    $region144: #{forward.1} parent=1 // pred_region
      %295 = dma.done [#allocation21], 4096
    $region145: #{forward.1} parent=1 // pred_fallthru
      _
    // Predicated region
    $region146: #{forward.1} parent=1 // pred_check
      _
    $region147: #{forward.1} parent=1 // pred_check_branch
      %297 = sbr.rel (0) target = $region149
    $region148: #{forward.1} parent=1 // pred_region
      %298 = dma.done [#allocation21], 32
    $region149: #{forward.1} parent=1 // pred_fallthru
      _
    // Predicated region
    $region150: #{forward.1} parent=1 // pred_check
      _
    $region151: #{forward.1} parent=1 // pred_check_branch
      %300 = sbr.rel (0) target = $region153
    $region152: #{forward.1} parent=1 // pred_region
      %301 = dma.done [#allocation24], 32
    $region153: #{forward.1} parent=1 // pred_fallthru
      _
    // Predicated region
    $region154: #{forward.1} parent=1 // pred_check
      _
    $region155: #{forward.1} parent=1 // pred_check_branch
      %303 = sbr.rel (0) target = $region157
    $region156: #{forward.1} parent=1 // pred_region
      %304 = dma.done [#allocation24], 32
    $region157: #{forward.1} parent=1 // pred_fallthru
      _
    // Predicated region
    $region158: #{forward.1} parent=1 // pred_check
      _
    $region159: #{forward.1} parent=1 // pred_check_branch
      %306 = sbr.rel (0) target = $region161
    $region160: #{forward.1} parent=1 // pred_region
      %307 = dma.done [#allocation27], 16
    $region161: #{forward.1} parent=1 // pred_fallthru
      _
    // Predicated region
    $region162: #{forward.1} parent=1 // pred_check
      _
    $region163: #{forward.1} parent=1 // pred_check_branch
      %309 = sbr.rel (0) target = $region165
    $region164: #{forward.1} parent=1 // pred_region
      %310 = dma.done [#allocation27], 1024
    $region165: #{forward.1} parent=1 // pred_fallthru
      _
    // Predicated region
    $region166: #{forward.1} parent=1 // pred_check
      _
    $region167: #{forward.1} parent=1 // pred_check_branch
      %312 = sbr.rel (0) target = $region169
    $region168: #{forward.1} parent=1 // pred_region
      %313 = dma.done [#allocation30], 16
    $region169: #{forward.1} parent=1 // pred_fallthru
      _
    %v315 = vlaneseq
    %v316 = vand.u32 %v315, 127
    %v317 = vld [vmem:[%s0] sm:$0xff]
    %v318 = vld [vmem:[%s0 + $0x8] sm:$0xff]
    %319 = vset.pattern.permute.xlu0 0
    %320 = vperm.xlu0 %319, %v317
    %v321 = vpop.permute.xlu0 %320
    %322 = vset.pattern.permute.xlu0 0
    %323 = vperm.xlu0 %322, %v318
    %v324 = vpop.permute.xlu0 %323
    %vm325 = vcmp.eq.s32.totalorder %v321, %v316
    %vm326 = vcmp.eq.s32.totalorder %v324, %v316
    %v327 = vsel %vm325, 1.0, 0.0
    %v328 = vsel %vm326, 1.0, 0.0
    %v329 = vpack.c.bf16 %v328, %v327
    %v330 = vld [vmem:[%s1] sm:$0xff]
    %v331 = vld [vmem:[%s1 + $0x8] sm:$0xff]
    %332 = vset.pattern.permute.xlu0 0
    %333 = vperm.xlu0 %332, %v330
    %v334 = vpop.permute.xlu0 %333
    %335 = vset.pattern.permute.xlu0 0
    %336 = vperm.xlu0 %335, %v331
    %v337 = vpop.permute.xlu0 %336
    %vm338 = vcmp.eq.s32.totalorder %v334, %v316
    %vm339 = vcmp.eq.s32.totalorder %v337, %v316
    %v340 = vsel %vm338, 1.0, 0.0
    %v341 = vsel %vm339, 1.0, 0.0
    %v342 = vpack.c.bf16 %v341, %v340
    %v343 = vld [vmem:[%s3] sm:$0xf]
    %v344 = vld [vmem:[%s3 + $0x4] sm:$0xf]
    %v345 = vld [vmem:[%s3 + $0x8] sm:$0xf]
    %v346 = vld [vmem:[%s3 + $0xc] sm:$0xf]
    %v347 = vld [vmem:[%s3 + $0x10] sm:$0xf]
    %v348 = vld [vmem:[%s3 + $0x14] sm:$0xf]
    %v349 = vld [vmem:[%s3 + $0x18] sm:$0xf]
    %v350 = vld [vmem:[%s3 + $0x1c] sm:$0xf]
    %v351 = vld [vmem:[#allocation2] sm:$0xf]
    %v352 = vld [vmem:[#allocation2 + $0x4] sm:$0xf]
    %v353 = vld [vmem:[#allocation2 + $0x8] sm:$0xf]
    %v354 = vld [vmem:[#allocation2 + $0xc] sm:$0xf]
    %v359 = vunpack.c.l.b16 %v351
    %v360 = vunpack.c.l.b16 %v352
    %v361 = vunpack.c.l.b16 %v353
    %v362 = vunpack.c.l.b16 %v354
    %v363 = vpack.c.b16 %v360, %v359
    %v364 = vpack.c.b16 %v362, %v361
    %vm367 = vcmask 261120
    %v369 = vsel %vm367, %v342, 0
    %371 = vmatprep.subr.bf16.mxu0 0
    %372 = vmatpush1.bf16.msra.mxu0 %v363
    %373 = vmatprep.subr.bf16.mxu0 0
    %374 = vmatpush1.bf16.msra.mxu0 %v364
    %375 = vmatprep.subr.bf16.mxu0 0
    %376 = vmatpush1.bf16.msra.mxu0 0
    %377 = vmatprep.subr.bf16.mxu0 0
    %378 = vmatpush1.bf16.msra.mxu0 0
    %379 = vmatprep.subr.bf16.mxu0 0
    %380 = vmatpush1.bf16.msra.mxu0 0
    %381 = vmatprep.subr.bf16.mxu0 0
    %382 = vmatpush1.bf16.msra.mxu0 0
    %383 = vmatprep.subr.bf16.mxu0 0
    %384 = vmatpush1.bf16.msra.mxu0 0
    %385 = vmatprep.subr.bf16.mxu0 0
    %386 = vmatpush1.bf16.msra.mxu0 0
    %387 = vmatprep.subr.bf16.mxu0 0
    %388 = vmatpush1.bf16.msra.mxu0 0
    %389 = vmatprep.subr.bf16.mxu0 0
    %390 = vmatpush1.bf16.msra.mxu0 0
    %391 = vmatprep.subr.bf16.mxu0 0
    %392 = vmatpush1.bf16.msra.mxu0 0
    %393 = vmatprep.subr.bf16.mxu0 0
    %394 = vmatpush1.bf16.msra.mxu0 0
    %395 = vmatprep.subr.bf16.mxu0 0
    %396 = vmatpush1.bf16.msra.mxu0 0
    %397 = vmatprep.subr.bf16.mxu0 0
    %398 = vmatpush1.bf16.msra.mxu0 0
    %399 = vmatprep.subr.bf16.mxu0 0
    %400 = vmatpush1.bf16.msra.mxu0 0
    %401 = vmatprep.subr.bf16.mxu0 0
    %402 = vmatpush1.bf16.msra.mxu0 0
    %403 = vmatprep.mubr.bf16.mxu0 0
    %404 = vmatmul.mubr.bf16.gmra.mrb[0].mxu0 %v369
    %v405 = vpop.f32.mrb[0].mxu0
    %v406 = vadd.f32 0.0, %v405
    %v407 = vpop.f32.mrb[0].mxu0
    %v408 = vpop.f32.mrb[0].mxu0
    %v409 = vadd.f32 0.0, %v408
    %v410 = vpop.f32.mrb[0].mxu0
    %411 = vdwg.mxu0
    %v420 = vunpack.c.l.b16 %v343
    %v421 = vunpack.c.l.b16 %v344
    %v422 = vunpack.c.l.b16 %v345
    %v423 = vunpack.c.l.b16 %v346
    %v424 = vunpack.c.l.b16 %v347
    %v425 = vunpack.c.l.b16 %v348
    %v426 = vunpack.c.l.b16 %v349
    %v427 = vunpack.c.l.b16 %v350
    %v428 = vpack.c.b16 %v421, %v420
    %v429 = vpack.c.b16 %v423, %v422
    %v430 = vpack.c.b16 %v425, %v424
    %v431 = vpack.c.b16 %v427, %v426
    %vm436 = vcmask 523264
    %v438 = vsel %vm436, %v329, 0
    %440 = vmatprep.subr.bf16.mxu0 0
    %441 = vmatpush1.bf16.msra.mxu0 %v428
    %442 = vmatprep.subr.bf16.mxu0 0
    %443 = vmatpush1.bf16.msra.mxu0 %v429
    %444 = vmatprep.subr.bf16.mxu0 0
    %445 = vmatpush1.bf16.msra.mxu0 %v430
    %446 = vmatprep.subr.bf16.mxu0 0
    %447 = vmatpush1.bf16.msra.mxu0 %v431
    %448 = vmatprep.subr.bf16.mxu0 0
    %449 = vmatpush1.bf16.msra.mxu0 0
    %450 = vmatprep.subr.bf16.mxu0 0
    %451 = vmatpush1.bf16.msra.mxu0 0
    %452 = vmatprep.subr.bf16.mxu0 0
    %453 = vmatpush1.bf16.msra.mxu0 0
    %454 = vmatprep.subr.bf16.mxu0 0
    %455 = vmatpush1.bf16.msra.mxu0 0
    %456 = vmatprep.subr.bf16.mxu0 0
    %457 = vmatpush1.bf16.msra.mxu0 0
    %458 = vmatprep.subr.bf16.mxu0 0
    %459 = vmatpush1.bf16.msra.mxu0 0
    %460 = vmatprep.subr.bf16.mxu0 0
    %461 = vmatpush1.bf16.msra.mxu0 0
    %462 = vmatprep.subr.bf16.mxu0 0
    %463 = vmatpush1.bf16.msra.mxu0 0
    %464 = vmatprep.subr.bf16.mxu0 0
    %465 = vmatpush1.bf16.msra.mxu0 0
    %466 = vmatprep.subr.bf16.mxu0 0
    %467 = vmatpush1.bf16.msra.mxu0 0
    %468 = vmatprep.subr.bf16.mxu0 0
    %469 = vmatpush1.bf16.msra.mxu0 0
    %470 = vmatprep.subr.bf16.mxu0 0
    %471 = vmatpush1.bf16.msra.mxu0 0
    %472 = vmatprep.mubr.bf16.mxu0 0
    %473 = vmatmul.mubr.bf16.gmra.mrb[0].mxu0 %v438
    %v474 = vpop.f32.mrb[0].mxu0
    %v475 = vadd.f32 %v406, %v474
    %v476 = vpop.f32.mrb[0].mxu0
    %v477 = vpop.f32.mrb[0].mxu0
    %v478 = vadd.f32 %v409, %v477
    %v479 = vpop.f32.mrb[0].mxu0
    %480 = vdwg.mxu0
    %v481 = vld [vmem:[%s5] sm:$0x1]
    %v483 = vlaneseq
    %v484 = vshrl.u32 %v483, 7
    %v485 = vsub.s32 0, %v484
    %v486 = vrot.slane %v481, %v485
    %v488 = vadd.f32 %v475, %v486
    %v489 = vadd.f32 %v478, %v486
    %v490 = vld [vmem:[#allocation5] sm:$0x1]
    %v491 = vld [vmem:[#allocation7] sm:$0x1]
    %492 = vadd.xlane.f32.xlu0 %v488
    %v493 = vpop.xlane.xlu0 %492
    %494 = vadd.xlane.f32.xlu0 %v489
    %v495 = vpop.xlane.xlu0 %494
    %v496 = vrcp.pop 128.0
    %v497 = vmul.f32 %v493, %v496
    %v498 = vmul.f32 %v495, %v496
    %v499 = vmul.f32 %v488, %v488
    %v500 = vmul.f32 %v489, %v489
    %501 = vadd.xlane.f32.xlu0 %v499
    %v502 = vpop.xlane.xlu0 %501
    %503 = vadd.xlane.f32.xlu0 %v500
    %v504 = vpop.xlane.xlu0 %503
    %v505 = vmul.f32 %v502, %v496
    %v506 = vmul.f32 %v504, %v496
    %v507 = vmul.f32 %v497, %v497
    %v508 = vmul.f32 %v498, %v498
    %v509 = vsub.f32 %v505, %v507
    %v510 = vsub.f32 %v506, %v508
    %v511 = vsub.f32 %v488, %v497
    %v512 = vsub.f32 %v489, %v498
    %v513 = vadd.f32 %v509, 1e-05
    %v514 = vadd.f32 %v510, 1e-05
    %v515 = vrsqrt.pop %v513
    %v516 = vrsqrt.pop %v514
    %v517 = vmul.f32 %v511, %v515
    %v518 = vmul.f32 %v512, %v516
    %v520 = vlaneseq
    %v521 = vshrl.u32 %v520, 7
    %v522 = vsub.s32 0, %v521
    %v523 = vrot.slane %v490, %v522
    %v525 = vmul.f32 %v517, %v523
    %v526 = vmul.f32 %v518, %v523
    %v528 = vlaneseq
    %v529 = vshrl.u32 %v528, 7
    %v530 = vsub.s32 0, %v529
    %v531 = vrot.slane %v491, %v530
    %v533 = vadd.f32 %v525, %v531
    %v534 = vadd.f32 %v526, %v531
    %v535 = vld [vmem:[%s2] sm:$0x3]
    %v536 = vsub.f32 %v535, 1.0
    %v537 = vmul.f32 %v536, 1e+09
    %v540 = vunpack.c.l.s4 1966171168
    %v541 = vunpack.c.0.s8 %v540
    %v542 = vlaneseq
    %v543 = vshrl.u32 %v542, 7
    %v544 = vsub.s32 %v541, %v543
    %v545 = vrot.slane %v537, %v544
    %v546 = vcombine.high %v545, %v545
    %v548 = vunpack.c.l.s4 1966171168
    %v549 = vunpack.c.0.s8 %v548
    %v550 = vlaneseq
    %v551 = vshrl.u32 %v550, 7
    %v552 = vsub.s32 %v549, %v551
    %v553 = vrot.slane %v545, %v552
    %v555 = vunpack.c.l.s4 1966171168
    %v556 = vunpack.c.0.s8 %v555
    %v557 = vlaneseq
    %v558 = vshrl.u32 %v557, 7
    %v559 = vsub.s32 %v556, %v558
    %v560 = vrot.slane %v546, %v559
    %v561 = vld [vmem:[#allocation11] sm:$0xf]
    %v562 = vld [vmem:[#allocation11 + $0x4] sm:$0xf]
    %v563 = vld [vmem:[#allocation11 + $0x8] sm:$0xf]
    %v564 = vld [vmem:[#allocation11 + $0xc] sm:$0xf]
    %v565 = vld [vmem:[#allocation11 + $0x10] sm:$0xf]
    %v566 = vld [vmem:[#allocation11 + $0x14] sm:$0xf]
    %v567 = vld [vmem:[#allocation11 + $0x18] sm:$0xf]
    %v568 = vld [vmem:[#allocation11 + $0x1c] sm:$0xf]
    %v569 = vld [vmem:[#allocation11 + $0x20] sm:$0xf]
    %v570 = vld [vmem:[#allocation11 + $0x24] sm:$0xf]
    %v571 = vld [vmem:[#allocation11 + $0x28] sm:$0xf]
    %v572 = vld [vmem:[#allocation11 + $0x2c] sm:$0xf]
    %v573 = vld [vmem:[#allocation11 + $0x30] sm:$0xf]
    %v574 = vld [vmem:[#allocation11 + $0x34] sm:$0xf]
    %v575 = vld [vmem:[#allocation11 + $0x38] sm:$0xf]
    %v576 = vld [vmem:[#allocation11 + $0x3c] sm:$0xf]
    %v577 = vpack.c.bf16 %v534, %v533
    %v578 = vld [vmem:[#allocation8] sm:$0xff]
    %v579 = vld [vmem:[#allocation8 + $0x8] sm:$0xf]
    %v580 = vld [vmem:[#allocation8 + $0xc] sm:$0xff]
    %v581 = vld [vmem:[#allocation8 + $0x14] sm:$0xf]
    %v582 = vld [vmem:[#allocation8 + $0x18] sm:$0xff]
    %v583 = vld [vmem:[#allocation8 + $0x20] sm:$0xf]
    %v584 = vld [vmem:[#allocation8 + $0x24] sm:$0xff]
    %v585 = vld [vmem:[#allocation8 + $0x2c] sm:$0xf]
    %v586 = vld [vmem:[#allocation8 + $0x30] sm:$0xff]
    %v587 = vld [vmem:[#allocation8 + $0x38] sm:$0xf]
    %v588 = vld [vmem:[#allocation8 + $0x3c] sm:$0xff]
    %v589 = vld [vmem:[#allocation8 + $0x44] sm:$0xf]
    %v590 = vld [vmem:[#allocation8 + $0x48] sm:$0xff]
    %v591 = vld [vmem:[#allocation8 + $0x50] sm:$0xf]
    %v592 = vld [vmem:[#allocation8 + $0x54] sm:$0xff]
    %v593 = vld [vmem:[#allocation8 + $0x5c] sm:$0xf]
    %v594 = vld [vmem:[#allocation8 + $0x60] sm:$0xff]
    %v595 = vld [vmem:[#allocation8 + $0x68] sm:$0xf]
    %v596 = vld [vmem:[#allocation8 + $0x6c] sm:$0xff]
    %v597 = vld [vmem:[#allocation8 + $0x74] sm:$0xf]
    %v598 = vld [vmem:[#allocation8 + $0x78] sm:$0xff]
    %v599 = vld [vmem:[#allocation8 + $0x80] sm:$0xf]
    %v600 = vld [vmem:[#allocation8 + $0x84] sm:$0xff]
    %v601 = vld [vmem:[#allocation8 + $0x8c] sm:$0xf]
    %v602 = vld [vmem:[#allocation8 + $0x90] sm:$0xff]
    %v603 = vld [vmem:[#allocation8 + $0x98] sm:$0xf]
    %v604 = vld [vmem:[#allocation8 + $0x9c] sm:$0xff]
    %v605 = vld [vmem:[#allocation8 + $0xa4] sm:$0xf]
    %v606 = vld [vmem:[#allocation8 + $0xa8] sm:$0xff]
    %v607 = vld [vmem:[#allocation8 + $0xb0] sm:$0xf]
    %v608 = vld [vmem:[#allocation8 + $0xb4] sm:$0xff]
    %v609 = vld [vmem:[#allocation8 + $0xbc] sm:$0xf]
    %v610 = vld [vmem:[#allocation10] sm:$0x7]
    %v612 = vlaneseq
    %v613 = vshrl.u32 %v612, 7
    %v614 = vsub.s32 0, %v613
    %v615 = vrot.slane %v610, %v614
    %v616 = vlaneseq
    %v617 = vshrl.u32 %v616, 7
    %v618 = vsub.s32 1, %v617
    %v619 = vrot.slane %v610, %v618
    %v620 = vlaneseq
    %v621 = vshrl.u32 %v620, 7
    %v622 = vsub.s32 2, %v621
    %v623 = vrot.slane %v610, %v622
    %v659 = vunpack.c.l.b16 %v578
    %v660 = vunpack.c.h.b16 %v578
    %v661 = vunpack.c.l.b16 %v579
    %v662 = vunpack.c.l.b16 %v580
    %v663 = vunpack.c.h.b16 %v580
    %v664 = vunpack.c.l.b16 %v581
    %v665 = vunpack.c.l.b16 %v582
    %v666 = vunpack.c.h.b16 %v582
    %v667 = vunpack.c.l.b16 %v583
    %v668 = vunpack.c.l.b16 %v584
    %v669 = vunpack.c.h.b16 %v584
    %v670 = vunpack.c.l.b16 %v585
    %v671 = vunpack.c.l.b16 %v586
    %v672 = vunpack.c.h.b16 %v586
    %v673 = vunpack.c.l.b16 %v587
    %v674 = vunpack.c.l.b16 %v588
    %v675 = vunpack.c.h.b16 %v588
    %v676 = vunpack.c.l.b16 %v589
    %v677 = vunpack.c.l.b16 %v590
    %v678 = vunpack.c.h.b16 %v590
    %v679 = vunpack.c.l.b16 %v591
    %v680 = vunpack.c.l.b16 %v592
    %v681 = vunpack.c.h.b16 %v592
    %v682 = vunpack.c.l.b16 %v593
    %v683 = vunpack.c.l.b16 %v594
    %v684 = vunpack.c.h.b16 %v594
    %v685 = vunpack.c.l.b16 %v595
    %v686 = vunpack.c.l.b16 %v596
    %v687 = vunpack.c.h.b16 %v596
    %v688 = vunpack.c.l.b16 %v597
    %v689 = vunpack.c.l.b16 %v598
    %v690 = vunpack.c.h.b16 %v598
    %v691 = vunpack.c.l.b16 %v599
    %v692 = vunpack.c.l.b16 %v600
    %v693 = vunpack.c.h.b16 %v600
    %v694 = vunpack.c.l.b16 %v601
    %v695 = vunpack.c.l.b16 %v602
    %v696 = vunpack.c.h.b16 %v602
    %v697 = vunpack.c.l.b16 %v603
    %v698 = vunpack.c.l.b16 %v604
    %v699 = vunpack.c.h.b16 %v604
    %v700 = vunpack.c.l.b16 %v605
    %v701 = vunpack.c.l.b16 %v606
    %v702 = vunpack.c.h.b16 %v606
    %v703 = vunpack.c.l.b16 %v607
    %v704 = vunpack.c.l.b16 %v608
    %v705 = vunpack.c.h.b16 %v608
    %v706 = vunpack.c.l.b16 %v609
    %v707 = vpack.c.b16 %v662, %v659
    %v708 = vpack.c.b16 %v663, %v660
    %v709 = vpack.c.b16 %v664, %v661
    %v710 = vpack.c.b16 %v668, %v665
    %v711 = vpack.c.b16 %v669, %v666
    %v712 = vpack.c.b16 %v670, %v667
    %v713 = vpack.c.b16 %v674, %v671
    %v714 = vpack.c.b16 %v675, %v672
    %v715 = vpack.c.b16 %v676, %v673
    %v716 = vpack.c.b16 %v680, %v677
    %v717 = vpack.c.b16 %v681, %v678
    %v718 = vpack.c.b16 %v682, %v679
    %v719 = vpack.c.b16 %v686, %v683
    %v720 = vpack.c.b16 %v687, %v684
    %v721 = vpack.c.b16 %v688, %v685
    %v722 = vpack.c.b16 %v692, %v689
    %v723 = vpack.c.b16 %v693, %v690
    %v724 = vpack.c.b16 %v694, %v691
    %v725 = vpack.c.b16 %v698, %v695
    %v726 = vpack.c.b16 %v699, %v696
    %v727 = vpack.c.b16 %v700, %v697
    %v728 = vpack.c.b16 %v704, %v701
    %v729 = vpack.c.b16 %v705, %v702
    %v730 = vpack.c.b16 %v706, %v703
    %755 = vmatprep.subr.bf16.mxu0 %v708
    %756 = vmatpush1.bf16.msra.mxu0 %v707
    %757 = vmatprep.subr.bf16.mxu0 %v711
    %758 = vmatpush1.bf16.msra.mxu0 %v710
    %759 = vmatprep.subr.bf16.mxu0 %v714
    %760 = vmatpush1.bf16.msra.mxu0 %v713
    %761 = vmatprep.subr.bf16.mxu0 %v717
    %762 = vmatpush1.bf16.msra.mxu0 %v716
    %763 = vmatprep.subr.bf16.mxu0 %v720
    %764 = vmatpush1.bf16.msra.mxu0 %v719
    %765 = vmatprep.subr.bf16.mxu0 %v723
    %766 = vmatpush1.bf16.msra.mxu0 %v722
    %767 = vmatprep.subr.bf16.mxu0 %v726
    %768 = vmatpush1.bf16.msra.mxu0 %v725
    %769 = vmatprep.subr.bf16.mxu0 %v729
    %770 = vmatpush1.bf16.msra.mxu0 %v728
    %771 = vmatprep.subr.bf16.mxu0 0
    %772 = vmatpush1.bf16.msra.mxu0 0
    %773 = vmatprep.subr.bf16.mxu0 0
    %774 = vmatpush1.bf16.msra.mxu0 0
    %775 = vmatprep.subr.bf16.mxu0 0
    %776 = vmatpush1.bf16.msra.mxu0 0
    %777 = vmatprep.subr.bf16.mxu0 0
    %778 = vmatpush1.bf16.msra.mxu0 0
    %779 = vmatprep.subr.bf16.mxu0 0
    %780 = vmatpush1.bf16.msra.mxu0 0
    %781 = vmatprep.subr.bf16.mxu0 0
    %782 = vmatpush1.bf16.msra.mxu0 0
    %783 = vmatprep.subr.bf16.mxu0 0
    %784 = vmatpush1.bf16.msra.mxu0 0
    %785 = vmatprep.subr.bf16.mxu0 0
    %786 = vmatpush1.bf16.msra.mxu0 0
    %787 = vmatprep.mubr.bf16.mxu0 0
    %788 = vmatmul.mubr.bf16.gmra.mrb[0].mxu0 %v577
    %v789 = vpop.f32.mrb[0].mxu0
    %v790 = vadd.f32 %v615, %v789
    %v791 = vpop.f32.mrb[0].mxu0
    %v792 = vadd.f32 %v619, %v791
    %v793 = vpop.f32.mrb[0].mxu0
    %v794 = vadd.f32 %v615, %v793
    %v795 = vpop.f32.mrb[0].mxu0
    %v796 = vadd.f32 %v619, %v795
    %797 = vdwg.mxu0
    %798 = vmatprep.subr.bf16.mxu0 0
    %799 = vmatpush1.bf16.msra.mxu0 %v709
    %800 = vmatprep.subr.bf16.mxu0 0
    %801 = vmatpush1.bf16.msra.mxu0 %v712
    %802 = vmatprep.subr.bf16.mxu0 0
    %803 = vmatpush1.bf16.msra.mxu0 %v715
    %804 = vmatprep.subr.bf16.mxu0 0
    %805 = vmatpush1.bf16.msra.mxu0 %v718
    %806 = vmatprep.subr.bf16.mxu0 0
    %807 = vmatpush1.bf16.msra.mxu0 %v721
    %808 = vmatprep.subr.bf16.mxu0 0
    %809 = vmatpush1.bf16.msra.mxu0 %v724
    %810 = vmatprep.subr.bf16.mxu0 0
    %811 = vmatpush1.bf16.msra.mxu0 %v727
    %812 = vmatprep.subr.bf16.mxu0 0
    %813 = vmatpush1.bf16.msra.mxu0 %v730
    %814 = vmatprep.subr.bf16.mxu0 0
    %815 = vmatpush1.bf16.msra.mxu0 0
    %816 = vmatprep.subr.bf16.mxu0 0
    %817 = vmatpush1.bf16.msra.mxu0 0
    %818 = vmatprep.subr.bf16.mxu0 0
    %819 = vmatpush1.bf16.msra.mxu0 0
    %820 = vmatprep.subr.bf16.mxu0 0
    %821 = vmatpush1.bf16.msra.mxu0 0
    %822 = vmatprep.subr.bf16.mxu0 0
    %823 = vmatpush1.bf16.msra.mxu0 0
    %824 = vmatprep.subr.bf16.mxu0 0
    %825 = vmatpush1.bf16.msra.mxu0 0
    %826 = vmatprep.subr.bf16.mxu0 0
    %827 = vmatpush1.bf16.msra.mxu0 0
    %828 = vmatprep.subr.bf16.mxu0 0
    %829 = vmatpush1.bf16.msra.mxu0 0
    %830 = vmatprep.mubr.bf16.mxu0 0
    %831 = vmatmul.mubr.bf16.gmra.mrb[0].mxu0 %v577
    %v832 = vpop.f32.mrb[0].mxu0
    %v833 = vadd.f32 %v623, %v832
    %v834 = vpop.f32.mrb[0].mxu0
    %v835 = vpop.f32.mrb[0].mxu0
    %v836 = vadd.f32 %v623, %v835
    %v837 = vpop.f32.mrb[0].mxu0
    %838 = vdwg.mxu0
    %841 = vrot.lane.b32.xlu0 %v790, 96
    %v842 = vpop.permute.xlu0 %841
    %843 = vrot.lane.b32.xlu0 %v794, 96
    %v844 = vpop.permute.xlu0 %843
    %847 = vrot.lane.b32.xlu0 %v790, 64
    %v848 = vpop.permute.xlu0 %847
    %849 = vrot.lane.b32.xlu0 %v794, 64
    %v850 = vpop.permute.xlu0 %849
    %853 = vrot.lane.b32.xlu0 %v790, 32
    %v854 = vpop.permute.xlu0 %853
    %855 = vrot.lane.b32.xlu0 %v794, 32
    %v856 = vpop.permute.xlu0 %855
    %v859 = vpack.c.bf16 %v790, %v790
    %v860 = vpack.c.bf16 %v794, %v794
    %v861 = vpack.c.bf16 %v842, %v842
    %v862 = vpack.c.bf16 %v844, %v844
    %v863 = vpack.c.bf16 %v848, %v848
    %v864 = vpack.c.bf16 %v850, %v850
    %v865 = vpack.c.bf16 %v854, %v854
    %v866 = vpack.c.bf16 %v856, %v856
    %869 = vrot.lane.b32.xlu0 %v792, 96
    %v870 = vpop.permute.xlu0 %869
    %871 = vrot.lane.b32.xlu0 %v796, 96
    %v872 = vpop.permute.xlu0 %871
    %875 = vrot.lane.b32.xlu0 %v792, 64
    %v876 = vpop.permute.xlu0 %875
    %877 = vrot.lane.b32.xlu0 %v796, 64
    %v878 = vpop.permute.xlu0 %877
    %881 = vrot.lane.b32.xlu0 %v792, 32
    %v882 = vpop.permute.xlu0 %881
    %883 = vrot.lane.b32.xlu0 %v796, 32
    %v884 = vpop.permute.xlu0 %883
    %v887 = vpack.c.bf16 %v792, %v792
    %v888 = vpack.c.bf16 %v796, %v796
    %v889 = vpack.c.bf16 %v870, %v870
    %v890 = vpack.c.bf16 %v872, %v872
    %v891 = vpack.c.bf16 %v876, %v876
    %v892 = vpack.c.bf16 %v878, %v878
    %v893 = vpack.c.bf16 %v882, %v882
    %v894 = vpack.c.bf16 %v884, %v884
    %897 = vrot.lane.b32.xlu0 %v833, 96
    %v898 = vpop.permute.xlu0 %897
    %899 = vrot.lane.b32.xlu0 %v836, 96
    %v900 = vpop.permute.xlu0 %899
    %903 = vrot.lane.b32.xlu0 %v833, 64
    %v904 = vpop.permute.xlu0 %903
    %905 = vrot.lane.b32.xlu0 %v836, 64
    %v906 = vpop.permute.xlu0 %905
    %909 = vrot.lane.b32.xlu0 %v833, 32
    %v910 = vpop.permute.xlu0 %909
    %911 = vrot.lane.b32.xlu0 %v836, 32
    %v912 = vpop.permute.xlu0 %911
    %v915 = vpack.c.bf16 %v833, %v833
    %v916 = vpack.c.bf16 %v836, %v836
    %v917 = vpack.c.bf16 %v898, %v898
    %v918 = vpack.c.bf16 %v900, %v900
    %v919 = vpack.c.bf16 %v904, %v904
    %v920 = vpack.c.bf16 %v906, %v906
    %v921 = vpack.c.bf16 %v910, %v910
    %v922 = vpack.c.bf16 %v912, %v912
    %v924 = vsel %vm367, %v859, 0
    %v927 = vsel %vm367, %v887, 0
    %929 = vmatprep.subr.bf16.mxu0 0
    %930 = vmatpush1.bf16.xpose.msra.mxu0 %v927
    %931 = vmatprep.subr.bf16.mxu0 0
    %932 = vmatpush1.bf16.xpose.msra.mxu0 0
    %933 = vmatprep.subr.bf16.mxu0 0
    %934 = vmatpush1.bf16.xpose.msra.mxu0 0
    %935 = vmatprep.subr.bf16.mxu0 0
    %936 = vmatpush1.bf16.xpose.msra.mxu0 0
    %937 = vmatprep.subr.bf16.mxu0 0
    %938 = vmatpush1.bf16.xpose.msra.mxu0 0
    %939 = vmatprep.subr.bf16.mxu0 0
    %940 = vmatpush1.bf16.xpose.msra.mxu0 0
    %941 = vmatprep.subr.bf16.mxu0 0
    %942 = vmatpush1.bf16.xpose.msra.mxu0 0
    %943 = vmatprep.subr.bf16.mxu0 0
    %944 = vmatpush1.bf16.xpose.msra.mxu0 0
    %945 = vmatprep.subr.bf16.mxu0 0
    %946 = vmatpush1.bf16.xpose.msra.mxu0 0
    %947 = vmatprep.subr.bf16.mxu0 0
    %948 = vmatpush1.bf16.xpose.msra.mxu0 0
    %949 = vmatprep.subr.bf16.mxu0 0
    %950 = vmatpush1.bf16.xpose.msra.mxu0 0
    %951 = vmatprep.subr.bf16.mxu0 0
    %952 = vmatpush1.bf16.xpose.msra.mxu0 0
    %953 = vmatprep.subr.bf16.mxu0 0
    %954 = vmatpush1.bf16.xpose.msra.mxu0 0
    %955 = vmatprep.subr.bf16.mxu0 0
    %956 = vmatpush1.bf16.xpose.msra.mxu0 0
    %957 = vmatprep.subr.bf16.mxu0 0
    %958 = vmatpush1.bf16.xpose.msra.mxu0 0
    %959 = vmatprep.subr.bf16.mxu0 0
    %960 = vmatpush1.bf16.xpose.msra.mxu0 0
    %961 = vmatprep.mubr.bf16.mxu0 0
    %962 = vmatmul.mubr.bf16.gmra.mrb[0].mxu0 %v924
    %v963 = vpop.f32.mrb[0].mxu0
    %v964 = vadd.f32 0.0, %v963
    %v965 = vpop.f32.mrb[0].mxu0
    %v966 = vpop.f32.mrb[0].mxu0
    %v967 = vpop.f32.mrb[0].mxu0
    %968 = vdwg.mxu0
    %v970 = vsel %vm367, %v860, 0
    %v973 = vsel %vm367, %v888, 0
    %975 = vmatprep.subr.bf16.mxu0 0
    %976 = vmatpush1.bf16.xpose.msra.mxu0 %v973
    %977 = vmatprep.subr.bf16.mxu0 0
    %978 = vmatpush1.bf16.xpose.msra.mxu0 0
    %979 = vmatprep.subr.bf16.mxu0 0
    %980 = vmatpush1.bf16.xpose.msra.mxu0 0
    %981 = vmatprep.subr.bf16.mxu0 0
    %982 = vmatpush1.bf16.xpose.msra.mxu0 0
    %983 = vmatprep.subr.bf16.mxu0 0
    %984 = vmatpush1.bf16.xpose.msra.mxu0 0
    %985 = vmatprep.subr.bf16.mxu0 0
    %986 = vmatpush1.bf16.xpose.msra.mxu0 0
    %987 = vmatprep.subr.bf16.mxu0 0
    %988 = vmatpush1.bf16.xpose.msra.mxu0 0
    %989 = vmatprep.subr.bf16.mxu0 0
    %990 = vmatpush1.bf16.xpose.msra.mxu0 0
    %991 = vmatprep.subr.bf16.mxu0 0
    %992 = vmatpush1.bf16.xpose.msra.mxu0 0
    %993 = vmatprep.subr.bf16.mxu0 0
    %994 = vmatpush1.bf16.xpose.msra.mxu0 0
    %995 = vmatprep.subr.bf16.mxu0 0
    %996 = vmatpush1.bf16.xpose.msra.mxu0 0
    %997 = vmatprep.subr.bf16.mxu0 0
    %998 = vmatpush1.bf16.xpose.msra.mxu0 0
    %999 = vmatprep.subr.bf16.mxu0 0
    %1000 = vmatpush1.bf16.xpose.msra.mxu0 0
    %1001 = vmatprep.subr.bf16.mxu0 0
    %1002 = vmatpush1.bf16.xpose.msra.mxu0 0
    %1003 = vmatprep.subr.bf16.mxu0 0
    %1004 = vmatpush1.bf16.xpose.msra.mxu0 0
    %1005 = vmatprep.subr.bf16.mxu0 0
    %1006 = vmatpush1.bf16.xpose.msra.mxu0 0
    %1007 = vmatprep.mubr.bf16.mxu0 0
    %1008 = vmatmul.mubr.bf16.gmra.mrb[0].mxu0 %v970
    %v1009 = vpop.f32.mrb[0].mxu0
    %v1010 = vadd.f32 0.0, %v1009
    %v1011 = vpop.f32.mrb[0].mxu0
    %v1012 = vpop.f32.mrb[0].mxu0
    %v1013 = vpop.f32.mrb[0].mxu0
    %1014 = vdwg.mxu0
    %v1016 = vsel %vm367, %v861, 0
    %v1019 = vsel %vm367, %v889, 0
    %1021 = vmatprep.subr.bf16.mxu0 0
    %1022 = vmatpush1.bf16.xpose.msra.mxu0 %v1019
    %1023 = vmatprep.subr.bf16.mxu0 0
    %1024 = vmatpush1.bf16.xpose.msra.mxu0 0
    %1025 = vmatprep.subr.bf16.mxu0 0
    %1026 = vmatpush1.bf16.xpose.msra.mxu0 0
    %1027 = vmatprep.subr.bf16.mxu0 0
    %1028 = vmatpush1.bf16.xpose.msra.mxu0 0
    %1029 = vmatprep.subr.bf16.mxu0 0
    %1030 = vmatpush1.bf16.xpose.msra.mxu0 0
    %1031 = vmatprep.subr.bf16.mxu0 0
    %1032 = vmatpush1.bf16.xpose.msra.mxu0 0
    %1033 = vmatprep.subr.bf16.mxu0 0
    %1034 = vmatpush1.bf16.xpose.msra.mxu0 0
    %1035 = vmatprep.subr.bf16.mxu0 0
    %1036 = vmatpush1.bf16.xpose.msra.mxu0 0
    %1037 = vmatprep.subr.bf16.mxu0 0
    %1038 = vmatpush1.bf16.xpose.msra.mxu0 0
    %1039 = vmatprep.subr.bf16.mxu0 0
    %1040 = vmatpush1.bf16.xpose.msra.mxu0 0
    %1041 = vmatprep.subr.bf16.mxu0 0
    %1042 = vmatpush1.bf16.xpose.msra.mxu0 0
    %1043 = vmatprep.subr.bf16.mxu0 0
    %1044 = vmatpush1.bf16.xpose.msra.mxu0 0
    %1045 = vmatprep.subr.bf16.mxu0 0
    %1046 = vmatpush1.bf16.xpose.msra.mxu0 0
    %1047 = vmatprep.subr.bf16.mxu0 0
    %1048 = vmatpush1.bf16.xpose.msra.mxu0 0
    %1049 = vmatprep.subr.bf16.mxu0 0
    %1050 = vmatpush1.bf16.xpose.msra.mxu0 0
    %1051 = vmatprep.subr.bf16.mxu0 0
    %1052 = vmatpush1.bf16.xpose.msra.mxu0 0
    %1053 = vmatprep.mubr.bf16.mxu0 0
    %1054 = vmatmul.mubr.bf16.gmra.mrb[0].mxu0 %v1016
    %v1055 = vpop.f32.mrb[0].mxu0
    %v1056 = vadd.f32 0.0, %v1055
    %v1057 = vpop.f32.mrb[0].mxu0
    %v1058 = vpop.f32.mrb[0].mxu0
    %v1059 = vpop.f32.mrb[0].mxu0
    %1060 = vdwg.mxu0
    %v1062 = vsel %vm367, %v862, 0
    %v1065 = vsel %vm367, %v890, 0
    %1067 = vmatprep.subr.bf16.mxu0 0
    %1068 = vmatpush1.bf16.xpose.msra.mxu0 %v1065
    %1069 = vmatprep.subr.bf16.mxu0 0
    %1070 = vmatpush1.bf16.xpose.msra.mxu0 0
    %1071 = vmatprep.subr.bf16.mxu0 0
    %1072 = vmatpush1.bf16.xpose.msra.mxu0 0
    %1073 = vmatprep.subr.bf16.mxu0 0
    %1074 = vmatpush1.bf16.xpose.msra.mxu0 0
    %1075 = vmatprep.subr.bf16.mxu0 0
    %1076 = vmatpush1.bf16.xpose.msra.mxu0 0
    %1077 = vmatprep.subr.bf16.mxu0 0
    %1078 = vmatpush1.bf16.xpose.msra.mxu0 0
    %1079 = vmatprep.subr.bf16.mxu0 0
    %1080 = vmatpush1.bf16.xpose.msra.mxu0 0
    %1081 = vmatprep.subr.bf16.mxu0 0
    %1082 = vmatpush1.bf16.xpose.msra.mxu0 0
    %1083 = vmatprep.subr.bf16.mxu0 0
    %1084 = vmatpush1.bf16.xpose.msra.mxu0 0
    %1085 = vmatprep.subr.bf16.mxu0 0
    %1086 = vmatpush1.bf16.xpose.msra.mxu0 0
    %1087 = vmatprep.subr.bf16.mxu0 0
    %1088 = vmatpush1.bf16.xpose.msra.mxu0 0
    %1089 = vmatprep.subr.bf16.mxu0 0
    %1090 = vmatpush1.bf16.xpose.msra.mxu0 0
    %1091 = vmatprep.subr.bf16.mxu0 0
    %1092 = vmatpush1.bf16.xpose.msra.mxu0 0
    %1093 = vmatprep.subr.bf16.mxu0 0
    %1094 = vmatpush1.bf16.xpose.msra.mxu0 0
    %1095 = vmatprep.subr.bf16.mxu0 0
    %1096 = vmatpush1.bf16.xpose.msra.mxu0 0
    %1097 = vmatprep.subr.bf16.mxu0 0
    %1098 = vmatpush1.bf16.xpose.msra.mxu0 0
    %1099 = vmatprep.mubr.bf16.mxu0 0
    %1100 = vmatmul.mubr.bf16.gmra.mrb[0].mxu0 %v1062
    %v1101 = vpop.f32.mrb[0].mxu0
    %v1102 = vadd.f32 0.0, %v1101
    %v1103 = vpop.f32.mrb[0].mxu0
    %v1104 = vpop.f32.mrb[0].mxu0
    %v1105 = vpop.f32.mrb[0].mxu0
    %1106 = vdwg.mxu0
    %v1108 = vsel %vm367, %v863, 0
    %v1111 = vsel %vm367, %v891, 0
    %1113 = vmatprep.subr.bf16.mxu0 0
    %1114 = vmatpush1.bf16.xpose.msra.mxu0 %v1111
    %1115 = vmatprep.subr.bf16.mxu0 0
    %1116 = vmatpush1.bf16.xpose.msra.mxu0 0
    %1117 = vmatprep.subr.bf16.mxu0 0
    %1118 = vmatpush1.bf16.xpose.msra.mxu0 0
    %1119 = vmatprep.subr.bf16.mxu0 0
    %1120 = vmatpush1.bf16.xpose.msra.mxu0 0
    %1121 = vmatprep.subr.bf16.mxu0 0
    %1122 = vmatpush1.bf16.xpose.msra.mxu0 0
    %1123 = vmatprep.subr.bf16.mxu0 0
    %1124 = vmatpush1.bf16.xpose.msra.mxu0 0
    %1125 = vmatprep.subr.bf16.mxu0 0
    %1126 = vmatpush1.bf16.xpose.msra.mxu0 0
    %1127 = vmatprep.subr.bf16.mxu0 0
    %1128 = vmatpush1.bf16.xpose.msra.mxu0 0
    %1129 = vmatprep.subr.bf16.mxu0 0
    %1130 = vmatpush1.bf16.xpose.msra.mxu0 0
    %1131 = vmatprep.subr.bf16.mxu0 0
    %1132 = vmatpush1.bf16.xpose.msra.mxu0 0
    %1133 = vmatprep.subr.bf16.mxu0 0
    %1134 = vmatpush1.bf16.xpose.msra.mxu0 0
    %1135 = vmatprep.subr.bf16.mxu0 0
    %1136 = vmatpush1.bf16.xpose.msra.mxu0 0
    %1137 = vmatprep.subr.bf16.mxu0 0
    %1138 = vmatpush1.bf16.xpose.msra.mxu0 0
    %1139 = vmatprep.subr.bf16.mxu0 0
    %1140 = vmatpush1.bf16.xpose.msra.mxu0 0
    %1141 = vmatprep.subr.bf16.mxu0 0
    %1142 = vmatpush1.bf16.xpose.msra.mxu0 0
    %1143 = vmatprep.subr.bf16.mxu0 0
    %1144 = vmatpush1.bf16.xpose.msra.mxu0 0
    %1145 = vmatprep.mubr.bf16.mxu0 0
    %1146 = vmatmul.mubr.bf16.gmra.mrb[0].mxu0 %v1108
    %v1147 = vpop.f32.mrb[0].mxu0
    %v1148 = vadd.f32 0.0, %v1147
    %v1149 = vpop.f32.mrb[0].mxu0
    %v1150 = vpop.f32.mrb[0].mxu0
    %v1151 = vpop.f32.mrb[0].mxu0
    %1152 = vdwg.mxu0
    %v1154 = vsel %vm367, %v864, 0
    %v1157 = vsel %vm367, %v892, 0
    %1159 = vmatprep.subr.bf16.mxu0 0
    %1160 = vmatpush1.bf16.xpose.msra.mxu0 %v1157
    %1161 = vmatprep.subr.bf16.mxu0 0
    %1162 = vmatpush1.bf16.xpose.msra.mxu0 0
    %1163 = vmatprep.subr.bf16.mxu0 0
    %1164 = vmatpush1.bf16.xpose.msra.mxu0 0
    %1165 = vmatprep.subr.bf16.mxu0 0
    %1166 = vmatpush1.bf16.xpose.msra.mxu0 0
    %1167 = vmatprep.subr.bf16.mxu0 0
    %1168 = vmatpush1.bf16.xpose.msra.mxu0 0
    %1169 = vmatprep.subr.bf16.mxu0 0
    %1170 = vmatpush1.bf16.xpose.msra.mxu0 0
    %1171 = vmatprep.subr.bf16.mxu0 0
    %1172 = vmatpush1.bf16.xpose.msra.mxu0 0
    %1173 = vmatprep.subr.bf16.mxu0 0
    %1174 = vmatpush1.bf16.xpose.msra.mxu0 0
    %1175 = vmatprep.subr.bf16.mxu0 0
    %1176 = vmatpush1.bf16.xpose.msra.mxu0 0
    %1177 = vmatprep.subr.bf16.mxu0 0
    %1178 = vmatpush1.bf16.xpose.msra.mxu0 0
    %1179 = vmatprep.subr.bf16.mxu0 0
    %1180 = vmatpush1.bf16.xpose.msra.mxu0 0
    %1181 = vmatprep.subr.bf16.mxu0 0
    %1182 = vmatpush1.bf16.xpose.msra.mxu0 0
    %1183 = vmatprep.subr.bf16.mxu0 0
    %1184 = vmatpush1.bf16.xpose.msra.mxu0 0
    %1185 = vmatprep.subr.bf16.mxu0 0
    %1186 = vmatpush1.bf16.xpose.msra.mxu0 0
    %1187 = vmatprep.subr.bf16.mxu0 0
    %1188 = vmatpush1.bf16.xpose.msra.mxu0 0
    %1189 = vmatprep.subr.bf16.mxu0 0
    %1190 = vmatpush1.bf16.xpose.msra.mxu0 0
    %1191 = vmatprep.mubr.bf16.mxu0 0
    %1192 = vmatmul.mubr.bf16.gmra.mrb[0].mxu0 %v1154
    %v1193 = vpop.f32.mrb[0].mxu0
    %v1194 = vadd.f32 0.0, %v1193
    %v1195 = vpop.f32.mrb[0].mxu0
    %v1196 = vpop.f32.mrb[0].mxu0
    %v1197 = vpop.f32.mrb[0].mxu0
    %1198 = vdwg.mxu0
    %v1200 = vsel %vm367, %v865, 0
    %v1203 = vsel %vm367, %v893, 0
    %1205 = vmatprep.subr.bf16.mxu0 0
    %1206 = vmatpush1.bf16.xpose.msra.mxu0 %v1203
    %1207 = vmatprep.subr.bf16.mxu0 0
    %1208 = vmatpush1.bf16.xpose.msra.mxu0 0
    %1209 = vmatprep.subr.bf16.mxu0 0
    %1210 = vmatpush1.bf16.xpose.msra.mxu0 0
    %1211 = vmatprep.subr.bf16.mxu0 0
    %1212 = vmatpush1.bf16.xpose.msra.mxu0 0
    %1213 = vmatprep.subr.bf16.mxu0 0
    %1214 = vmatpush1.bf16.xpose.msra.mxu0 0
    %1215 = vmatprep.subr.bf16.mxu0 0
    %1216 = vmatpush1.bf16.xpose.msra.mxu0 0
    %1217 = vmatprep.subr.bf16.mxu0 0
    %1218 = vmatpush1.bf16.xpose.msra.mxu0 0
    %1219 = vmatprep.subr.bf16.mxu0 0
    %1220 = vmatpush1.bf16.xpose.msra.mxu0 0
    %1221 = vmatprep.subr.bf16.mxu0 0
    %1222 = vmatpush1.bf16.xpose.msra.mxu0 0
    %1223 = vmatprep.subr.bf16.mxu0 0
    %1224 = vmatpush1.bf16.xpose.msra.mxu0 0
    %1225 = vmatprep.subr.bf16.mxu0 0
    %1226 = vmatpush1.bf16.xpose.msra.mxu0 0
    %1227 = vmatprep.subr.bf16.mxu0 0
    %1228 = vmatpush1.bf16.xpose.msra.mxu0 0
    %1229 = vmatprep.subr.bf16.mxu0 0
    %1230 = vmatpush1.bf16.xpose.msra.mxu0 0
    %1231 = vmatprep.subr.bf16.mxu0 0
    %1232 = vmatpush1.bf16.xpose.msra.mxu0 0
    %1233 = vmatprep.subr.bf16.mxu0 0
    %1234 = vmatpush1.bf16.xpose.msra.mxu0 0
    %1235 = vmatprep.subr.bf16.mxu0 0
    %1236 = vmatpush1.bf16.xpose.msra.mxu0 0
    %1237 = vmatprep.mubr.bf16.mxu0 0
    %1238 = vmatmul.mubr.bf16.gmra.mrb[0].mxu0 %v1200
    %v1239 = vpop.f32.mrb[0].mxu0
    %v1240 = vadd.f32 0.0, %v1239
    %v1241 = vpop.f32.mrb[0].mxu0
    %v1242 = vpop.f32.mrb[0].mxu0
    %v1243 = vpop.f32.mrb[0].mxu0
    %1244 = vdwg.mxu0
    %v1246 = vsel %vm367, %v866, 0
    %v1249 = vsel %vm367, %v894, 0
    %1251 = vmatprep.subr.bf16.mxu0 0
    %1252 = vmatpush1.bf16.xpose.msra.mxu0 %v1249
    %1253 = vmatprep.subr.bf16.mxu0 0
    %1254 = vmatpush1.bf16.xpose.msra.mxu0 0
    %1255 = vmatprep.subr.bf16.mxu0 0
    %1256 = vmatpush1.bf16.xpose.msra.mxu0 0
    %1257 = vmatprep.subr.bf16.mxu0 0
    %1258 = vmatpush1.bf16.xpose.msra.mxu0 0
    %1259 = vmatprep.subr.bf16.mxu0 0
    %1260 = vmatpush1.bf16.xpose.msra.mxu0 0
    %1261 = vmatprep.subr.bf16.mxu0 0
    %1262 = vmatpush1.bf16.xpose.msra.mxu0 0
    %1263 = vmatprep.subr.bf16.mxu0 0
    %1264 = vmatpush1.bf16.xpose.msra.mxu0 0
    %1265 = vmatprep.subr.bf16.mxu0 0
    %1266 = vmatpush1.bf16.xpose.msra.mxu0 0
    %1267 = vmatprep.subr.bf16.mxu0 0
    %1268 = vmatpush1.bf16.xpose.msra.mxu0 0
    %1269 = vmatprep.subr.bf16.mxu0 0
    %1270 = vmatpush1.bf16.xpose.msra.mxu0 0
    %1271 = vmatprep.subr.bf16.mxu0 0
    %1272 = vmatpush1.bf16.xpose.msra.mxu0 0
    %1273 = vmatprep.subr.bf16.mxu0 0
    %1274 = vmatpush1.bf16.xpose.msra.mxu0 0
    %1275 = vmatprep.subr.bf16.mxu0 0
    %1276 = vmatpush1.bf16.xpose.msra.mxu0 0
    %1277 = vmatprep.subr.bf16.mxu0 0
    %1278 = vmatpush1.bf16.xpose.msra.mxu0 0
    %1279 = vmatprep.subr.bf16.mxu0 0
    %1280 = vmatpush1.bf16.xpose.msra.mxu0 0
    %1281 = vmatprep.subr.bf16.mxu0 0
    %1282 = vmatpush1.bf16.xpose.msra.mxu0 0
    %1283 = vmatprep.mubr.bf16.mxu0 0
    %1284 = vmatmul.mubr.bf16.gmra.mrb[0].mxu0 %v1246
    %v1285 = vpop.f32.mrb[0].mxu0
    %v1286 = vadd.f32 0.0, %v1285
    %v1287 = vpop.f32.mrb[0].mxu0
    %v1288 = vpop.f32.mrb[0].mxu0
    %v1289 = vpop.f32.mrb[0].mxu0
    %1290 = vdwg.mxu0
    %v1291 = vmul.f32 %v964, 0.17677669
    %v1292 = vmul.f32 %v1010, 0.17677669
    %v1293 = vmul.f32 %v1056, 0.17677669
    %v1294 = vmul.f32 %v1102, 0.17677669
    %v1295 = vmul.f32 %v1148, 0.17677669
    %v1296 = vmul.f32 %v1194, 0.17677669
    %v1297 = vmul.f32 %v1240, 0.17677669
    %v1298 = vmul.f32 %v1286, 0.17677669
    %v1299 = vlaneseq
    %v1300 = vshrl.u32 %v1299, 7
    %v1301 = vsub.s32 0, %v1300
    %v1302 = vrot.slane %v553, %v1301
    %v1303 = vlaneseq
    %v1304 = vshrl.u32 %v1303, 7
    %v1305 = vsub.s32 0, %v1304
    %v1306 = vrot.slane %v560, %v1305
    %v1309 = vadd.f32 %v1291, %v1302
    %v1310 = vadd.f32 %v1292, %v1306
    %v1311 = vadd.f32 %v1293, %v1302
    %v1312 = vadd.f32 %v1294, %v1306
    %v1313 = vadd.f32 %v1295, %v1302
    %v1314 = vadd.f32 %v1296, %v1306
    %v1315 = vadd.f32 %v1297, %v1302
    %v1316 = vadd.f32 %v1298, %v1306
    %vm1317 = vcmask 64512
    %v1318 = vsel %vm1317, %v1309, -inf
    %1319 = vmax.xlane.f32.xlu0 %v1318
    %v1320 = vpop.xlane.xlu0 %1319
    %v1321 = vsel %vm1317, %v1310, -inf
    %1322 = vmax.xlane.f32.xlu0 %v1321
    %v1323 = vpop.xlane.xlu0 %1322
    %v1324 = vsel %vm1317, %v1311, -inf
    %1325 = vmax.xlane.f32.xlu0 %v1324
    %v1326 = vpop.xlane.xlu0 %1325
    %v1327 = vsel %vm1317, %v1312, -inf
    %1328 = vmax.xlane.f32.xlu0 %v1327
    %v1329 = vpop.xlane.xlu0 %1328
    %v1330 = vsel %vm1317, %v1313, -inf
    %1331 = vmax.xlane.f32.xlu0 %v1330
    %v1332 = vpop.xlane.xlu0 %1331
    %v1333 = vsel %vm1317, %v1314, -inf
    %1334 = vmax.xlane.f32.xlu0 %v1333
    %v1335 = vpop.xlane.xlu0 %1334
    %v1336 = vsel %vm1317, %v1315, -inf
    %1337 = vmax.xlane.f32.xlu0 %v1336
    %v1338 = vpop.xlane.xlu0 %1337
    %v1339 = vsel %vm1317, %v1316, -inf
    %1340 = vmax.xlane.f32.xlu0 %v1339
    %v1341 = vpop.xlane.xlu0 %1340
    %v1342 = vsub.f32 %v1309, %v1320
    %v1343 = vsub.f32 %v1310, %v1323
    %v1344 = vsub.f32 %v1311, %v1326
    %v1345 = vsub.f32 %v1312, %v1329
    %v1346 = vsub.f32 %v1313, %v1332
    %v1347 = vsub.f32 %v1314, %v1335
    %v1348 = vsub.f32 %v1315, %v1338
    %v1349 = vsub.f32 %v1316, %v1341
    %v1350 = vmul.f32 %v1342, 1.442695
    %v1351 = vpow.pop %v1350
    %v1352 = vmul.f32 %v1343, 1.442695
    %v1353 = vpow.pop %v1352
    %v1354 = vmul.f32 %v1344, 1.442695
    %v1355 = vpow.pop %v1354
    %v1356 = vmul.f32 %v1345, 1.442695
    %v1357 = vpow.pop %v1356
    %v1358 = vmul.f32 %v1346, 1.442695
    %v1359 = vpow.pop %v1358
    %v1360 = vmul.f32 %v1347, 1.442695
    %v1361 = vpow.pop %v1360
    %v1362 = vmul.f32 %v1348, 1.442695
    %v1363 = vpow.pop %v1362
    %v1364 = vmul.f32 %v1349, 1.442695
    %v1365 = vpow.pop %v1364
    %v1366 = vsel %vm1317, %v1351, 0.0
    %1367 = vadd.xlane.f32.xlu0 %v1366
    %v1368 = vpop.xlane.xlu0 %1367
    %v1369 = vsel %vm1317, %v1353, 0.0
    %1370 = vadd.xlane.f32.xlu0 %v1369
    %v1371 = vpop.xlane.xlu0 %1370
    %v1372 = vsel %vm1317, %v1355, 0.0
    %1373 = vadd.xlane.f32.xlu0 %v1372
    %v1374 = vpop.xlane.xlu0 %1373
    %v1375 = vsel %vm1317, %v1357, 0.0
    %1376 = vadd.xlane.f32.xlu0 %v1375
    %v1377 = vpop.xlane.xlu0 %1376
    %v1378 = vsel %vm1317, %v1359, 0.0
    %1379 = vadd.xlane.f32.xlu0 %v1378
    %v1380 = vpop.xlane.xlu0 %1379
    %v1381 = vsel %vm1317, %v1361, 0.0
    %1382 = vadd.xlane.f32.xlu0 %v1381
    %v1383 = vpop.xlane.xlu0 %1382
    %v1384 = vsel %vm1317, %v1363, 0.0
    %1385 = vadd.xlane.f32.xlu0 %v1384
    %v1386 = vpop.xlane.xlu0 %1385
    %v1387 = vsel %vm1317, %v1365, 0.0
    %1388 = vadd.xlane.f32.xlu0 %v1387
    %v1389 = vpop.xlane.xlu0 %1388
    %v1390 = vrcp.pop %v1368
    %v1391 = vmul.f32 %v1351, %v1390
    %v1392 = vrcp.pop %v1371
    %v1393 = vmul.f32 %v1353, %v1392
    %v1394 = vrcp.pop %v1374
    %v1395 = vmul.f32 %v1355, %v1394
    %v1396 = vrcp.pop %v1377
    %v1397 = vmul.f32 %v1357, %v1396
    %v1398 = vrcp.pop %v1380
    %v1399 = vmul.f32 %v1359, %v1398
    %v1400 = vrcp.pop %v1383
    %v1401 = vmul.f32 %v1361, %v1400
    %v1402 = vrcp.pop %v1386
    %v1403 = vmul.f32 %v1363, %v1402
    %v1404 = vrcp.pop %v1389
    %v1405 = vmul.f32 %v1365, %v1404
    %v1406 = vpack.c.bf16 %v1391, %v1391
    %v1407 = vpack.c.bf16 %v1393, %v1393
    %v1408 = vpack.c.bf16 %v1395, %v1395
    %v1409 = vpack.c.bf16 %v1397, %v1397
    %v1410 = vpack.c.bf16 %v1399, %v1399
    %v1411 = vpack.c.bf16 %v1401, %v1401
    %v1412 = vpack.c.bf16 %v1403, %v1403
    %v1413 = vpack.c.bf16 %v1405, %v1405
    %v1415 = vsel %vm1317, %v1406, 0
    %vm1417 = vcmask 1043456
    %v1419 = vsel %vm1417, %v915, 0
    %1421 = vmatprep.subr.bf16.mxu0 0
    %1422 = vmatpush1.bf16.msra.mxu0 %v1419
    %1423 = vmatprep.subr.bf16.mxu0 0
    %1424 = vmatpush1.bf16.msra.mxu0 0
    %1425 = vmatprep.subr.bf16.mxu0 0
    %1426 = vmatpush1.bf16.msra.mxu0 0
    %1427 = vmatprep.subr.bf16.mxu0 0
    %1428 = vmatpush1.bf16.msra.mxu0 0
    %1429 = vmatprep.subr.bf16.mxu0 0
    %1430 = vmatpush1.bf16.msra.mxu0 0
    %1431 = vmatprep.subr.bf16.mxu0 0
    %1432 = vmatpush1.bf16.msra.mxu0 0
    %1433 = vmatprep.subr.bf16.mxu0 0
    %1434 = vmatpush1.bf16.msra.mxu0 0
    %1435 = vmatprep.subr.bf16.mxu0 0
    %1436 = vmatpush1.bf16.msra.mxu0 0
    %1437 = vmatprep.subr.bf16.mxu0 0
    %1438 = vmatpush1.bf16.msra.mxu0 0
    %1439 = vmatprep.subr.bf16.mxu0 0
    %1440 = vmatpush1.bf16.msra.mxu0 0
    %1441 = vmatprep.subr.bf16.mxu0 0
    %1442 = vmatpush1.bf16.msra.mxu0 0
    %1443 = vmatprep.subr.bf16.mxu0 0
    %1444 = vmatpush1.bf16.msra.mxu0 0
    %1445 = vmatprep.subr.bf16.mxu0 0
    %1446 = vmatpush1.bf16.msra.mxu0 0
    %1447 = vmatprep.subr.bf16.mxu0 0
    %1448 = vmatpush1.bf16.msra.mxu0 0
    %1449 = vmatprep.subr.bf16.mxu0 0
    %1450 = vmatpush1.bf16.msra.mxu0 0
    %1451 = vmatprep.subr.bf16.mxu0 0
    %1452 = vmatpush1.bf16.msra.mxu0 0
    %1453 = vmatprep.mubr.bf16.mxu0 0
    %1454 = vmatmul.mubr.bf16.gmra.mrb[0].mxu0 %v1415
    %v1455 = vpop.f32.mrb[0].mxu0
    %v1456 = vadd.f32 0.0, %v1455
    %v1457 = vpop.f32.mrb[0].mxu0
    %v1458 = vpop.f32.mrb[0].mxu0
    %v1459 = vpop.f32.mrb[0].mxu0
    %1460 = vdwg.mxu0
    %v1462 = vsel %vm1317, %v1407, 0
    %v1465 = vsel %vm1417, %v916, 0
    %1467 = vmatprep.subr.bf16.mxu0 0
    %1468 = vmatpush1.bf16.msra.mxu0 %v1465
    %1469 = vmatprep.subr.bf16.mxu0 0
    %1470 = vmatpush1.bf16.msra.mxu0 0
    %1471 = vmatprep.subr.bf16.mxu0 0
    %1472 = vmatpush1.bf16.msra.mxu0 0
    %1473 = vmatprep.subr.bf16.mxu0 0
    %1474 = vmatpush1.bf16.msra.mxu0 0
    %1475 = vmatprep.subr.bf16.mxu0 0
    %1476 = vmatpush1.bf16.msra.mxu0 0
    %1477 = vmatprep.subr.bf16.mxu0 0
    %1478 = vmatpush1.bf16.msra.mxu0 0
    %1479 = vmatprep.subr.bf16.mxu0 0
    %1480 = vmatpush1.bf16.msra.mxu0 0
    %1481 = vmatprep.subr.bf16.mxu0 0
    %1482 = vmatpush1.bf16.msra.mxu0 0
    %1483 = vmatprep.subr.bf16.mxu0 0
    %1484 = vmatpush1.bf16.msra.mxu0 0
    %1485 = vmatprep.subr.bf16.mxu0 0
    %1486 = vmatpush1.bf16.msra.mxu0 0
    %1487 = vmatprep.subr.bf16.mxu0 0
    %1488 = vmatpush1.bf16.msra.mxu0 0
    %1489 = vmatprep.subr.bf16.mxu0 0
    %1490 = vmatpush1.bf16.msra.mxu0 0
    %1491 = vmatprep.subr.bf16.mxu0 0
    %1492 = vmatpush1.bf16.msra.mxu0 0
    %1493 = vmatprep.subr.bf16.mxu0 0
    %1494 = vmatpush1.bf16.msra.mxu0 0
    %1495 = vmatprep.subr.bf16.mxu0 0
    %1496 = vmatpush1.bf16.msra.mxu0 0
    %1497 = vmatprep.subr.bf16.mxu0 0
    %1498 = vmatpush1.bf16.msra.mxu0 0
    %1499 = vmatprep.mubr.bf16.mxu0 0
    %1500 = vmatmul.mubr.bf16.gmra.mrb[0].mxu0 %v1462
    %v1501 = vpop.f32.mrb[0].mxu0
    %v1502 = vadd.f32 0.0, %v1501
    %v1503 = vpop.f32.mrb[0].mxu0
    %v1504 = vpop.f32.mrb[0].mxu0
    %v1505 = vpop.f32.mrb[0].mxu0
    %1506 = vdwg.mxu0
    %v1508 = vsel %vm1317, %v1408, 0
    %v1511 = vsel %vm1417, %v917, 0
    %1513 = vmatprep.subr.bf16.mxu0 0
    %1514 = vmatpush1.bf16.msra.mxu0 %v1511
    %1515 = vmatprep.subr.bf16.mxu0 0
    %1516 = vmatpush1.bf16.msra.mxu0 0
    %1517 = vmatprep.subr.bf16.mxu0 0
    %1518 = vmatpush1.bf16.msra.mxu0 0
    %1519 = vmatprep.subr.bf16.mxu0 0
    %1520 = vmatpush1.bf16.msra.mxu0 0
    %1521 = vmatprep.subr.bf16.mxu0 0
    %1522 = vmatpush1.bf16.msra.mxu0 0
    %1523 = vmatprep.subr.bf16.mxu0 0
    %1524 = vmatpush1.bf16.msra.mxu0 0
    %1525 = vmatprep.subr.bf16.mxu0 0
    %1526 = vmatpush1.bf16.msra.mxu0 0
    %1527 = vmatprep.subr.bf16.mxu0 0
    %1528 = vmatpush1.bf16.msra.mxu0 0
    %1529 = vmatprep.subr.bf16.mxu0 0
    %1530 = vmatpush1.bf16.msra.mxu0 0
    %1531 = vmatprep.subr.bf16.mxu0 0
    %1532 = vmatpush1.bf16.msra.mxu0 0
    %1533 = vmatprep.subr.bf16.mxu0 0
    %1534 = vmatpush1.bf16.msra.mxu0 0
    %1535 = vmatprep.subr.bf16.mxu0 0
    %1536 = vmatpush1.bf16.msra.mxu0 0
    %1537 = vmatprep.subr.bf16.mxu0 0
    %1538 = vmatpush1.bf16.msra.mxu0 0
    %1539 = vmatprep.subr.bf16.mxu0 0
    %1540 = vmatpush1.bf16.msra.mxu0 0
    %1541 = vmatprep.subr.bf16.mxu0 0
    %1542 = vmatpush1.bf16.msra.mxu0 0
    %1543 = vmatprep.subr.bf16.mxu0 0
    %1544 = vmatpush1.bf16.msra.mxu0 0
    %1545 = vmatprep.mubr.bf16.mxu0 0
    %1546 = vmatmul.mubr.bf16.gmra.mrb[0].mxu0 %v1508
    %v1547 = vpop.f32.mrb[0].mxu0
    %v1548 = vadd.f32 0.0, %v1547
    %v1549 = vpop.f32.mrb[0].mxu0
    %v1550 = vpop.f32.mrb[0].mxu0
    %v1551 = vpop.f32.mrb[0].mxu0
    %1552 = vdwg.mxu0
    %v1554 = vsel %vm1317, %v1409, 0
    %v1557 = vsel %vm1417, %v918, 0
    %1559 = vmatprep.subr.bf16.mxu0 0
    %1560 = vmatpush1.bf16.msra.mxu0 %v1557
    %1561 = vmatprep.subr.bf16.mxu0 0
    %1562 = vmatpush1.bf16.msra.mxu0 0
    %1563 = vmatprep.subr.bf16.mxu0 0
    %1564 = vmatpush1.bf16.msra.mxu0 0
    %1565 = vmatprep.subr.bf16.mxu0 0
    %1566 = vmatpush1.bf16.msra.mxu0 0
    %1567 = vmatprep.subr.bf16.mxu0 0
    %1568 = vmatpush1.bf16.msra.mxu0 0
    %1569 = vmatprep.subr.bf16.mxu0 0
    %1570 = vmatpush1.bf16.msra.mxu0 0
    %1571 = vmatprep.subr.bf16.mxu0 0
    %1572 = vmatpush1.bf16.msra.mxu0 0
    %1573 = vmatprep.subr.bf16.mxu0 0
    %1574 = vmatpush1.bf16.msra.mxu0 0
    %1575 = vmatprep.subr.bf16.mxu0 0
    %1576 = vmatpush1.bf16.msra.mxu0 0
    %1577 = vmatprep.subr.bf16.mxu0 0
    %1578 = vmatpush1.bf16.msra.mxu0 0
    %1579 = vmatprep.subr.bf16.mxu0 0
    %1580 = vmatpush1.bf16.msra.mxu0 0
    %1581 = vmatprep.subr.bf16.mxu0 0
    %1582 = vmatpush1.bf16.msra.mxu0 0
    %1583 = vmatprep.subr.bf16.mxu0 0
    %1584 = vmatpush1.bf16.msra.mxu0 0
    %1585 = vmatprep.subr.bf16.mxu0 0
    %1586 = vmatpush1.bf16.msra.mxu0 0
    %1587 = vmatprep.subr.bf16.mxu0 0
    %1588 = vmatpush1.bf16.msra.mxu0 0
    %1589 = vmatprep.subr.bf16.mxu0 0
    %1590 = vmatpush1.bf16.msra.mxu0 0
    %1591 = vmatprep.mubr.bf16.mxu0 0
    %1592 = vmatmul.mubr.bf16.gmra.mrb[0].mxu0 %v1554
    %v1593 = vpop.f32.mrb[0].mxu0
    %v1594 = vadd.f32 0.0, %v1593
    %v1595 = vpop.f32.mrb[0].mxu0
    %v1596 = vpop.f32.mrb[0].mxu0
    %v1597 = vpop.f32.mrb[0].mxu0
    %1598 = vdwg.mxu0
    %v1600 = vsel %vm1317, %v1410, 0
    %v1603 = vsel %vm1417, %v919, 0
    %1605 = vmatprep.subr.bf16.mxu0 0
    %1606 = vmatpush1.bf16.msra.mxu0 %v1603
    %1607 = vmatprep.subr.bf16.mxu0 0
    %1608 = vmatpush1.bf16.msra.mxu0 0
    %1609 = vmatprep.subr.bf16.mxu0 0
    %1610 = vmatpush1.bf16.msra.mxu0 0
    %1611 = vmatprep.subr.bf16.mxu0 0
    %1612 = vmatpush1.bf16.msra.mxu0 0
    %1613 = vmatprep.subr.bf16.mxu0 0
    %1614 = vmatpush1.bf16.msra.mxu0 0
    %1615 = vmatprep.subr.bf16.mxu0 0
    %1616 = vmatpush1.bf16.msra.mxu0 0
    %1617 = vmatprep.subr.bf16.mxu0 0
    %1618 = vmatpush1.bf16.msra.mxu0 0
    %1619 = vmatprep.subr.bf16.mxu0 0
    %1620 = vmatpush1.bf16.msra.mxu0 0
    %1621 = vmatprep.subr.bf16.mxu0 0
    %1622 = vmatpush1.bf16.msra.mxu0 0
    %1623 = vmatprep.subr.bf16.mxu0 0
    %1624 = vmatpush1.bf16.msra.mxu0 0
    %1625 = vmatprep.subr.bf16.mxu0 0
    %1626 = vmatpush1.bf16.msra.mxu0 0
    %1627 = vmatprep.subr.bf16.mxu0 0
    %1628 = vmatpush1.bf16.msra.mxu0 0
    %1629 = vmatprep.subr.bf16.mxu0 0
    %1630 = vmatpush1.bf16.msra.mxu0 0
    %1631 = vmatprep.subr.bf16.mxu0 0
    %1632 = vmatpush1.bf16.msra.mxu0 0
    %1633 = vmatprep.subr.bf16.mxu0 0
    %1634 = vmatpush1.bf16.msra.mxu0 0
    %1635 = vmatprep.subr.bf16.mxu0 0
    %1636 = vmatpush1.bf16.msra.mxu0 0
    %1637 = vmatprep.mubr.bf16.mxu0 0
    %1638 = vmatmul.mubr.bf16.gmra.mrb[0].mxu0 %v1600
    %v1639 = vpop.f32.mrb[0].mxu0
    %v1640 = vadd.f32 0.0, %v1639
    %v1641 = vpop.f32.mrb[0].mxu0
    %v1642 = vpop.f32.mrb[0].mxu0
    %v1643 = vpop.f32.mrb[0].mxu0
    %1644 = vdwg.mxu0
    %v1646 = vsel %vm1317, %v1411, 0
    %v1649 = vsel %vm1417, %v920, 0
    %1651 = vmatprep.subr.bf16.mxu0 0
    %1652 = vmatpush1.bf16.msra.mxu0 %v1649
    %1653 = vmatprep.subr.bf16.mxu0 0
    %1654 = vmatpush1.bf16.msra.mxu0 0
    %1655 = vmatprep.subr.bf16.mxu0 0
    %1656 = vmatpush1.bf16.msra.mxu0 0
    %1657 = vmatprep.subr.bf16.mxu0 0
    %1658 = vmatpush1.bf16.msra.mxu0 0
    %1659 = vmatprep.subr.bf16.mxu0 0
    %1660 = vmatpush1.bf16.msra.mxu0 0
    %1661 = vmatprep.subr.bf16.mxu0 0
    %1662 = vmatpush1.bf16.msra.mxu0 0
    %1663 = vmatprep.subr.bf16.mxu0 0
    %1664 = vmatpush1.bf16.msra.mxu0 0
    %1665 = vmatprep.subr.bf16.mxu0 0
    %1666 = vmatpush1.bf16.msra.mxu0 0
    %1667 = vmatprep.subr.bf16.mxu0 0
    %1668 = vmatpush1.bf16.msra.mxu0 0
    %1669 = vmatprep.subr.bf16.mxu0 0
    %1670 = vmatpush1.bf16.msra.mxu0 0
    %1671 = vmatprep.subr.bf16.mxu0 0
    %1672 = vmatpush1.bf16.msra.mxu0 0
    %1673 = vmatprep.subr.bf16.mxu0 0
    %1674 = vmatpush1.bf16.msra.mxu0 0
    %1675 = vmatprep.subr.bf16.mxu0 0
    %1676 = vmatpush1.bf16.msra.mxu0 0
    %1677 = vmatprep.subr.bf16.mxu0 0
    %1678 = vmatpush1.bf16.msra.mxu0 0
    %1679 = vmatprep.subr.bf16.mxu0 0
    %1680 = vmatpush1.bf16.msra.mxu0 0
    %1681 = vmatprep.subr.bf16.mxu0 0
    %1682 = vmatpush1.bf16.msra.mxu0 0
    %1683 = vmatprep.mubr.bf16.mxu0 0
    %1684 = vmatmul.mubr.bf16.gmra.mrb[0].mxu0 %v1646
    %v1685 = vpop.f32.mrb[0].mxu0
    %v1686 = vadd.f32 0.0, %v1685
    %v1687 = vpop.f32.mrb[0].mxu0
    %v1688 = vpop.f32.mrb[0].mxu0
    %v1689 = vpop.f32.mrb[0].mxu0
    %1690 = vdwg.mxu0
    %v1692 = vsel %vm1317, %v1412, 0
    %v1695 = vsel %vm1417, %v921, 0
    %1697 = vmatprep.subr.bf16.mxu0 0
    %1698 = vmatpush1.bf16.msra.mxu0 %v1695
    %1699 = vmatprep.subr.bf16.mxu0 0
    %1700 = vmatpush1.bf16.msra.mxu0 0
    %1701 = vmatprep.subr.bf16.mxu0 0
    %1702 = vmatpush1.bf16.msra.mxu0 0
    %1703 = vmatprep.subr.bf16.mxu0 0
    %1704 = vmatpush1.bf16.msra.mxu0 0
    %1705 = vmatprep.subr.bf16.mxu0 0
    %1706 = vmatpush1.bf16.msra.mxu0 0
    %1707 = vmatprep.subr.bf16.mxu0 0
    %1708 = vmatpush1.bf16.msra.mxu0 0
    %1709 = vmatprep.subr.bf16.mxu0 0
    %1710 = vmatpush1.bf16.msra.mxu0 0
    %1711 = vmatprep.subr.bf16.mxu0 0
    %1712 = vmatpush1.bf16.msra.mxu0 0
    %1713 = vmatprep.subr.bf16.mxu0 0
    %1714 = vmatpush1.bf16.msra.mxu0 0
    %1715 = vmatprep.subr.bf16.mxu0 0
    %1716 = vmatpush1.bf16.msra.mxu0 0
    %1717 = vmatprep.subr.bf16.mxu0 0
    %1718 = vmatpush1.bf16.msra.mxu0 0
    %1719 = vmatprep.subr.bf16.mxu0 0
    %1720 = vmatpush1.bf16.msra.mxu0 0
    %1721 = vmatprep.subr.bf16.mxu0 0
    %1722 = vmatpush1.bf16.msra.mxu0 0
    %1723 = vmatprep.subr.bf16.mxu0 0
    %1724 = vmatpush1.bf16.msra.mxu0 0
    %1725 = vmatprep.subr.bf16.mxu0 0
    %1726 = vmatpush1.bf16.msra.mxu0 0
    %1727 = vmatprep.subr.bf16.mxu0 0
    %1728 = vmatpush1.bf16.msra.mxu0 0
    %1729 = vmatprep.mubr.bf16.mxu0 0
    %1730 = vmatmul.mubr.bf16.gmra.mrb[0].mxu0 %v1692
    %v1731 = vpop.f32.mrb[0].mxu0
    %v1732 = vadd.f32 0.0, %v1731
    %v1733 = vpop.f32.mrb[0].mxu0
    %v1734 = vpop.f32.mrb[0].mxu0
    %v1735 = vpop.f32.mrb[0].mxu0
    %1736 = vdwg.mxu0
    %v1738 = vsel %vm1317, %v1413, 0
    %v1741 = vsel %vm1417, %v922, 0
    %1743 = vmatprep.subr.bf16.mxu0 0
    %1744 = vmatpush1.bf16.msra.mxu0 %v1741
    %1745 = vmatprep.subr.bf16.mxu0 0
    %1746 = vmatpush1.bf16.msra.mxu0 0
    %1747 = vmatprep.subr.bf16.mxu0 0
    %1748 = vmatpush1.bf16.msra.mxu0 0
    %1749 = vmatprep.subr.bf16.mxu0 0
    %1750 = vmatpush1.bf16.msra.mxu0 0
    %1751 = vmatprep.subr.bf16.mxu0 0
    %1752 = vmatpush1.bf16.msra.mxu0 0
    %1753 = vmatprep.subr.bf16.mxu0 0
    %1754 = vmatpush1.bf16.msra.mxu0 0
    %1755 = vmatprep.subr.bf16.mxu0 0
    %1756 = vmatpush1.bf16.msra.mxu0 0
    %1757 = vmatprep.subr.bf16.mxu0 0
    %1758 = vmatpush1.bf16.msra.mxu0 0
    %1759 = vmatprep.subr.bf16.mxu0 0
    %1760 = vmatpush1.bf16.msra.mxu0 0
    %1761 = vmatprep.subr.bf16.mxu0 0
    %1762 = vmatpush1.bf16.msra.mxu0 0
    %1763 = vmatprep.subr.bf16.mxu0 0
    %1764 = vmatpush1.bf16.msra.mxu0 0
    %1765 = vmatprep.subr.bf16.mxu0 0
    %1766 = vmatpush1.bf16.msra.mxu0 0
    %1767 = vmatprep.subr.bf16.mxu0 0
    %1768 = vmatpush1.bf16.msra.mxu0 0
    %1769 = vmatprep.subr.bf16.mxu0 0
    %1770 = vmatpush1.bf16.msra.mxu0 0
    %1771 = vmatprep.subr.bf16.mxu0 0
    %1772 = vmatpush1.bf16.msra.mxu0 0
    %1773 = vmatprep.subr.bf16.mxu0 0
    %1774 = vmatpush1.bf16.msra.mxu0 0
    %1775 = vmatprep.mubr.bf16.mxu0 0
    %1776 = vmatmul.mubr.bf16.gmra.mrb[0].mxu0 %v1738
    %v1777 = vpop.f32.mrb[0].mxu0
    %v1778 = vadd.f32 0.0, %v1777
    %v1779 = vpop.f32.mrb[0].mxu0
    %v1780 = vpop.f32.mrb[0].mxu0
    %v1781 = vpop.f32.mrb[0].mxu0
    %1782 = vdwg.mxu0
    %v1783 = vpack.c.bf16 %v1456, %v1456
    %v1784 = vpack.c.bf16 %v1502, %v1502
    %v1785 = vpack.c.bf16 %v1548, %v1548
    %v1786 = vpack.c.bf16 %v1594, %v1594
    %v1787 = vpack.c.bf16 %v1640, %v1640
    %v1788 = vpack.c.bf16 %v1686, %v1686
    %v1789 = vpack.c.bf16 %v1732, %v1732
    %v1790 = vpack.c.bf16 %v1778, %v1778
    %v1793 = vunpack.c.l.b16 %v1785
    %v1794 = vunpack.c.l.b16 %v1786
    %v1795 = vpack.c.b16 %v1794, %v1793
    %v1800 = vunpack.c.l.b16 %v565
    %v1801 = vunpack.c.l.b16 %v566
    %v1802 = vunpack.c.l.b16 %v567
    %v1803 = vunpack.c.l.b16 %v568
    %v1804 = vpack.c.b16 %v1801, %v1800
    %v1805 = vpack.c.b16 %v1803, %v1802
    %v1809 = vsel %vm367, %v1795, 0
    %1811 = vmatprep.subr.bf16.mxu0 0
    %1812 = vmatpush1.bf16.msra.mxu0 %v1804
    %1813 = vmatprep.subr.bf16.mxu0 0
    %1814 = vmatpush1.bf16.msra.mxu0 %v1805
    %1815 = vmatprep.subr.bf16.mxu0 0
    %1816 = vmatpush1.bf16.msra.mxu0 0
    %1817 = vmatprep.subr.bf16.mxu0 0
    %1818 = vmatpush1.bf16.msra.mxu0 0
    %1819 = vmatprep.subr.bf16.mxu0 0
    %1820 = vmatpush1.bf16.msra.mxu0 0
    %1821 = vmatprep.subr.bf16.mxu0 0
    %1822 = vmatpush1.bf16.msra.mxu0 0
    %1823 = vmatprep.subr.bf16.mxu0 0
    %1824 = vmatpush1.bf16.msra.mxu0 0
    %1825 = vmatprep.subr.bf16.mxu0 0
    %1826 = vmatpush1.bf16.msra.mxu0 0
    %1827 = vmatprep.subr.bf16.mxu0 0
    %1828 = vmatpush1.bf16.msra.mxu0 0
    %1829 = vmatprep.subr.bf16.mxu0 0
    %1830 = vmatpush1.bf16.msra.mxu0 0
    %1831 = vmatprep.subr.bf16.mxu0 0
    %1832 = vmatpush1.bf16.msra.mxu0 0
    %1833 = vmatprep.subr.bf16.mxu0 0
    %1834 = vmatpush1.bf16.msra.mxu0 0
    %1835 = vmatprep.subr.bf16.mxu0 0
    %1836 = vmatpush1.bf16.msra.mxu0 0
    %1837 = vmatprep.subr.bf16.mxu0 0
    %1838 = vmatpush1.bf16.msra.mxu0 0
    %1839 = vmatprep.subr.bf16.mxu0 0
    %1840 = vmatpush1.bf16.msra.mxu0 0
    %1841 = vmatprep.subr.bf16.mxu0 0
    %1842 = vmatpush1.bf16.msra.mxu0 0
    %1843 = vmatprep.mubr.bf16.mxu0 0
    %1844 = vmatmul.mubr.bf16.gmra.mrb[0].mxu0 %v1809
    %v1845 = vpop.f32.mrb[0].mxu0
    %v1846 = vadd.f32 0.0, %v1845
    %v1847 = vpop.f32.mrb[0].mxu0
    %v1848 = vpop.f32.mrb[0].mxu0
    %v1849 = vadd.f32 0.0, %v1848
    %v1850 = vpop.f32.mrb[0].mxu0
    %1851 = vdwg.mxu0
    %v1854 = vunpack.c.l.b16 %v1783
    %v1855 = vunpack.c.l.b16 %v1784
    %v1856 = vpack.c.b16 %v1855, %v1854
    %v1861 = vunpack.c.l.b16 %v561
    %v1862 = vunpack.c.l.b16 %v562
    %v1863 = vunpack.c.l.b16 %v563
    %v1864 = vunpack.c.l.b16 %v564
    %v1865 = vpack.c.b16 %v1862, %v1861
    %v1866 = vpack.c.b16 %v1864, %v1863
    %v1870 = vsel %vm367, %v1856, 0
    %1872 = vmatprep.subr.bf16.mxu0 0
    %1873 = vmatpush1.bf16.msra.mxu0 %v1865
    %1874 = vmatprep.subr.bf16.mxu0 0
    %1875 = vmatpush1.bf16.msra.mxu0 %v1866
    %1876 = vmatprep.subr.bf16.mxu0 0
    %1877 = vmatpush1.bf16.msra.mxu0 0
    %1878 = vmatprep.subr.bf16.mxu0 0
    %1879 = vmatpush1.bf16.msra.mxu0 0
    %1880 = vmatprep.subr.bf16.mxu0 0
    %1881 = vmatpush1.bf16.msra.mxu0 0
    %1882 = vmatprep.subr.bf16.mxu0 0
    %1883 = vmatpush1.bf16.msra.mxu0 0
    %1884 = vmatprep.subr.bf16.mxu0 0
    %1885 = vmatpush1.bf16.msra.mxu0 0
    %1886 = vmatprep.subr.bf16.mxu0 0
    %1887 = vmatpush1.bf16.msra.mxu0 0
    %1888 = vmatprep.subr.bf16.mxu0 0
    %1889 = vmatpush1.bf16.msra.mxu0 0
    %1890 = vmatprep.subr.bf16.mxu0 0
    %1891 = vmatpush1.bf16.msra.mxu0 0
    %1892 = vmatprep.subr.bf16.mxu0 0
    %1893 = vmatpush1.bf16.msra.mxu0 0
    %1894 = vmatprep.subr.bf16.mxu0 0
    %1895 = vmatpush1.bf16.msra.mxu0 0
    %1896 = vmatprep.subr.bf16.mxu0 0
    %1897 = vmatpush1.bf16.msra.mxu0 0
    %1898 = vmatprep.subr.bf16.mxu0 0
    %1899 = vmatpush1.bf16.msra.mxu0 0
    %1900 = vmatprep.subr.bf16.mxu0 0
    %1901 = vmatpush1.bf16.msra.mxu0 0
    %1902 = vmatprep.subr.bf16.mxu0 0
    %1903 = vmatpush1.bf16.msra.mxu0 0
    %1904 = vmatprep.mubr.bf16.mxu0 0
    %1905 = vmatmul.mubr.bf16.gmra.mrb[0].mxu0 %v1870
    %v1906 = vpop.f32.mrb[0].mxu0
    %v1907 = vadd.f32 %v1846, %v1906
    %v1908 = vpop.f32.mrb[0].mxu0
    %v1909 = vpop.f32.mrb[0].mxu0
    %v1910 = vadd.f32 %v1849, %v1909
    %v1911 = vpop.f32.mrb[0].mxu0
    %1912 = vdwg.mxu0
    %v1915 = vunpack.c.l.b16 %v1787
    %v1916 = vunpack.c.l.b16 %v1788
    %v1917 = vpack.c.b16 %v1916, %v1915
    %v1922 = vunpack.c.l.b16 %v569
    %v1923 = vunpack.c.l.b16 %v570
    %v1924 = vunpack.c.l.b16 %v571
    %v1925 = vunpack.c.l.b16 %v572
    %v1926 = vpack.c.b16 %v1923, %v1922
    %v1927 = vpack.c.b16 %v1925, %v1924
    %v1931 = vsel %vm367, %v1917, 0
    %1933 = vmatprep.subr.bf16.mxu0 0
    %1934 = vmatpush1.bf16.msra.mxu0 %v1926
    %1935 = vmatprep.subr.bf16.mxu0 0
    %1936 = vmatpush1.bf16.msra.mxu0 %v1927
    %1937 = vmatprep.subr.bf16.mxu0 0
    %1938 = vmatpush1.bf16.msra.mxu0 0
    %1939 = vmatprep.subr.bf16.mxu0 0
    %1940 = vmatpush1.bf16.msra.mxu0 0
    %1941 = vmatprep.subr.bf16.mxu0 0
    %1942 = vmatpush1.bf16.msra.mxu0 0
    %1943 = vmatprep.subr.bf16.mxu0 0
    %1944 = vmatpush1.bf16.msra.mxu0 0
    %1945 = vmatprep.subr.bf16.mxu0 0
    %1946 = vmatpush1.bf16.msra.mxu0 0
    %1947 = vmatprep.subr.bf16.mxu0 0
    %1948 = vmatpush1.bf16.msra.mxu0 0
    %1949 = vmatprep.subr.bf16.mxu0 0
    %1950 = vmatpush1.bf16.msra.mxu0 0
    %1951 = vmatprep.subr.bf16.mxu0 0
    %1952 = vmatpush1.bf16.msra.mxu0 0
    %1953 = vmatprep.subr.bf16.mxu0 0
    %1954 = vmatpush1.bf16.msra.mxu0 0
    %1955 = vmatprep.subr.bf16.mxu0 0
    %1956 = vmatpush1.bf16.msra.mxu0 0
    %1957 = vmatprep.subr.bf16.mxu0 0
    %1958 = vmatpush1.bf16.msra.mxu0 0
    %1959 = vmatprep.subr.bf16.mxu0 0
    %1960 = vmatpush1.bf16.msra.mxu0 0
    %1961 = vmatprep.subr.bf16.mxu0 0
    %1962 = vmatpush1.bf16.msra.mxu0 0
    %1963 = vmatprep.subr.bf16.mxu0 0
    %1964 = vmatpush1.bf16.msra.mxu0 0
    %1965 = vmatprep.mubr.bf16.mxu0 0
    %1966 = vmatmul.mubr.bf16.gmra.mrb[0].mxu0 %v1931
    %v1967 = vpop.f32.mrb[0].mxu0
    %v1968 = vadd.f32 0.0, %v1967
    %v1969 = vpop.f32.mrb[0].mxu0
    %v1970 = vpop.f32.mrb[0].mxu0
    %v1971 = vadd.f32 0.0, %v1970
    %v1972 = vpop.f32.mrb[0].mxu0
    %1973 = vdwg.mxu0
    %v1974 = vadd.f32 %v1907, %v1968
    %v1975 = vadd.f32 %v1910, %v1971
    %v1978 = vunpack.c.l.b16 %v1789
    %v1979 = vunpack.c.l.b16 %v1790
    %v1980 = vpack.c.b16 %v1979, %v1978
    %v1985 = vunpack.c.l.b16 %v573
    %v1986 = vunpack.c.l.b16 %v574
    %v1987 = vunpack.c.l.b16 %v575
    %v1988 = vunpack.c.l.b16 %v576
    %v1989 = vpack.c.b16 %v1986, %v1985
    %v1990 = vpack.c.b16 %v1988, %v1987
    %v1994 = vsel %vm367, %v1980, 0
    %1996 = vmatprep.subr.bf16.mxu0 0
    %1997 = vmatpush1.bf16.msra.mxu0 %v1989
    %1998 = vmatprep.subr.bf16.mxu0 0
    %1999 = vmatpush1.bf16.msra.mxu0 %v1990
    %2000 = vmatprep.subr.bf16.mxu0 0
    %2001 = vmatpush1.bf16.msra.mxu0 0
    %2002 = vmatprep.subr.bf16.mxu0 0
    %2003 = vmatpush1.bf16.msra.mxu0 0
    %2004 = vmatprep.subr.bf16.mxu0 0
    %2005 = vmatpush1.bf16.msra.mxu0 0
    %2006 = vmatprep.subr.bf16.mxu0 0
    %2007 = vmatpush1.bf16.msra.mxu0 0
    %2008 = vmatprep.subr.bf16.mxu0 0
    %2009 = vmatpush1.bf16.msra.mxu0 0
    %2010 = vmatprep.subr.bf16.mxu0 0
    %2011 = vmatpush1.bf16.msra.mxu0 0
    %2012 = vmatprep.subr.bf16.mxu0 0
    %2013 = vmatpush1.bf16.msra.mxu0 0
    %2014 = vmatprep.subr.bf16.mxu0 0
    %2015 = vmatpush1.bf16.msra.mxu0 0
    %2016 = vmatprep.subr.bf16.mxu0 0
    %2017 = vmatpush1.bf16.msra.mxu0 0
    %2018 = vmatprep.subr.bf16.mxu0 0
    %2019 = vmatpush1.bf16.msra.mxu0 0
    %2020 = vmatprep.subr.bf16.mxu0 0
    %2021 = vmatpush1.bf16.msra.mxu0 0
    %2022 = vmatprep.subr.bf16.mxu0 0
    %2023 = vmatpush1.bf16.msra.mxu0 0
    %2024 = vmatprep.subr.bf16.mxu0 0
    %2025 = vmatpush1.bf16.msra.mxu0 0
    %2026 = vmatprep.subr.bf16.mxu0 0
    %2027 = vmatpush1.bf16.msra.mxu0 0
    %2028 = vmatprep.mubr.bf16.mxu0 0
    %2029 = vmatmul.mubr.bf16.gmra.mrb[0].mxu0 %v1994
    %v2030 = vpop.f32.mrb[0].mxu0
    %v2031 = vadd.f32 0.0, %v2030
    %v2032 = vpop.f32.mrb[0].mxu0
    %v2033 = vpop.f32.mrb[0].mxu0
    %v2034 = vadd.f32 0.0, %v2033
    %v2035 = vpop.f32.mrb[0].mxu0
    %2036 = vdwg.mxu0
    %v2037 = vadd.f32 %v1974, %v2031
    %v2038 = vadd.f32 %v1975, %v2034
    %v2039 = vld [vmem:[#allocation13] sm:$0x1]
    %v2041 = vlaneseq
    %v2042 = vshrl.u32 %v2041, 7
    %v2043 = vsub.s32 0, %v2042
    %v2044 = vrot.slane %v2039, %v2043
    %v2046 = vadd.f32 %v2037, %v2044
    %v2047 = vadd.f32 %v2038, %v2044
    %v2048 = vadd.f32 %v2046, %v533
    %v2049 = vadd.f32 %v2047, %v534
    %v2050 = vld [vmem:[#allocation14] sm:$0x1]
    %v2051 = vld [vmem:[#allocation16] sm:$0x1]
    %2052 = vadd.xlane.f32.xlu0 %v2048
    %v2053 = vpop.xlane.xlu0 %2052
    %2054 = vadd.xlane.f32.xlu0 %v2049
    %v2055 = vpop.xlane.xlu0 %2054
    %v2056 = vmul.f32 %v2053, %v496
    %v2057 = vmul.f32 %v2055, %v496
    %v2058 = vmul.f32 %v2048, %v2048
    %v2059 = vmul.f32 %v2049, %v2049
    %2060 = vadd.xlane.f32.xlu0 %v2058
    %v2061 = vpop.xlane.xlu0 %2060
    %2062 = vadd.xlane.f32.xlu0 %v2059
    %v2063 = vpop.xlane.xlu0 %2062
    %v2064 = vmul.f32 %v2061, %v496
    %v2065 = vmul.f32 %v2063, %v496
    %v2066 = vmul.f32 %v2056, %v2056
    %v2067 = vmul.f32 %v2057, %v2057
    %v2068 = vsub.f32 %v2064, %v2066
    %v2069 = vsub.f32 %v2065, %v2067
    %v2070 = vsub.f32 %v2048, %v2056
    %v2071 = vsub.f32 %v2049, %v2057
    %v2072 = vadd.f32 %v2068, 1e-05
    %v2073 = vadd.f32 %v2069, 1e-05
    %v2074 = vrsqrt.pop %v2072
    %v2075 = vrsqrt.pop %v2073
    %v2076 = vmul.f32 %v2070, %v2074
    %v2077 = vmul.f32 %v2071, %v2075
    %v2079 = vlaneseq
    %v2080 = vshrl.u32 %v2079, 7
    %v2081 = vsub.s32 0, %v2080
    %v2082 = vrot.slane %v2050, %v2081
    %v2084 = vmul.f32 %v2076, %v2082
    %v2085 = vmul.f32 %v2077, %v2082
    %v2087 = vlaneseq
    %v2088 = vshrl.u32 %v2087, 7
    %v2089 = vsub.s32 0, %v2088
    %v2090 = vrot.slane %v2051, %v2089
    %v2092 = vadd.f32 %v2084, %v2090
    %v2093 = vadd.f32 %v2085, %v2090
    %v2094 = vpack.c.bf16 %v2093, %v2092
    %v2095 = vld [vmem:[#allocation17] sm:$0xff]
    %v2096 = vld [vmem:[#allocation17 + $0x8] sm:$0xff]
    %v2097 = vld [vmem:[#allocation17 + $0x10] sm:$0xff]
    %v2098 = vld [vmem:[#allocation17 + $0x18] sm:$0xff]
    %v2099 = vld [vmem:[#allocation17 + $0x20] sm:$0xff]
    %v2100 = vld [vmem:[#allocation17 + $0x28] sm:$0xff]
    %v2101 = vld [vmem:[#allocation17 + $0x30] sm:$0xff]
    %v2102 = vld [vmem:[#allocation17 + $0x38] sm:$0xff]
    %v2103 = vld [vmem:[#allocation17 + $0x40] sm:$0xff]
    %v2104 = vld [vmem:[#allocation17 + $0x48] sm:$0xff]
    %v2105 = vld [vmem:[#allocation17 + $0x50] sm:$0xff]
    %v2106 = vld [vmem:[#allocation17 + $0x58] sm:$0xff]
    %v2107 = vld [vmem:[#allocation17 + $0x60] sm:$0xff]
    %v2108 = vld [vmem:[#allocation17 + $0x68] sm:$0xff]
    %v2109 = vld [vmem:[#allocation17 + $0x70] sm:$0xff]
    %v2110 = vld [vmem:[#allocation17 + $0x78] sm:$0xff]
    %v2111 = vld [vmem:[#allocation19] sm:$0x3]
    %v2113 = vlaneseq
    %v2114 = vshrl.u32 %v2113, 7
    %v2115 = vsub.s32 0, %v2114
    %v2116 = vrot.slane %v2111, %v2115
    %v2117 = vlaneseq
    %v2118 = vshrl.u32 %v2117, 7
    %v2119 = vsub.s32 1, %v2118
    %v2120 = vrot.slane %v2111, %v2119
    %v2139 = vunpack.c.l.b16 %v2095
    %v2140 = vunpack.c.h.b16 %v2095
    %v2141 = vunpack.c.l.b16 %v2096
    %v2142 = vunpack.c.h.b16 %v2096
    %v2143 = vunpack.c.l.b16 %v2097
    %v2144 = vunpack.c.h.b16 %v2097
    %v2145 = vunpack.c.l.b16 %v2098
    %v2146 = vunpack.c.h.b16 %v2098
    %v2147 = vunpack.c.l.b16 %v2099
    %v2148 = vunpack.c.h.b16 %v2099
    %v2149 = vunpack.c.l.b16 %v2100
    %v2150 = vunpack.c.h.b16 %v2100
    %v2151 = vunpack.c.l.b16 %v2101
    %v2152 = vunpack.c.h.b16 %v2101
    %v2153 = vunpack.c.l.b16 %v2102
    %v2154 = vunpack.c.h.b16 %v2102
    %v2155 = vunpack.c.l.b16 %v2103
    %v2156 = vunpack.c.h.b16 %v2103
    %v2157 = vunpack.c.l.b16 %v2104
    %v2158 = vunpack.c.h.b16 %v2104
    %v2159 = vunpack.c.l.b16 %v2105
    %v2160 = vunpack.c.h.b16 %v2105
    %v2161 = vunpack.c.l.b16 %v2106
    %v2162 = vunpack.c.h.b16 %v2106
    %v2163 = vunpack.c.l.b16 %v2107
    %v2164 = vunpack.c.h.b16 %v2107
    %v2165 = vunpack.c.l.b16 %v2108
    %v2166 = vunpack.c.h.b16 %v2108
    %v2167 = vunpack.c.l.b16 %v2109
    %v2168 = vunpack.c.h.b16 %v2109
    %v2169 = vunpack.c.l.b16 %v2110
    %v2170 = vunpack.c.h.b16 %v2110
    %v2171 = vpack.c.b16 %v2141, %v2139
    %v2172 = vpack.c.b16 %v2142, %v2140
    %v2173 = vpack.c.b16 %v2145, %v2143
    %v2174 = vpack.c.b16 %v2146, %v2144
    %v2175 = vpack.c.b16 %v2149, %v2147
    %v2176 = vpack.c.b16 %v2150, %v2148
    %v2177 = vpack.c.b16 %v2153, %v2151
    %v2178 = vpack.c.b16 %v2154, %v2152
    %v2179 = vpack.c.b16 %v2157, %v2155
    %v2180 = vpack.c.b16 %v2158, %v2156
    %v2181 = vpack.c.b16 %v2161, %v2159
    %v2182 = vpack.c.b16 %v2162, %v2160
    %v2183 = vpack.c.b16 %v2165, %v2163
    %v2184 = vpack.c.b16 %v2166, %v2164
    %v2185 = vpack.c.b16 %v2169, %v2167
    %v2186 = vpack.c.b16 %v2170, %v2168
    %2203 = vmatprep.subr.bf16.mxu0 %v2172
    %2204 = vmatpush1.bf16.msra.mxu0 %v2171
    %2205 = vmatprep.subr.bf16.mxu0 %v2174
    %2206 = vmatpush1.bf16.msra.mxu0 %v2173
    %2207 = vmatprep.subr.bf16.mxu0 %v2176
    %2208 = vmatpush1.bf16.msra.mxu0 %v2175
    %2209 = vmatprep.subr.bf16.mxu0 %v2178
    %2210 = vmatpush1.bf16.msra.mxu0 %v2177
    %2211 = vmatprep.subr.bf16.mxu0 %v2180
    %2212 = vmatpush1.bf16.msra.mxu0 %v2179
    %2213 = vmatprep.subr.bf16.mxu0 %v2182
    %2214 = vmatpush1.bf16.msra.mxu0 %v2181
    %2215 = vmatprep.subr.bf16.mxu0 %v2184
    %2216 = vmatpush1.bf16.msra.mxu0 %v2183
    %2217 = vmatprep.subr.bf16.mxu0 %v2186
    %2218 = vmatpush1.bf16.msra.mxu0 %v2185
    %2219 = vmatprep.subr.bf16.mxu0 0
    %2220 = vmatpush1.bf16.msra.mxu0 0
    %2221 = vmatprep.subr.bf16.mxu0 0
    %2222 = vmatpush1.bf16.msra.mxu0 0
    %2223 = vmatprep.subr.bf16.mxu0 0
    %2224 = vmatpush1.bf16.msra.mxu0 0
    %2225 = vmatprep.subr.bf16.mxu0 0
    %2226 = vmatpush1.bf16.msra.mxu0 0
    %2227 = vmatprep.subr.bf16.mxu0 0
    %2228 = vmatpush1.bf16.msra.mxu0 0
    %2229 = vmatprep.subr.bf16.mxu0 0
    %2230 = vmatpush1.bf16.msra.mxu0 0
    %2231 = vmatprep.subr.bf16.mxu0 0
    %2232 = vmatpush1.bf16.msra.mxu0 0
    %2233 = vmatprep.subr.bf16.mxu0 0
    %2234 = vmatpush1.bf16.msra.mxu0 0
    %2235 = vmatprep.mubr.bf16.mxu0 0
    %2236 = vmatmul.mubr.bf16.gmra.mrb[0].mxu0 %v2094
    %v2237 = vpop.f32.mrb[0].mxu0
    %v2238 = vadd.f32 %v2116, %v2237
    %v2239 = vpop.f32.mrb[0].mxu0
    %v2240 = vadd.f32 %v2120, %v2239
    %v2241 = vpop.f32.mrb[0].mxu0
    %v2242 = vadd.f32 %v2116, %v2241
    %v2243 = vpop.f32.mrb[0].mxu0
    %v2244 = vadd.f32 %v2120, %v2243
    %2245 = vdwg.mxu0
    %v2246 = vmul.f32 %v2238, %v2238
    %v2247 = vmul.f32 %v2240, %v2240
    %v2248 = vmul.f32 %v2242, %v2242
    %v2249 = vmul.f32 %v2244, %v2244
    %v2250 = vmul.f32 %v2238, %v2246
    %v2251 = vmul.f32 %v2240, %v2247
    %v2252 = vmul.f32 %v2242, %v2248
    %v2253 = vmul.f32 %v2244, %v2249
    %v2254 = vmul.f32 %v2250, 0.044715
    %v2255 = vmul.f32 %v2251, 0.044715
    %v2256 = vmul.f32 %v2252, 0.044715
    %v2257 = vmul.f32 %v2253, 0.044715
    %v2258 = vadd.f32 %v2238, %v2254
    %v2259 = vadd.f32 %v2240, %v2255
    %v2260 = vadd.f32 %v2242, %v2256
    %v2261 = vadd.f32 %v2244, %v2257
    %v2262 = vmul.f32 %v2258, 0.7978846
    %v2263 = vmul.f32 %v2259, 0.7978846
    %v2264 = vmul.f32 %v2260, 0.7978846
    %v2265 = vmul.f32 %v2261, 0.7978846
    %v2266 = vtanh.pop %v2262
    %v2267 = vtanh.pop %v2263
    %v2268 = vtanh.pop %v2264
    %v2269 = vtanh.pop %v2265
    %v2270 = vadd.f32 %v2266, 1.0
    %v2271 = vadd.f32 %v2267, 1.0
    %v2272 = vadd.f32 %v2268, 1.0
    %v2273 = vadd.f32 %v2269, 1.0
    %v2274 = vmul.f32 %v2270, 0.5
    %v2275 = vmul.f32 %v2271, 0.5
    %v2276 = vmul.f32 %v2272, 0.5
    %v2277 = vmul.f32 %v2273, 0.5
    %v2278 = vmul.f32 %v2238, %v2274
    %v2279 = vmul.f32 %v2240, %v2275
    %v2280 = vmul.f32 %v2242, %v2276
    %v2281 = vmul.f32 %v2244, %v2277
    %v2282 = vpack.c.bf16 %v2280, %v2278
    %v2283 = vpack.c.bf16 %v2281, %v2279
    %v2284 = vld [vmem:[#allocation20] sm:$0xf]
    %v2285 = vld [vmem:[#allocation20 + $0x4] sm:$0xf]
    %v2286 = vld [vmem:[#allocation20 + $0x8] sm:$0xf]
    %v2287 = vld [vmem:[#allocation20 + $0xc] sm:$0xf]
    %v2288 = vld [vmem:[#allocation20 + $0x10] sm:$0xf]
    %v2289 = vld [vmem:[#allocation20 + $0x14] sm:$0xf]
    %v2290 = vld [vmem:[#allocation20 + $0x18] sm:$0xf]
    %v2291 = vld [vmem:[#allocation20 + $0x1c] sm:$0xf]
    %v2292 = vld [vmem:[#allocation20 + $0x20] sm:$0xf]
    %v2293 = vld [vmem:[#allocation20 + $0x24] sm:$0xf]
    %v2294 = vld [vmem:[#allocation20 + $0x28] sm:$0xf]
    %v2295 = vld [vmem:[#allocation20 + $0x2c] sm:$0xf]
    %v2296 = vld [vmem:[#allocation20 + $0x30] sm:$0xf]
    %v2297 = vld [vmem:[#allocation20 + $0x34] sm:$0xf]
    %v2298 = vld [vmem:[#allocation20 + $0x38] sm:$0xf]
    %v2299 = vld [vmem:[#allocation20 + $0x3c] sm:$0xf]
    %v2300 = vld [vmem:[#allocation20 + $0x40] sm:$0xf]
    %v2301 = vld [vmem:[#allocation20 + $0x44] sm:$0xf]
    %v2302 = vld [vmem:[#allocation20 + $0x48] sm:$0xf]
    %v2303 = vld [vmem:[#allocation20 + $0x4c] sm:$0xf]
    %v2304 = vld [vmem:[#allocation20 + $0x50] sm:$0xf]
    %v2305 = vld [vmem:[#allocation20 + $0x54] sm:$0xf]
    %v2306 = vld [vmem:[#allocation20 + $0x58] sm:$0xf]
    %v2307 = vld [vmem:[#allocation20 + $0x5c] sm:$0xf]
    %v2308 = vld [vmem:[#allocation20 + $0x60] sm:$0xf]
    %v2309 = vld [vmem:[#allocation20 + $0x64] sm:$0xf]
    %v2310 = vld [vmem:[#allocation20 + $0x68] sm:$0xf]
    %v2311 = vld [vmem:[#allocation20 + $0x6c] sm:$0xf]
    %v2312 = vld [vmem:[#allocation20 + $0x70] sm:$0xf]
    %v2313 = vld [vmem:[#allocation20 + $0x74] sm:$0xf]
    %v2314 = vld [vmem:[#allocation20 + $0x78] sm:$0xf]
    %v2315 = vld [vmem:[#allocation20 + $0x7c] sm:$0xf]
    %v2316 = vld [vmem:[#allocation22] sm:$0x1]
    %v2318 = vlaneseq
    %v2319 = vshrl.u32 %v2318, 7
    %v2320 = vsub.s32 0, %v2319
    %v2321 = vrot.slane %v2316, %v2320
    %v2355 = vunpack.c.l.b16 %v2284
    %v2356 = vunpack.c.l.b16 %v2285
    %v2357 = vunpack.c.l.b16 %v2286
    %v2358 = vunpack.c.l.b16 %v2287
    %v2359 = vunpack.c.l.b16 %v2288
    %v2360 = vunpack.c.l.b16 %v2289
    %v2361 = vunpack.c.l.b16 %v2290
    %v2362 = vunpack.c.l.b16 %v2291
    %v2363 = vunpack.c.l.b16 %v2292
    %v2364 = vunpack.c.l.b16 %v2293
    %v2365 = vunpack.c.l.b16 %v2294
    %v2366 = vunpack.c.l.b16 %v2295
    %v2367 = vunpack.c.l.b16 %v2296
    %v2368 = vunpack.c.l.b16 %v2297
    %v2369 = vunpack.c.l.b16 %v2298
    %v2370 = vunpack.c.l.b16 %v2299
    %v2371 = vunpack.c.l.b16 %v2300
    %v2372 = vunpack.c.l.b16 %v2301
    %v2373 = vunpack.c.l.b16 %v2302
    %v2374 = vunpack.c.l.b16 %v2303
    %v2375 = vunpack.c.l.b16 %v2304
    %v2376 = vunpack.c.l.b16 %v2305
    %v2377 = vunpack.c.l.b16 %v2306
    %v2378 = vunpack.c.l.b16 %v2307
    %v2379 = vunpack.c.l.b16 %v2308
    %v2380 = vunpack.c.l.b16 %v2309
    %v2381 = vunpack.c.l.b16 %v2310
    %v2382 = vunpack.c.l.b16 %v2311
    %v2383 = vunpack.c.l.b16 %v2312
    %v2384 = vunpack.c.l.b16 %v2313
    %v2385 = vunpack.c.l.b16 %v2314
    %v2386 = vunpack.c.l.b16 %v2315
    %v2387 = vpack.c.b16 %v2356, %v2355
    %v2388 = vpack.c.b16 %v2358, %v2357
    %v2389 = vpack.c.b16 %v2360, %v2359
    %v2390 = vpack.c.b16 %v2362, %v2361
    %v2391 = vpack.c.b16 %v2364, %v2363
    %v2392 = vpack.c.b16 %v2366, %v2365
    %v2393 = vpack.c.b16 %v2368, %v2367
    %v2394 = vpack.c.b16 %v2370, %v2369
    %v2395 = vpack.c.b16 %v2372, %v2371
    %v2396 = vpack.c.b16 %v2374, %v2373
    %v2397 = vpack.c.b16 %v2376, %v2375
    %v2398 = vpack.c.b16 %v2378, %v2377
    %v2399 = vpack.c.b16 %v2380, %v2379
    %v2400 = vpack.c.b16 %v2382, %v2381
    %v2401 = vpack.c.b16 %v2384, %v2383
    %v2402 = vpack.c.b16 %v2386, %v2385
    %2419 = vmatprep.subr.bf16.mxu0 0
    %2420 = vmatpush1.bf16.msra.mxu0 %v2387
    %2421 = vmatprep.subr.bf16.mxu0 0
    %2422 = vmatpush1.bf16.msra.mxu0 %v2388
    %2423 = vmatprep.subr.bf16.mxu0 0
    %2424 = vmatpush1.bf16.msra.mxu0 %v2389
    %2425 = vmatprep.subr.bf16.mxu0 0
    %2426 = vmatpush1.bf16.msra.mxu0 %v2390
    %2427 = vmatprep.subr.bf16.mxu0 0
    %2428 = vmatpush1.bf16.msra.mxu0 %v2391
    %2429 = vmatprep.subr.bf16.mxu0 0
    %2430 = vmatpush1.bf16.msra.mxu0 %v2392
    %2431 = vmatprep.subr.bf16.mxu0 0
    %2432 = vmatpush1.bf16.msra.mxu0 %v2393
    %2433 = vmatprep.subr.bf16.mxu0 0
    %2434 = vmatpush1.bf16.msra.mxu0 %v2394
    %2435 = vmatprep.subr.bf16.mxu0 0
    %2436 = vmatpush1.bf16.msra.mxu0 %v2395
    %2437 = vmatprep.subr.bf16.mxu0 0
    %2438 = vmatpush1.bf16.msra.mxu0 %v2396
    %2439 = vmatprep.subr.bf16.mxu0 0
    %2440 = vmatpush1.bf16.msra.mxu0 %v2397
    %2441 = vmatprep.subr.bf16.mxu0 0
    %2442 = vmatpush1.bf16.msra.mxu0 %v2398
    %2443 = vmatprep.subr.bf16.mxu0 0
    %2444 = vmatpush1.bf16.msra.mxu0 %v2399
    %2445 = vmatprep.subr.bf16.mxu0 0
    %2446 = vmatpush1.bf16.msra.mxu0 %v2400
    %2447 = vmatprep.subr.bf16.mxu0 0
    %2448 = vmatpush1.bf16.msra.mxu0 %v2401
    %2449 = vmatprep.subr.bf16.mxu0 0
    %2450 = vmatpush1.bf16.msra.mxu0 %v2402
    %2451 = vmatprep.mubr.bf16.mxu0 %v2283
    %2452 = vmatmul.mubr.bf16.gmra.mrb[0].mxu0 %v2282
    %v2453 = vpop.f32.mrb[0].mxu0
    %v2454 = vadd.f32 %v2321, %v2453
    %v2455 = vpop.f32.mrb[0].mxu0
    %v2456 = vpop.f32.mrb[0].mxu0
    %v2457 = vadd.f32 %v2321, %v2456
    %v2458 = vpop.f32.mrb[0].mxu0
    %2459 = vdwg.mxu0
    %v2460 = vadd.f32 %v2454, %v2092
    %v2461 = vadd.f32 %v2457, %v2093
    %v2462 = vld [vmem:[#allocation23] sm:$0x1]
    %v2463 = vld [vmem:[#allocation25] sm:$0x1]
    %2464 = vadd.xlane.f32.xlu0 %v2460
    %v2465 = vpop.xlane.xlu0 %2464
    %2466 = vadd.xlane.f32.xlu0 %v2461
    %v2467 = vpop.xlane.xlu0 %2466
    %v2468 = vmul.f32 %v2465, %v496
    %v2469 = vmul.f32 %v2467, %v496
    %v2470 = vmul.f32 %v2460, %v2460
    %v2471 = vmul.f32 %v2461, %v2461
    %2472 = vadd.xlane.f32.xlu0 %v2470
    %v2473 = vpop.xlane.xlu0 %2472
    %2474 = vadd.xlane.f32.xlu0 %v2471
    %v2475 = vpop.xlane.xlu0 %2474
    %v2476 = vmul.f32 %v2473, %v496
    %v2477 = vmul.f32 %v2475, %v496
    %v2478 = vmul.f32 %v2468, %v2468
    %v2479 = vmul.f32 %v2469, %v2469
    %v2480 = vsub.f32 %v2476, %v2478
    %v2481 = vsub.f32 %v2477, %v2479
    %v2482 = vsub.f32 %v2460, %v2468
    %v2483 = vsub.f32 %v2461, %v2469
    %v2484 = vadd.f32 %v2480, 1e-05
    %v2485 = vadd.f32 %v2481, 1e-05
    %v2486 = vrsqrt.pop %v2484
    %v2487 = vrsqrt.pop %v2485
    %v2488 = vmul.f32 %v2482, %v2486
    %v2489 = vmul.f32 %v2483, %v2487
    %v2491 = vlaneseq
    %v2492 = vshrl.u32 %v2491, 7
    %v2493 = vsub.s32 0, %v2492
    %v2494 = vrot.slane %v2462, %v2493
    %v2496 = vmul.f32 %v2488, %v2494
    %v2497 = vmul.f32 %v2489, %v2494
    %v2499 = vlaneseq
    %v2500 = vshrl.u32 %v2499, 7
    %v2501 = vsub.s32 0, %v2500
    %v2502 = vrot.slane %v2463, %v2501
    %v2504 = vadd.f32 %v2496, %v2502
    %v2505 = vadd.f32 %v2497, %v2502
    %s2506 = scalar_lea.vmem [#allocation11], 64
    %v2507 = vld [vmem:[%s2506] sm:$0xf]
    %v2508 = vld [vmem:[%s2506 + $0x4] sm:$0xf]
    %v2509 = vld [vmem:[%s2506 + $0x8] sm:$0xf]
    %v2510 = vld [vmem:[%s2506 + $0xc] sm:$0xf]
    %v2511 = vld [vmem:[%s2506 + $0x10] sm:$0xf]
    %v2512 = vld [vmem:[%s2506 + $0x14] sm:$0xf]
    %v2513 = vld [vmem:[%s2506 + $0x18] sm:$0xf]
    %v2514 = vld [vmem:[%s2506 + $0x1c] sm:$0xf]
    %v2515 = vld [vmem:[%s2506 + $0x20] sm:$0xf]
    %v2516 = vld [vmem:[%s2506 + $0x24] sm:$0xf]
    %v2517 = vld [vmem:[%s2506 + $0x28] sm:$0xf]
    %v2518 = vld [vmem:[%s2506 + $0x2c] sm:$0xf]
    %v2519 = vld [vmem:[%s2506 + $0x30] sm:$0xf]
    %v2520 = vld [vmem:[%s2506 + $0x34] sm:$0xf]
    %v2521 = vld [vmem:[%s2506 + $0x38] sm:$0xf]
    %v2522 = vld [vmem:[%s2506 + $0x3c] sm:$0xf]
    %v2523 = vpack.c.bf16 %v2505, %v2504
    %s2524 = scalar_lea.vmem [#allocation8], 192
    %v2525 = vld [vmem:[%s2524] sm:$0xff]
    %v2526 = vld [vmem:[%s2524 + $0x8] sm:$0xf]
    %v2527 = vld [vmem:[%s2524 + $0xc] sm:$0xff]
    %v2528 = vld [vmem:[%s2524 + $0x14] sm:$0xf]
    %v2529 = vld [vmem:[%s2524 + $0x18] sm:$0xff]
    %v2530 = vld [vmem:[%s2524 + $0x20] sm:$0xf]
    %v2531 = vld [vmem:[%s2524 + $0x24] sm:$0xff]
    %v2532 = vld [vmem:[%s2524 + $0x2c] sm:$0xf]
    %v2533 = vld [vmem:[%s2524 + $0x30] sm:$0xff]
    %v2534 = vld [vmem:[%s2524 + $0x38] sm:$0xf]
    %v2535 = vld [vmem:[%s2524 + $0x3c] sm:$0xff]
    %v2536 = vld [vmem:[%s2524 + $0x44] sm:$0xf]
    %v2537 = vld [vmem:[%s2524 + $0x48] sm:$0xff]
    %v2538 = vld [vmem:[%s2524 + $0x50] sm:$0xf]
    %v2539 = vld [vmem:[%s2524 + $0x54] sm:$0xff]
    %v2540 = vld [vmem:[%s2524 + $0x5c] sm:$0xf]
    %v2541 = vld [vmem:[%s2524 + $0x60] sm:$0xff]
    %v2542 = vld [vmem:[%s2524 + $0x68] sm:$0xf]
    %v2543 = vld [vmem:[%s2524 + $0x6c] sm:$0xff]
    %v2544 = vld [vmem:[%s2524 + $0x74] sm:$0xf]
    %v2545 = vld [vmem:[%s2524 + $0x78] sm:$0xff]
    %v2546 = vld [vmem:[%s2524 + $0x80] sm:$0xf]
    %v2547 = vld [vmem:[%s2524 + $0x84] sm:$0xff]
    %v2548 = vld [vmem:[%s2524 + $0x8c] sm:$0xf]
    %v2549 = vld [vmem:[%s2524 + $0x90] sm:$0xff]
    %v2550 = vld [vmem:[%s2524 + $0x98] sm:$0xf]
    %v2551 = vld [vmem:[%s2524 + $0x9c] sm:$0xff]
    %v2552 = vld [vmem:[%s2524 + $0xa4] sm:$0xf]
    %v2553 = vld [vmem:[%s2524 + $0xa8] sm:$0xff]
    %v2554 = vld [vmem:[%s2524 + $0xb0] sm:$0xf]
    %v2555 = vld [vmem:[%s2524 + $0xb4] sm:$0xff]
    %v2556 = vld [vmem:[%s2524 + $0xbc] sm:$0xf]
    %s2557 = scalar_lea.vmem [#allocation10], 3
    %v2558 = vld [vmem:[%s2557] sm:$0x7]
    %v2560 = vlaneseq
    %v2561 = vshrl.u32 %v2560, 7
    %v2562 = vsub.s32 0, %v2561
    %v2563 = vrot.slane %v2558, %v2562
    %v2564 = vlaneseq
    %v2565 = vshrl.u32 %v2564, 7
    %v2566 = vsub.s32 1, %v2565
    %v2567 = vrot.slane %v2558, %v2566
    %v2568 = vlaneseq
    %v2569 = vshrl.u32 %v2568, 7
    %v2570 = vsub.s32 2, %v2569
    %v2571 = vrot.slane %v2558, %v2570
    %v2607 = vunpack.c.l.b16 %v2525
    %v2608 = vunpack.c.h.b16 %v2525
    %v2609 = vunpack.c.l.b16 %v2526
    %v2610 = vunpack.c.l.b16 %v2527
    %v2611 = vunpack.c.h.b16 %v2527
    %v2612 = vunpack.c.l.b16 %v2528
    %v2613 = vunpack.c.l.b16 %v2529
    %v2614 = vunpack.c.h.b16 %v2529
    %v2615 = vunpack.c.l.b16 %v2530
    %v2616 = vunpack.c.l.b16 %v2531
    %v2617 = vunpack.c.h.b16 %v2531
    %v2618 = vunpack.c.l.b16 %v2532
    %v2619 = vunpack.c.l.b16 %v2533
    %v2620 = vunpack.c.h.b16 %v2533
    %v2621 = vunpack.c.l.b16 %v2534
    %v2622 = vunpack.c.l.b16 %v2535
    %v2623 = vunpack.c.h.b16 %v2535
    %v2624 = vunpack.c.l.b16 %v2536
    %v2625 = vunpack.c.l.b16 %v2537
    %v2626 = vunpack.c.h.b16 %v2537
    %v2627 = vunpack.c.l.b16 %v2538
    %v2628 = vunpack.c.l.b16 %v2539
    %v2629 = vunpack.c.h.b16 %v2539
    %v2630 = vunpack.c.l.b16 %v2540
    %v2631 = vunpack.c.l.b16 %v2541
    %v2632 = vunpack.c.h.b16 %v2541
    %v2633 = vunpack.c.l.b16 %v2542
    %v2634 = vunpack.c.l.b16 %v2543
    %v2635 = vunpack.c.h.b16 %v2543
    %v2636 = vunpack.c.l.b16 %v2544
    %v2637 = vunpack.c.l.b16 %v2545
    %v2638 = vunpack.c.h.b16 %v2545
    %v2639 = vunpack.c.l.b16 %v2546
    %v2640 = vunpack.c.l.b16 %v2547
    %v2641 = vunpack.c.h.b16 %v2547
    %v2642 = vunpack.c.l.b16 %v2548
    %v2643 = vunpack.c.l.b16 %v2549
    %v2644 = vunpack.c.h.b16 %v2549
    %v2645 = vunpack.c.l.b16 %v2550
    %v2646 = vunpack.c.l.b16 %v2551
    %v2647 = vunpack.c.h.b16 %v2551
    %v2648 = vunpack.c.l.b16 %v2552
    %v2649 = vunpack.c.l.b16 %v2553
    %v2650 = vunpack.c.h.b16 %v2553
    %v2651 = vunpack.c.l.b16 %v2554
    %v2652 = vunpack.c.l.b16 %v2555
    %v2653 = vunpack.c.h.b16 %v2555
    %v2654 = vunpack.c.l.b16 %v2556
    %v2655 = vpack.c.b16 %v2610, %v2607
    %v2656 = vpack.c.b16 %v2611, %v2608
    %v2657 = vpack.c.b16 %v2612, %v2609
    %v2658 = vpack.c.b16 %v2616, %v2613
    %v2659 = vpack.c.b16 %v2617, %v2614
    %v2660 = vpack.c.b16 %v2618, %v2615
    %v2661 = vpack.c.b16 %v2622, %v2619
    %v2662 = vpack.c.b16 %v2623, %v2620
    %v2663 = vpack.c.b16 %v2624, %v2621
    %v2664 = vpack.c.b16 %v2628, %v2625
    %v2665 = vpack.c.b16 %v2629, %v2626
    %v2666 = vpack.c.b16 %v2630, %v2627
    %v2667 = vpack.c.b16 %v2634, %v2631
    %v2668 = vpack.c.b16 %v2635, %v2632
    %v2669 = vpack.c.b16 %v2636, %v2633
    %v2670 = vpack.c.b16 %v2640, %v2637
    %v2671 = vpack.c.b16 %v2641, %v2638
    %v2672 = vpack.c.b16 %v2642, %v2639
    %v2673 = vpack.c.b16 %v2646, %v2643
    %v2674 = vpack.c.b16 %v2647, %v2644
    %v2675 = vpack.c.b16 %v2648, %v2645
    %v2676 = vpack.c.b16 %v2652, %v2649
    %v2677 = vpack.c.b16 %v2653, %v2650
    %v2678 = vpack.c.b16 %v2654, %v2651
    %2703 = vmatprep.subr.bf16.mxu0 %v2656
    %2704 = vmatpush1.bf16.msra.mxu0 %v2655
    %2705 = vmatprep.subr.bf16.mxu0 %v2659
    %2706 = vmatpush1.bf16.msra.mxu0 %v2658
    %2707 = vmatprep.subr.bf16.mxu0 %v2662
    %2708 = vmatpush1.bf16.msra.mxu0 %v2661
    %2709 = vmatprep.subr.bf16.mxu0 %v2665
    %2710 = vmatpush1.bf16.msra.mxu0 %v2664
    %2711 = vmatprep.subr.bf16.mxu0 %v2668
    %2712 = vmatpush1.bf16.msra.mxu0 %v2667
    %2713 = vmatprep.subr.bf16.mxu0 %v2671
    %2714 = vmatpush1.bf16.msra.mxu0 %v2670
    %2715 = vmatprep.subr.bf16.mxu0 %v2674
    %2716 = vmatpush1.bf16.msra.mxu0 %v2673
    %2717 = vmatprep.subr.bf16.mxu0 %v2677
    %2718 = vmatpush1.bf16.msra.mxu0 %v2676
    %2719 = vmatprep.subr.bf16.mxu0 0
    %2720 = vmatpush1.bf16.msra.mxu0 0
    %2721 = vmatprep.subr.bf16.mxu0 0
    %2722 = vmatpush1.bf16.msra.mxu0 0
    %2723 = vmatprep.subr.bf16.mxu0 0
    %2724 = vmatpush1.bf16.msra.mxu0 0
    %2725 = vmatprep.subr.bf16.mxu0 0
    %2726 = vmatpush1.bf16.msra.mxu0 0
    %2727 = vmatprep.subr.bf16.mxu0 0
    %2728 = vmatpush1.bf16.msra.mxu0 0
    %2729 = vmatprep.subr.bf16.mxu0 0
    %2730 = vmatpush1.bf16.msra.mxu0 0
    %2731 = vmatprep.subr.bf16.mxu0 0
    %2732 = vmatpush1.bf16.msra.mxu0 0
    %2733 = vmatprep.subr.bf16.mxu0 0
    %2734 = vmatpush1.bf16.msra.mxu0 0
    %2735 = vmatprep.mubr.bf16.mxu0 0
    %2736 = vmatmul.mubr.bf16.gmra.mrb[0].mxu0 %v2523
    %v2737 = vpop.f32.mrb[0].mxu0
    %v2738 = vadd.f32 %v2563, %v2737
    %v2739 = vpop.f32.mrb[0].mxu0
    %v2740 = vadd.f32 %v2567, %v2739
    %v2741 = vpop.f32.mrb[0].mxu0
    %v2742 = vadd.f32 %v2563, %v2741
    %v2743 = vpop.f32.mrb[0].mxu0
    %v2744 = vadd.f32 %v2567, %v2743
    %2745 = vdwg.mxu0
    %2746 = vmatprep.subr.bf16.mxu0 0
    %2747 = vmatpush1.bf16.msra.mxu0 %v2657
    %2748 = vmatprep.subr.bf16.mxu0 0
    %2749 = vmatpush1.bf16.msra.mxu0 %v2660
    %2750 = vmatprep.subr.bf16.mxu0 0
    %2751 = vmatpush1.bf16.msra.mxu0 %v2663
    %2752 = vmatprep.subr.bf16.mxu0 0
    %2753 = vmatpush1.bf16.msra.mxu0 %v2666
    %2754 = vmatprep.subr.bf16.mxu0 0
    %2755 = vmatpush1.bf16.msra.mxu0 %v2669
    %2756 = vmatprep.subr.bf16.mxu0 0
    %2757 = vmatpush1.bf16.msra.mxu0 %v2672
    %2758 = vmatprep.subr.bf16.mxu0 0
    %2759 = vmatpush1.bf16.msra.mxu0 %v2675
    %2760 = vmatprep.subr.bf16.mxu0 0
    %2761 = vmatpush1.bf16.msra.mxu0 %v2678
    %2762 = vmatprep.subr.bf16.mxu0 0
    %2763 = vmatpush1.bf16.msra.mxu0 0
    %2764 = vmatprep.subr.bf16.mxu0 0
    %2765 = vmatpush1.bf16.msra.mxu0 0
    %2766 = vmatprep.subr.bf16.mxu0 0
    %2767 = vmatpush1.bf16.msra.mxu0 0
    %2768 = vmatprep.subr.bf16.mxu0 0
    %2769 = vmatpush1.bf16.msra.mxu0 0
    %2770 = vmatprep.subr.bf16.mxu0 0
    %2771 = vmatpush1.bf16.msra.mxu0 0
    %2772 = vmatprep.subr.bf16.mxu0 0
    %2773 = vmatpush1.bf16.msra.mxu0 0
    %2774 = vmatprep.subr.bf16.mxu0 0
    %2775 = vmatpush1.bf16.msra.mxu0 0
    %2776 = vmatprep.subr.bf16.mxu0 0
    %2777 = vmatpush1.bf16.msra.mxu0 0
    %2778 = vmatprep.mubr.bf16.mxu0 0
    %2779 = vmatmul.mubr.bf16.gmra.mrb[0].mxu0 %v2523
    %v2780 = vpop.f32.mrb[0].mxu0
    %v2781 = vadd.f32 %v2571, %v2780
    %v2782 = vpop.f32.mrb[0].mxu0
    %v2783 = vpop.f32.mrb[0].mxu0
    %v2784 = vadd.f32 %v2571, %v2783
    %v2785 = vpop.f32.mrb[0].mxu0
    %2786 = vdwg.mxu0
    %2789 = vrot.lane.b32.xlu0 %v2738, 96
    %v2790 = vpop.permute.xlu0 %2789
    %2791 = vrot.lane.b32.xlu0 %v2742, 96
    %v2792 = vpop.permute.xlu0 %2791
    %2795 = vrot.lane.b32.xlu0 %v2738, 64
    %v2796 = vpop.permute.xlu0 %2795
    %2797 = vrot.lane.b32.xlu0 %v2742, 64
    %v2798 = vpop.permute.xlu0 %2797
    %2801 = vrot.lane.b32.xlu0 %v2738, 32
    %v2802 = vpop.permute.xlu0 %2801
    %2803 = vrot.lane.b32.xlu0 %v2742, 32
    %v2804 = vpop.permute.xlu0 %2803
    %v2807 = vpack.c.bf16 %v2738, %v2738
    %v2808 = vpack.c.bf16 %v2742, %v2742
    %v2809 = vpack.c.bf16 %v2790, %v2790
    %v2810 = vpack.c.bf16 %v2792, %v2792
    %v2811 = vpack.c.bf16 %v2796, %v2796
    %v2812 = vpack.c.bf16 %v2798, %v2798
    %v2813 = vpack.c.bf16 %v2802, %v2802
    %v2814 = vpack.c.bf16 %v2804, %v2804
    %2817 = vrot.lane.b32.xlu0 %v2740, 96
    %v2818 = vpop.permute.xlu0 %2817
    %2819 = vrot.lane.b32.xlu0 %v2744, 96
    %v2820 = vpop.permute.xlu0 %2819
    %2823 = vrot.lane.b32.xlu0 %v2740, 64
    %v2824 = vpop.permute.xlu0 %2823
    %2825 = vrot.lane.b32.xlu0 %v2744, 64
    %v2826 = vpop.permute.xlu0 %2825
    %2829 = vrot.lane.b32.xlu0 %v2740, 32
    %v2830 = vpop.permute.xlu0 %2829
    %2831 = vrot.lane.b32.xlu0 %v2744, 32
    %v2832 = vpop.permute.xlu0 %2831
    %v2835 = vpack.c.bf16 %v2740, %v2740
    %v2836 = vpack.c.bf16 %v2744, %v2744
    %v2837 = vpack.c.bf16 %v2818, %v2818
    %v2838 = vpack.c.bf16 %v2820, %v2820
    %v2839 = vpack.c.bf16 %v2824, %v2824
    %v2840 = vpack.c.bf16 %v2826, %v2826
    %v2841 = vpack.c.bf16 %v2830, %v2830
    %v2842 = vpack.c.bf16 %v2832, %v2832
    %2845 = vrot.lane.b32.xlu0 %v2781, 96
    %v2846 = vpop.permute.xlu0 %2845
    %2847 = vrot.lane.b32.xlu0 %v2784, 96
    %v2848 = vpop.permute.xlu0 %2847
    %2851 = vrot.lane.b32.xlu0 %v2781, 64
    %v2852 = vpop.permute.xlu0 %2851
    %2853 = vrot.lane.b32.xlu0 %v2784, 64
    %v2854 = vpop.permute.xlu0 %2853
    %2857 = vrot.lane.b32.xlu0 %v2781, 32
    %v2858 = vpop.permute.xlu0 %2857
    %2859 = vrot.lane.b32.xlu0 %v2784, 32
    %v2860 = vpop.permute.xlu0 %2859
    %v2863 = vpack.c.bf16 %v2781, %v2781
    %v2864 = vpack.c.bf16 %v2784, %v2784
    %v2865 = vpack.c.bf16 %v2846, %v2846
    %v2866 = vpack.c.bf16 %v2848, %v2848
    %v2867 = vpack.c.bf16 %v2852, %v2852
    %v2868 = vpack.c.bf16 %v2854, %v2854
    %v2869 = vpack.c.bf16 %v2858, %v2858
    %v2870 = vpack.c.bf16 %v2860, %v2860
    %v2872 = vsel %vm367, %v2807, 0
    %v2875 = vsel %vm367, %v2835, 0
    %2877 = vmatprep.subr.bf16.mxu0 0
    %2878 = vmatpush1.bf16.xpose.msra.mxu0 %v2875
    %2879 = vmatprep.subr.bf16.mxu0 0
    %2880 = vmatpush1.bf16.xpose.msra.mxu0 0
    %2881 = vmatprep.subr.bf16.mxu0 0
    %2882 = vmatpush1.bf16.xpose.msra.mxu0 0
    %2883 = vmatprep.subr.bf16.mxu0 0
    %2884 = vmatpush1.bf16.xpose.msra.mxu0 0
    %2885 = vmatprep.subr.bf16.mxu0 0
    %2886 = vmatpush1.bf16.xpose.msra.mxu0 0
    %2887 = vmatprep.subr.bf16.mxu0 0
    %2888 = vmatpush1.bf16.xpose.msra.mxu0 0
    %2889 = vmatprep.subr.bf16.mxu0 0
    %2890 = vmatpush1.bf16.xpose.msra.mxu0 0
    %2891 = vmatprep.subr.bf16.mxu0 0
    %2892 = vmatpush1.bf16.xpose.msra.mxu0 0
    %2893 = vmatprep.subr.bf16.mxu0 0
    %2894 = vmatpush1.bf16.xpose.msra.mxu0 0
    %2895 = vmatprep.subr.bf16.mxu0 0
    %2896 = vmatpush1.bf16.xpose.msra.mxu0 0
    %2897 = vmatprep.subr.bf16.mxu0 0
    %2898 = vmatpush1.bf16.xpose.msra.mxu0 0
    %2899 = vmatprep.subr.bf16.mxu0 0
    %2900 = vmatpush1.bf16.xpose.msra.mxu0 0
    %2901 = vmatprep.subr.bf16.mxu0 0
    %2902 = vmatpush1.bf16.xpose.msra.mxu0 0
    %2903 = vmatprep.subr.bf16.mxu0 0
    %2904 = vmatpush1.bf16.xpose.msra.mxu0 0
    %2905 = vmatprep.subr.bf16.mxu0 0
    %2906 = vmatpush1.bf16.xpose.msra.mxu0 0
    %2907 = vmatprep.subr.bf16.mxu0 0
    %2908 = vmatpush1.bf16.xpose.msra.mxu0 0
    %2909 = vmatprep.mubr.bf16.mxu0 0
    %2910 = vmatmul.mubr.bf16.gmra.mrb[0].mxu0 %v2872
    %v2911 = vpop.f32.mrb[0].mxu0
    %v2912 = vadd.f32 0.0, %v2911
    %v2913 = vpop.f32.mrb[0].mxu0
    %v2914 = vpop.f32.mrb[0].mxu0
    %v2915 = vpop.f32.mrb[0].mxu0
    %2916 = vdwg.mxu0
    %v2918 = vsel %vm367, %v2808, 0
    %v2921 = vsel %vm367, %v2836, 0
    %2923 = vmatprep.subr.bf16.mxu0 0
    %2924 = vmatpush1.bf16.xpose.msra.mxu0 %v2921
    %2925 = vmatprep.subr.bf16.mxu0 0
    %2926 = vmatpush1.bf16.xpose.msra.mxu0 0
    %2927 = vmatprep.subr.bf16.mxu0 0
    %2928 = vmatpush1.bf16.xpose.msra.mxu0 0
    %2929 = vmatprep.subr.bf16.mxu0 0
    %2930 = vmatpush1.bf16.xpose.msra.mxu0 0
    %2931 = vmatprep.subr.bf16.mxu0 0
    %2932 = vmatpush1.bf16.xpose.msra.mxu0 0
    %2933 = vmatprep.subr.bf16.mxu0 0
    %2934 = vmatpush1.bf16.xpose.msra.mxu0 0
    %2935 = vmatprep.subr.bf16.mxu0 0
    %2936 = vmatpush1.bf16.xpose.msra.mxu0 0
    %2937 = vmatprep.subr.bf16.mxu0 0
    %2938 = vmatpush1.bf16.xpose.msra.mxu0 0
    %2939 = vmatprep.subr.bf16.mxu0 0
    %2940 = vmatpush1.bf16.xpose.msra.mxu0 0
    %2941 = vmatprep.subr.bf16.mxu0 0
    %2942 = vmatpush1.bf16.xpose.msra.mxu0 0
    %2943 = vmatprep.subr.bf16.mxu0 0
    %2944 = vmatpush1.bf16.xpose.msra.mxu0 0
    %2945 = vmatprep.subr.bf16.mxu0 0
    %2946 = vmatpush1.bf16.xpose.msra.mxu0 0
    %2947 = vmatprep.subr.bf16.mxu0 0
    %2948 = vmatpush1.bf16.xpose.msra.mxu0 0
    %2949 = vmatprep.subr.bf16.mxu0 0
    %2950 = vmatpush1.bf16.xpose.msra.mxu0 0
    %2951 = vmatprep.subr.bf16.mxu0 0
    %2952 = vmatpush1.bf16.xpose.msra.mxu0 0
    %2953 = vmatprep.subr.bf16.mxu0 0
    %2954 = vmatpush1.bf16.xpose.msra.mxu0 0
    %2955 = vmatprep.mubr.bf16.mxu0 0
    %2956 = vmatmul.mubr.bf16.gmra.mrb[0].mxu0 %v2918
    %v2957 = vpop.f32.mrb[0].mxu0
    %v2958 = vadd.f32 0.0, %v2957
    %v2959 = vpop.f32.mrb[0].mxu0
    %v2960 = vpop.f32.mrb[0].mxu0
    %v2961 = vpop.f32.mrb[0].mxu0
    %2962 = vdwg.mxu0
    %v2964 = vsel %vm367, %v2809, 0
    %v2967 = vsel %vm367, %v2837, 0
    %2969 = vmatprep.subr.bf16.mxu0 0
    %2970 = vmatpush1.bf16.xpose.msra.mxu0 %v2967
    %2971 = vmatprep.subr.bf16.mxu0 0
    %2972 = vmatpush1.bf16.xpose.msra.mxu0 0
    %2973 = vmatprep.subr.bf16.mxu0 0
    %2974 = vmatpush1.bf16.xpose.msra.mxu0 0
    %2975 = vmatprep.subr.bf16.mxu0 0
    %2976 = vmatpush1.bf16.xpose.msra.mxu0 0
    %2977 = vmatprep.subr.bf16.mxu0 0
    %2978 = vmatpush1.bf16.xpose.msra.mxu0 0
    %2979 = vmatprep.subr.bf16.mxu0 0
    %2980 = vmatpush1.bf16.xpose.msra.mxu0 0
    %2981 = vmatprep.subr.bf16.mxu0 0
    %2982 = vmatpush1.bf16.xpose.msra.mxu0 0
    %2983 = vmatprep.subr.bf16.mxu0 0
    %2984 = vmatpush1.bf16.xpose.msra.mxu0 0
    %2985 = vmatprep.subr.bf16.mxu0 0
    %2986 = vmatpush1.bf16.xpose.msra.mxu0 0
    %2987 = vmatprep.subr.bf16.mxu0 0
    %2988 = vmatpush1.bf16.xpose.msra.mxu0 0
    %2989 = vmatprep.subr.bf16.mxu0 0
    %2990 = vmatpush1.bf16.xpose.msra.mxu0 0
    %2991 = vmatprep.subr.bf16.mxu0 0
    %2992 = vmatpush1.bf16.xpose.msra.mxu0 0
    %2993 = vmatprep.subr.bf16.mxu0 0
    %2994 = vmatpush1.bf16.xpose.msra.mxu0 0
    %2995 = vmatprep.subr.bf16.mxu0 0
    %2996 = vmatpush1.bf16.xpose.msra.mxu0 0
    %2997 = vmatprep.subr.bf16.mxu0 0
    %2998 = vmatpush1.bf16.xpose.msra.mxu0 0
    %2999 = vmatprep.subr.bf16.mxu0 0
    %3000 = vmatpush1.bf16.xpose.msra.mxu0 0
    %3001 = vmatprep.mubr.bf16.mxu0 0
    %3002 = vmatmul.mubr.bf16.gmra.mrb[0].mxu0 %v2964
    %v3003 = vpop.f32.mrb[0].mxu0
    %v3004 = vadd.f32 0.0, %v3003
    %v3005 = vpop.f32.mrb[0].mxu0
    %v3006 = vpop.f32.mrb[0].mxu0
    %v3007 = vpop.f32.mrb[0].mxu0
    %3008 = vdwg.mxu0
    %v3010 = vsel %vm367, %v2810, 0
    %v3013 = vsel %vm367, %v2838, 0
    %3015 = vmatprep.subr.bf16.mxu0 0
    %3016 = vmatpush1.bf16.xpose.msra.mxu0 %v3013
    %3017 = vmatprep.subr.bf16.mxu0 0
    %3018 = vmatpush1.bf16.xpose.msra.mxu0 0
    %3019 = vmatprep.subr.bf16.mxu0 0
    %3020 = vmatpush1.bf16.xpose.msra.mxu0 0
    %3021 = vmatprep.subr.bf16.mxu0 0
    %3022 = vmatpush1.bf16.xpose.msra.mxu0 0
    %3023 = vmatprep.subr.bf16.mxu0 0
    %3024 = vmatpush1.bf16.xpose.msra.mxu0 0
    %3025 = vmatprep.subr.bf16.mxu0 0
    %3026 = vmatpush1.bf16.xpose.msra.mxu0 0
    %3027 = vmatprep.subr.bf16.mxu0 0
    %3028 = vmatpush1.bf16.xpose.msra.mxu0 0
    %3029 = vmatprep.subr.bf16.mxu0 0
    %3030 = vmatpush1.bf16.xpose.msra.mxu0 0
    %3031 = vmatprep.subr.bf16.mxu0 0
    %3032 = vmatpush1.bf16.xpose.msra.mxu0 0
    %3033 = vmatprep.subr.bf16.mxu0 0
    %3034 = vmatpush1.bf16.xpose.msra.mxu0 0
    %3035 = vmatprep.subr.bf16.mxu0 0
    %3036 = vmatpush1.bf16.xpose.msra.mxu0 0
    %3037 = vmatprep.subr.bf16.mxu0 0
    %3038 = vmatpush1.bf16.xpose.msra.mxu0 0
    %3039 = vmatprep.subr.bf16.mxu0 0
    %3040 = vmatpush1.bf16.xpose.msra.mxu0 0
    %3041 = vmatprep.subr.bf16.mxu0 0
    %3042 = vmatpush1.bf16.xpose.msra.mxu0 0
    %3043 = vmatprep.subr.bf16.mxu0 0
    %3044 = vmatpush1.bf16.xpose.msra.mxu0 0
    %3045 = vmatprep.subr.bf16.mxu0 0
    %3046 = vmatpush1.bf16.xpose.msra.mxu0 0
    %3047 = vmatprep.mubr.bf16.mxu0 0
    %3048 = vmatmul.mubr.bf16.gmra.mrb[0].mxu0 %v3010
    %v3049 = vpop.f32.mrb[0].mxu0
    %v3050 = vadd.f32 0.0, %v3049
    %v3051 = vpop.f32.mrb[0].mxu0
    %v3052 = vpop.f32.mrb[0].mxu0
    %v3053 = vpop.f32.mrb[0].mxu0
    %3054 = vdwg.mxu0
    %v3056 = vsel %vm367, %v2811, 0
    %v3059 = vsel %vm367, %v2839, 0
    %3061 = vmatprep.subr.bf16.mxu0 0
    %3062 = vmatpush1.bf16.xpose.msra.mxu0 %v3059
    %3063 = vmatprep.subr.bf16.mxu0 0
    %3064 = vmatpush1.bf16.xpose.msra.mxu0 0
    %3065 = vmatprep.subr.bf16.mxu0 0
    %3066 = vmatpush1.bf16.xpose.msra.mxu0 0
    %3067 = vmatprep.subr.bf16.mxu0 0
    %3068 = vmatpush1.bf16.xpose.msra.mxu0 0
    %3069 = vmatprep.subr.bf16.mxu0 0
    %3070 = vmatpush1.bf16.xpose.msra.mxu0 0
    %3071 = vmatprep.subr.bf16.mxu0 0
    %3072 = vmatpush1.bf16.xpose.msra.mxu0 0
    %3073 = vmatprep.subr.bf16.mxu0 0
    %3074 = vmatpush1.bf16.xpose.msra.mxu0 0
    %3075 = vmatprep.subr.bf16.mxu0 0
    %3076 = vmatpush1.bf16.xpose.msra.mxu0 0
    %3077 = vmatprep.subr.bf16.mxu0 0
    %3078 = vmatpush1.bf16.xpose.msra.mxu0 0
    %3079 = vmatprep.subr.bf16.mxu0 0
    %3080 = vmatpush1.bf16.xpose.msra.mxu0 0
    %3081 = vmatprep.subr.bf16.mxu0 0
    %3082 = vmatpush1.bf16.xpose.msra.mxu0 0
    %3083 = vmatprep.subr.bf16.mxu0 0
    %3084 = vmatpush1.bf16.xpose.msra.mxu0 0
    %3085 = vmatprep.subr.bf16.mxu0 0
    %3086 = vmatpush1.bf16.xpose.msra.mxu0 0
    %3087 = vmatprep.subr.bf16.mxu0 0
    %3088 = vmatpush1.bf16.xpose.msra.mxu0 0
    %3089 = vmatprep.subr.bf16.mxu0 0
    %3090 = vmatpush1.bf16.xpose.msra.mxu0 0
    %3091 = vmatprep.subr.bf16.mxu0 0
    %3092 = vmatpush1.bf16.xpose.msra.mxu0 0
    %3093 = vmatprep.mubr.bf16.mxu0 0
    %3094 = vmatmul.mubr.bf16.gmra.mrb[0].mxu0 %v3056
    %v3095 = vpop.f32.mrb[0].mxu0
    %v3096 = vadd.f32 0.0, %v3095
    %v3097 = vpop.f32.mrb[0].mxu0
    %v3098 = vpop.f32.mrb[0].mxu0
    %v3099 = vpop.f32.mrb[0].mxu0
    %3100 = vdwg.mxu0
    %v3102 = vsel %vm367, %v2812, 0
    %v3105 = vsel %vm367, %v2840, 0
    %3107 = vmatprep.subr.bf16.mxu0 0
    %3108 = vmatpush1.bf16.xpose.msra.mxu0 %v3105
    %3109 = vmatprep.subr.bf16.mxu0 0
    %3110 = vmatpush1.bf16.xpose.msra.mxu0 0
    %3111 = vmatprep.subr.bf16.mxu0 0
    %3112 = vmatpush1.bf16.xpose.msra.mxu0 0
    %3113 = vmatprep.subr.bf16.mxu0 0
    %3114 = vmatpush1.bf16.xpose.msra.mxu0 0
    %3115 = vmatprep.subr.bf16.mxu0 0
    %3116 = vmatpush1.bf16.xpose.msra.mxu0 0
    %3117 = vmatprep.subr.bf16.mxu0 0
    %3118 = vmatpush1.bf16.xpose.msra.mxu0 0
    %3119 = vmatprep.subr.bf16.mxu0 0
    %3120 = vmatpush1.bf16.xpose.msra.mxu0 0
    %3121 = vmatprep.subr.bf16.mxu0 0
    %3122 = vmatpush1.bf16.xpose.msra.mxu0 0
    %3123 = vmatprep.subr.bf16.mxu0 0
    %3124 = vmatpush1.bf16.xpose.msra.mxu0 0
    %3125 = vmatprep.subr.bf16.mxu0 0
    %3126 = vmatpush1.bf16.xpose.msra.mxu0 0
    %3127 = vmatprep.subr.bf16.mxu0 0
    %3128 = vmatpush1.bf16.xpose.msra.mxu0 0
    %3129 = vmatprep.subr.bf16.mxu0 0
    %3130 = vmatpush1.bf16.xpose.msra.mxu0 0
    %3131 = vmatprep.subr.bf16.mxu0 0
    %3132 = vmatpush1.bf16.xpose.msra.mxu0 0
    %3133 = vmatprep.subr.bf16.mxu0 0
    %3134 = vmatpush1.bf16.xpose.msra.mxu0 0
    %3135 = vmatprep.subr.bf16.mxu0 0
    %3136 = vmatpush1.bf16.xpose.msra.mxu0 0
    %3137 = vmatprep.subr.bf16.mxu0 0
    %3138 = vmatpush1.bf16.xpose.msra.mxu0 0
    %3139 = vmatprep.mubr.bf16.mxu0 0
    %3140 = vmatmul.mubr.bf16.gmra.mrb[0].mxu0 %v3102
    %v3141 = vpop.f32.mrb[0].mxu0
    %v3142 = vadd.f32 0.0, %v3141
    %v3143 = vpop.f32.mrb[0].mxu0
    %v3144 = vpop.f32.mrb[0].mxu0
    %v3145 = vpop.f32.mrb[0].mxu0
    %3146 = vdwg.mxu0
    %v3148 = vsel %vm367, %v2813, 0
    %v3151 = vsel %vm367, %v2841, 0
    %3153 = vmatprep.subr.bf16.mxu0 0
    %3154 = vmatpush1.bf16.xpose.msra.mxu0 %v3151
    %3155 = vmatprep.subr.bf16.mxu0 0
    %3156 = vmatpush1.bf16.xpose.msra.mxu0 0
    %3157 = vmatprep.subr.bf16.mxu0 0
    %3158 = vmatpush1.bf16.xpose.msra.mxu0 0
    %3159 = vmatprep.subr.bf16.mxu0 0
    %3160 = vmatpush1.bf16.xpose.msra.mxu0 0
    %3161 = vmatprep.subr.bf16.mxu0 0
    %3162 = vmatpush1.bf16.xpose.msra.mxu0 0
    %3163 = vmatprep.subr.bf16.mxu0 0
    %3164 = vmatpush1.bf16.xpose.msra.mxu0 0
    %3165 = vmatprep.subr.bf16.mxu0 0
    %3166 = vmatpush1.bf16.xpose.msra.mxu0 0
    %3167 = vmatprep.subr.bf16.mxu0 0
    %3168 = vmatpush1.bf16.xpose.msra.mxu0 0
    %3169 = vmatprep.subr.bf16.mxu0 0
    %3170 = vmatpush1.bf16.xpose.msra.mxu0 0
    %3171 = vmatprep.subr.bf16.mxu0 0
    %3172 = vmatpush1.bf16.xpose.msra.mxu0 0
    %3173 = vmatprep.subr.bf16.mxu0 0
    %3174 = vmatpush1.bf16.xpose.msra.mxu0 0
    %3175 = vmatprep.subr.bf16.mxu0 0
    %3176 = vmatpush1.bf16.xpose.msra.mxu0 0
    %3177 = vmatprep.subr.bf16.mxu0 0
    %3178 = vmatpush1.bf16.xpose.msra.mxu0 0
    %3179 = vmatprep.subr.bf16.mxu0 0
    %3180 = vmatpush1.bf16.xpose.msra.mxu0 0
    %3181 = vmatprep.subr.bf16.mxu0 0
    %3182 = vmatpush1.bf16.xpose.msra.mxu0 0
    %3183 = vmatprep.subr.bf16.mxu0 0
    %3184 = vmatpush1.bf16.xpose.msra.mxu0 0
    %3185 = vmatprep.mubr.bf16.mxu0 0
    %3186 = vmatmul.mubr.bf16.gmra.mrb[0].mxu0 %v3148
    %v3187 = vpop.f32.mrb[0].mxu0
    %v3188 = vadd.f32 0.0, %v3187
    %v3189 = vpop.f32.mrb[0].mxu0
    %v3190 = vpop.f32.mrb[0].mxu0
    %v3191 = vpop.f32.mrb[0].mxu0
    %3192 = vdwg.mxu0
    %v3194 = vsel %vm367, %v2814, 0
    %v3197 = vsel %vm367, %v2842, 0
    %3199 = vmatprep.subr.bf16.mxu0 0
    %3200 = vmatpush1.bf16.xpose.msra.mxu0 %v3197
    %3201 = vmatprep.subr.bf16.mxu0 0
    %3202 = vmatpush1.bf16.xpose.msra.mxu0 0
    %3203 = vmatprep.subr.bf16.mxu0 0
    %3204 = vmatpush1.bf16.xpose.msra.mxu0 0
    %3205 = vmatprep.subr.bf16.mxu0 0
    %3206 = vmatpush1.bf16.xpose.msra.mxu0 0
    %3207 = vmatprep.subr.bf16.mxu0 0
    %3208 = vmatpush1.bf16.xpose.msra.mxu0 0
    %3209 = vmatprep.subr.bf16.mxu0 0
    %3210 = vmatpush1.bf16.xpose.msra.mxu0 0
    %3211 = vmatprep.subr.bf16.mxu0 0
    %3212 = vmatpush1.bf16.xpose.msra.mxu0 0
    %3213 = vmatprep.subr.bf16.mxu0 0
    %3214 = vmatpush1.bf16.xpose.msra.mxu0 0
    %3215 = vmatprep.subr.bf16.mxu0 0
    %3216 = vmatpush1.bf16.xpose.msra.mxu0 0
    %3217 = vmatprep.subr.bf16.mxu0 0
    %3218 = vmatpush1.bf16.xpose.msra.mxu0 0
    %3219 = vmatprep.subr.bf16.mxu0 0
    %3220 = vmatpush1.bf16.xpose.msra.mxu0 0
    %3221 = vmatprep.subr.bf16.mxu0 0
    %3222 = vmatpush1.bf16.xpose.msra.mxu0 0
    %3223 = vmatprep.subr.bf16.mxu0 0
    %3224 = vmatpush1.bf16.xpose.msra.mxu0 0
    %3225 = vmatprep.subr.bf16.mxu0 0
    %3226 = vmatpush1.bf16.xpose.msra.mxu0 0
    %3227 = vmatprep.subr.bf16.mxu0 0
    %3228 = vmatpush1.bf16.xpose.msra.mxu0 0
    %3229 = vmatprep.subr.bf16.mxu0 0
    %3230 = vmatpush1.bf16.xpose.msra.mxu0 0
    %3231 = vmatprep.mubr.bf16.mxu0 0
    %3232 = vmatmul.mubr.bf16.gmra.mrb[0].mxu0 %v3194
    %v3233 = vpop.f32.mrb[0].mxu0
    %v3234 = vadd.f32 0.0, %v3233
    %v3235 = vpop.f32.mrb[0].mxu0
    %v3236 = vpop.f32.mrb[0].mxu0
    %v3237 = vpop.f32.mrb[0].mxu0
    %3238 = vdwg.mxu0
    %v3239 = vmul.f32 %v2912, 0.17677669
    %v3240 = vmul.f32 %v2958, 0.17677669
    %v3241 = vmul.f32 %v3004, 0.17677669
    %v3242 = vmul.f32 %v3050, 0.17677669
    %v3243 = vmul.f32 %v3096, 0.17677669
    %v3244 = vmul.f32 %v3142, 0.17677669
    %v3245 = vmul.f32 %v3188, 0.17677669
    %v3246 = vmul.f32 %v3234, 0.17677669
    %v3247 = vadd.f32 %v3239, %v1302
    %v3248 = vadd.f32 %v3240, %v1306
    %v3249 = vadd.f32 %v3241, %v1302
    %v3250 = vadd.f32 %v3242, %v1306
    %v3251 = vadd.f32 %v3243, %v1302
    %v3252 = vadd.f32 %v3244, %v1306
    %v3253 = vadd.f32 %v3245, %v1302
    %v3254 = vadd.f32 %v3246, %v1306
    %v3255 = vsel %vm1317, %v3247, -inf
    %3256 = vmax.xlane.f32.xlu0 %v3255
    %v3257 = vpop.xlane.xlu0 %3256
    %v3258 = vsel %vm1317, %v3248, -inf
    %3259 = vmax.xlane.f32.xlu0 %v3258
    %v3260 = vpop.xlane.xlu0 %3259
    %v3261 = vsel %vm1317, %v3249, -inf
    %3262 = vmax.xlane.f32.xlu0 %v3261
    %v3263 = vpop.xlane.xlu0 %3262
    %v3264 = vsel %vm1317, %v3250, -inf
    %3265 = vmax.xlane.f32.xlu0 %v3264
    %v3266 = vpop.xlane.xlu0 %3265
    %v3267 = vsel %vm1317, %v3251, -inf
    %3268 = vmax.xlane.f32.xlu0 %v3267
    %v3269 = vpop.xlane.xlu0 %3268
    %v3270 = vsel %vm1317, %v3252, -inf
    %3271 = vmax.xlane.f32.xlu0 %v3270
    %v3272 = vpop.xlane.xlu0 %3271
    %v3273 = vsel %vm1317, %v3253, -inf
    %3274 = vmax.xlane.f32.xlu0 %v3273
    %v3275 = vpop.xlane.xlu0 %3274
    %v3276 = vsel %vm1317, %v3254, -inf
    %3277 = vmax.xlane.f32.xlu0 %v3276
    %v3278 = vpop.xlane.xlu0 %3277
    %v3279 = vsub.f32 %v3247, %v3257
    %v3280 = vsub.f32 %v3248, %v3260
    %v3281 = vsub.f32 %v3249, %v3263
    %v3282 = vsub.f32 %v3250, %v3266
    %v3283 = vsub.f32 %v3251, %v3269
    %v3284 = vsub.f32 %v3252, %v3272
    %v3285 = vsub.f32 %v3253, %v3275
    %v3286 = vsub.f32 %v3254, %v3278
    %v3287 = vmul.f32 %v3279, 1.442695
    %v3288 = vpow.pop %v3287
    %v3289 = vmul.f32 %v3280, 1.442695
    %v3290 = vpow.pop %v3289
    %v3291 = vmul.f32 %v3281, 1.442695
    %v3292 = vpow.pop %v3291
    %v3293 = vmul.f32 %v3282, 1.442695
    %v3294 = vpow.pop %v3293
    %v3295 = vmul.f32 %v3283, 1.442695
    %v3296 = vpow.pop %v3295
    %v3297 = vmul.f32 %v3284, 1.442695
    %v3298 = vpow.pop %v3297
    %v3299 = vmul.f32 %v3285, 1.442695
    %v3300 = vpow.pop %v3299
    %v3301 = vmul.f32 %v3286, 1.442695
    %v3302 = vpow.pop %v3301
    %v3303 = vsel %vm1317, %v3288, 0.0
    %3304 = vadd.xlane.f32.xlu0 %v3303
    %v3305 = vpop.xlane.xlu0 %3304
    %v3306 = vsel %vm1317, %v3290, 0.0
    %3307 = vadd.xlane.f32.xlu0 %v3306
    %v3308 = vpop.xlane.xlu0 %3307
    %v3309 = vsel %vm1317, %v3292, 0.0
    %3310 = vadd.xlane.f32.xlu0 %v3309
    %v3311 = vpop.xlane.xlu0 %3310
    %v3312 = vsel %vm1317, %v3294, 0.0
    %3313 = vadd.xlane.f32.xlu0 %v3312
    %v3314 = vpop.xlane.xlu0 %3313
    %v3315 = vsel %vm1317, %v3296, 0.0
    %3316 = vadd.xlane.f32.xlu0 %v3315
    %v3317 = vpop.xlane.xlu0 %3316
    %v3318 = vsel %vm1317, %v3298, 0.0
    %3319 = vadd.xlane.f32.xlu0 %v3318
    %v3320 = vpop.xlane.xlu0 %3319
    %v3321 = vsel %vm1317, %v3300, 0.0
    %3322 = vadd.xlane.f32.xlu0 %v3321
    %v3323 = vpop.xlane.xlu0 %3322
    %v3324 = vsel %vm1317, %v3302, 0.0
    %3325 = vadd.xlane.f32.xlu0 %v3324
    %v3326 = vpop.xlane.xlu0 %3325
    %v3327 = vrcp.pop %v3305
    %v3328 = vmul.f32 %v3288, %v3327
    %v3329 = vrcp.pop %v3308
    %v3330 = vmul.f32 %v3290, %v3329
    %v3331 = vrcp.pop %v3311
    %v3332 = vmul.f32 %v3292, %v3331
    %v3333 = vrcp.pop %v3314
    %v3334 = vmul.f32 %v3294, %v3333
    %v3335 = vrcp.pop %v3317
    %v3336 = vmul.f32 %v3296, %v3335
    %v3337 = vrcp.pop %v3320
    %v3338 = vmul.f32 %v3298, %v3337
    %v3339 = vrcp.pop %v3323
    %v3340 = vmul.f32 %v3300, %v3339
    %v3341 = vrcp.pop %v3326
    %v3342 = vmul.f32 %v3302, %v3341
    %v3343 = vpack.c.bf16 %v3328, %v3328
    %v3344 = vpack.c.bf16 %v3330, %v3330
    %v3345 = vpack.c.bf16 %v3332, %v3332
    %v3346 = vpack.c.bf16 %v3334, %v3334
    %v3347 = vpack.c.bf16 %v3336, %v3336
    %v3348 = vpack.c.bf16 %v3338, %v3338
    %v3349 = vpack.c.bf16 %v3340, %v3340
    %v3350 = vpack.c.bf16 %v3342, %v3342
    %v3352 = vsel %vm1317, %v3343, 0
    %v3355 = vsel %vm1417, %v2863, 0
    %3357 = vmatprep.subr.bf16.mxu0 0
    %3358 = vmatpush1.bf16.msra.mxu0 %v3355
    %3359 = vmatprep.subr.bf16.mxu0 0
    %3360 = vmatpush1.bf16.msra.mxu0 0
    %3361 = vmatprep.subr.bf16.mxu0 0
    %3362 = vmatpush1.bf16.msra.mxu0 0
    %3363 = vmatprep.subr.bf16.mxu0 0
    %3364 = vmatpush1.bf16.msra.mxu0 0
    %3365 = vmatprep.subr.bf16.mxu0 0
    %3366 = vmatpush1.bf16.msra.mxu0 0
    %3367 = vmatprep.subr.bf16.mxu0 0
    %3368 = vmatpush1.bf16.msra.mxu0 0
    %3369 = vmatprep.subr.bf16.mxu0 0
    %3370 = vmatpush1.bf16.msra.mxu0 0
    %3371 = vmatprep.subr.bf16.mxu0 0
    %3372 = vmatpush1.bf16.msra.mxu0 0
    %3373 = vmatprep.subr.bf16.mxu0 0
    %3374 = vmatpush1.bf16.msra.mxu0 0
    %3375 = vmatprep.subr.bf16.mxu0 0
    %3376 = vmatpush1.bf16.msra.mxu0 0
    %3377 = vmatprep.subr.bf16.mxu0 0
    %3378 = vmatpush1.bf16.msra.mxu0 0
    %3379 = vmatprep.subr.bf16.mxu0 0
    %3380 = vmatpush1.bf16.msra.mxu0 0
    %3381 = vmatprep.subr.bf16.mxu0 0
    %3382 = vmatpush1.bf16.msra.mxu0 0
    %3383 = vmatprep.subr.bf16.mxu0 0
    %3384 = vmatpush1.bf16.msra.mxu0 0
    %3385 = vmatprep.subr.bf16.mxu0 0
    %3386 = vmatpush1.bf16.msra.mxu0 0
    %3387 = vmatprep.subr.bf16.mxu0 0
    %3388 = vmatpush1.bf16.msra.mxu0 0
    %3389 = vmatprep.mubr.bf16.mxu0 0
    %3390 = vmatmul.mubr.bf16.gmra.mrb[0].mxu0 %v3352
    %v3391 = vpop.f32.mrb[0].mxu0
    %v3392 = vadd.f32 0.0, %v3391
    %v3393 = vpop.f32.mrb[0].mxu0
    %v3394 = vpop.f32.mrb[0].mxu0
    %v3395 = vpop.f32.mrb[0].mxu0
    %3396 = vdwg.mxu0
    %v3398 = vsel %vm1317, %v3344, 0
    %v3401 = vsel %vm1417, %v2864, 0
    %3403 = vmatprep.subr.bf16.mxu0 0
    %3404 = vmatpush1.bf16.msra.mxu0 %v3401
    %3405 = vmatprep.subr.bf16.mxu0 0
    %3406 = vmatpush1.bf16.msra.mxu0 0
    %3407 = vmatprep.subr.bf16.mxu0 0
    %3408 = vmatpush1.bf16.msra.mxu0 0
    %3409 = vmatprep.subr.bf16.mxu0 0
    %3410 = vmatpush1.bf16.msra.mxu0 0
    %3411 = vmatprep.subr.bf16.mxu0 0
    %3412 = vmatpush1.bf16.msra.mxu0 0
    %3413 = vmatprep.subr.bf16.mxu0 0
    %3414 = vmatpush1.bf16.msra.mxu0 0
    %3415 = vmatprep.subr.bf16.mxu0 0
    %3416 = vmatpush1.bf16.msra.mxu0 0
    %3417 = vmatprep.subr.bf16.mxu0 0
    %3418 = vmatpush1.bf16.msra.mxu0 0
    %3419 = vmatprep.subr.bf16.mxu0 0
    %3420 = vmatpush1.bf16.msra.mxu0 0
    %3421 = vmatprep.subr.bf16.mxu0 0
    %3422 = vmatpush1.bf16.msra.mxu0 0
    %3423 = vmatprep.subr.bf16.mxu0 0
    %3424 = vmatpush1.bf16.msra.mxu0 0
    %3425 = vmatprep.subr.bf16.mxu0 0
    %3426 = vmatpush1.bf16.msra.mxu0 0
    %3427 = vmatprep.subr.bf16.mxu0 0
    %3428 = vmatpush1.bf16.msra.mxu0 0
    %3429 = vmatprep.subr.bf16.mxu0 0
    %3430 = vmatpush1.bf16.msra.mxu0 0
    %3431 = vmatprep.subr.bf16.mxu0 0
    %3432 = vmatpush1.bf16.msra.mxu0 0
    %3433 = vmatprep.subr.bf16.mxu0 0
    %3434 = vmatpush1.bf16.msra.mxu0 0
    %3435 = vmatprep.mubr.bf16.mxu0 0
    %3436 = vmatmul.mubr.bf16.gmra.mrb[0].mxu0 %v3398
    %v3437 = vpop.f32.mrb[0].mxu0
    %v3438 = vadd.f32 0.0, %v3437
    %v3439 = vpop.f32.mrb[0].mxu0
    %v3440 = vpop.f32.mrb[0].mxu0
    %v3441 = vpop.f32.mrb[0].mxu0
    %3442 = vdwg.mxu0
    %v3444 = vsel %vm1317, %v3345, 0
    %v3447 = vsel %vm1417, %v2865, 0
    %3449 = vmatprep.subr.bf16.mxu0 0
    %3450 = vmatpush1.bf16.msra.mxu0 %v3447
    %3451 = vmatprep.subr.bf16.mxu0 0
    %3452 = vmatpush1.bf16.msra.mxu0 0
    %3453 = vmatprep.subr.bf16.mxu0 0
    %3454 = vmatpush1.bf16.msra.mxu0 0
    %3455 = vmatprep.subr.bf16.mxu0 0
    %3456 = vmatpush1.bf16.msra.mxu0 0
    %3457 = vmatprep.subr.bf16.mxu0 0
    %3458 = vmatpush1.bf16.msra.mxu0 0
    %3459 = vmatprep.subr.bf16.mxu0 0
    %3460 = vmatpush1.bf16.msra.mxu0 0
    %3461 = vmatprep.subr.bf16.mxu0 0
    %3462 = vmatpush1.bf16.msra.mxu0 0
    %3463 = vmatprep.subr.bf16.mxu0 0
    %3464 = vmatpush1.bf16.msra.mxu0 0
    %3465 = vmatprep.subr.bf16.mxu0 0
    %3466 = vmatpush1.bf16.msra.mxu0 0
    %3467 = vmatprep.subr.bf16.mxu0 0
    %3468 = vmatpush1.bf16.msra.mxu0 0
    %3469 = vmatprep.subr.bf16.mxu0 0
    %3470 = vmatpush1.bf16.msra.mxu0 0
    %3471 = vmatprep.subr.bf16.mxu0 0
    %3472 = vmatpush1.bf16.msra.mxu0 0
    %3473 = vmatprep.subr.bf16.mxu0 0
    %3474 = vmatpush1.bf16.msra.mxu0 0
    %3475 = vmatprep.subr.bf16.mxu0 0
    %3476 = vmatpush1.bf16.msra.mxu0 0
    %3477 = vmatprep.subr.bf16.mxu0 0
    %3478 = vmatpush1.bf16.msra.mxu0 0
    %3479 = vmatprep.subr.bf16.mxu0 0
    %3480 = vmatpush1.bf16.msra.mxu0 0
    %3481 = vmatprep.mubr.bf16.mxu0 0
    %3482 = vmatmul.mubr.bf16.gmra.mrb[0].mxu0 %v3444
    %v3483 = vpop.f32.mrb[0].mxu0
    %v3484 = vadd.f32 0.0, %v3483
    %v3485 = vpop.f32.mrb[0].mxu0
    %v3486 = vpop.f32.mrb[0].mxu0
    %v3487 = vpop.f32.mrb[0].mxu0
    %3488 = vdwg.mxu0
    %v3490 = vsel %vm1317, %v3346, 0
    %v3493 = vsel %vm1417, %v2866, 0
    %3495 = vmatprep.subr.bf16.mxu0 0
    %3496 = vmatpush1.bf16.msra.mxu0 %v3493
    %3497 = vmatprep.subr.bf16.mxu0 0
    %3498 = vmatpush1.bf16.msra.mxu0 0
    %3499 = vmatprep.subr.bf16.mxu0 0
    %3500 = vmatpush1.bf16.msra.mxu0 0
    %3501 = vmatprep.subr.bf16.mxu0 0
    %3502 = vmatpush1.bf16.msra.mxu0 0
    %3503 = vmatprep.subr.bf16.mxu0 0
    %3504 = vmatpush1.bf16.msra.mxu0 0
    %3505 = vmatprep.subr.bf16.mxu0 0
    %3506 = vmatpush1.bf16.msra.mxu0 0
    %3507 = vmatprep.subr.bf16.mxu0 0
    %3508 = vmatpush1.bf16.msra.mxu0 0
    %3509 = vmatprep.subr.bf16.mxu0 0
    %3510 = vmatpush1.bf16.msra.mxu0 0
    %3511 = vmatprep.subr.bf16.mxu0 0
    %3512 = vmatpush1.bf16.msra.mxu0 0
    %3513 = vmatprep.subr.bf16.mxu0 0
    %3514 = vmatpush1.bf16.msra.mxu0 0
    %3515 = vmatprep.subr.bf16.mxu0 0
    %3516 = vmatpush1.bf16.msra.mxu0 0
    %3517 = vmatprep.subr.bf16.mxu0 0
    %3518 = vmatpush1.bf16.msra.mxu0 0
    %3519 = vmatprep.subr.bf16.mxu0 0
    %3520 = vmatpush1.bf16.msra.mxu0 0
    %3521 = vmatprep.subr.bf16.mxu0 0
    %3522 = vmatpush1.bf16.msra.mxu0 0
    %3523 = vmatprep.subr.bf16.mxu0 0
    %3524 = vmatpush1.bf16.msra.mxu0 0
    %3525 = vmatprep.subr.bf16.mxu0 0
    %3526 = vmatpush1.bf16.msra.mxu0 0
    %3527 = vmatprep.mubr.bf16.mxu0 0
    %3528 = vmatmul.mubr.bf16.gmra.mrb[0].mxu0 %v3490
    %v3529 = vpop.f32.mrb[0].mxu0
    %v3530 = vadd.f32 0.0, %v3529
    %v3531 = vpop.f32.mrb[0].mxu0
    %v3532 = vpop.f32.mrb[0].mxu0
    %v3533 = vpop.f32.mrb[0].mxu0
    %3534 = vdwg.mxu0
    %v3536 = vsel %vm1317, %v3347, 0
    %v3539 = vsel %vm1417, %v2867, 0
    %3541 = vmatprep.subr.bf16.mxu0 0
    %3542 = vmatpush1.bf16.msra.mxu0 %v3539
    %3543 = vmatprep.subr.bf16.mxu0 0
    %3544 = vmatpush1.bf16.msra.mxu0 0
    %3545 = vmatprep.subr.bf16.mxu0 0
    %3546 = vmatpush1.bf16.msra.mxu0 0
    %3547 = vmatprep.subr.bf16.mxu0 0
    %3548 = vmatpush1.bf16.msra.mxu0 0
    %3549 = vmatprep.subr.bf16.mxu0 0
    %3550 = vmatpush1.bf16.msra.mxu0 0
    %3551 = vmatprep.subr.bf16.mxu0 0
    %3552 = vmatpush1.bf16.msra.mxu0 0
    %3553 = vmatprep.subr.bf16.mxu0 0
    %3554 = vmatpush1.bf16.msra.mxu0 0
    %3555 = vmatprep.subr.bf16.mxu0 0
    %3556 = vmatpush1.bf16.msra.mxu0 0
    %3557 = vmatprep.subr.bf16.mxu0 0
    %3558 = vmatpush1.bf16.msra.mxu0 0
    %3559 = vmatprep.subr.bf16.mxu0 0
    %3560 = vmatpush1.bf16.msra.mxu0 0
    %3561 = vmatprep.subr.bf16.mxu0 0
    %3562 = vmatpush1.bf16.msra.mxu0 0
    %3563 = vmatprep.subr.bf16.mxu0 0
    %3564 = vmatpush1.bf16.msra.mxu0 0
    %3565 = vmatprep.subr.bf16.mxu0 0
    %3566 = vmatpush1.bf16.msra.mxu0 0
    %3567 = vmatprep.subr.bf16.mxu0 0
    %3568 = vmatpush1.bf16.msra.mxu0 0
    %3569 = vmatprep.subr.bf16.mxu0 0
    %3570 = vmatpush1.bf16.msra.mxu0 0
    %3571 = vmatprep.subr.bf16.mxu0 0
    %3572 = vmatpush1.bf16.msra.mxu0 0
    %3573 = vmatprep.mubr.bf16.mxu0 0
    %3574 = vmatmul.mubr.bf16.gmra.mrb[0].mxu0 %v3536
    %v3575 = vpop.f32.mrb[0].mxu0
    %v3576 = vadd.f32 0.0, %v3575
    %v3577 = vpop.f32.mrb[0].mxu0
    %v3578 = vpop.f32.mrb[0].mxu0
    %v3579 = vpop.f32.mrb[0].mxu0
    %3580 = vdwg.mxu0
    %v3582 = vsel %vm1317, %v3348, 0
    %v3585 = vsel %vm1417, %v2868, 0
    %3587 = vmatprep.subr.bf16.mxu0 0
    %3588 = vmatpush1.bf16.msra.mxu0 %v3585
    %3589 = vmatprep.subr.bf16.mxu0 0
    %3590 = vmatpush1.bf16.msra.mxu0 0
    %3591 = vmatprep.subr.bf16.mxu0 0
    %3592 = vmatpush1.bf16.msra.mxu0 0
    %3593 = vmatprep.subr.bf16.mxu0 0
    %3594 = vmatpush1.bf16.msra.mxu0 0
    %3595 = vmatprep.subr.bf16.mxu0 0
    %3596 = vmatpush1.bf16.msra.mxu0 0
    %3597 = vmatprep.subr.bf16.mxu0 0
    %3598 = vmatpush1.bf16.msra.mxu0 0
    %3599 = vmatprep.subr.bf16.mxu0 0
    %3600 = vmatpush1.bf16.msra.mxu0 0
    %3601 = vmatprep.subr.bf16.mxu0 0
    %3602 = vmatpush1.bf16.msra.mxu0 0
    %3603 = vmatprep.subr.bf16.mxu0 0
    %3604 = vmatpush1.bf16.msra.mxu0 0
    %3605 = vmatprep.subr.bf16.mxu0 0
    %3606 = vmatpush1.bf16.msra.mxu0 0
    %3607 = vmatprep.subr.bf16.mxu0 0
    %3608 = vmatpush1.bf16.msra.mxu0 0
    %3609 = vmatprep.subr.bf16.mxu0 0
    %3610 = vmatpush1.bf16.msra.mxu0 0
    %3611 = vmatprep.subr.bf16.mxu0 0
    %3612 = vmatpush1.bf16.msra.mxu0 0
    %3613 = vmatprep.subr.bf16.mxu0 0
    %3614 = vmatpush1.bf16.msra.mxu0 0
    %3615 = vmatprep.subr.bf16.mxu0 0
    %3616 = vmatpush1.bf16.msra.mxu0 0
    %3617 = vmatprep.subr.bf16.mxu0 0
    %3618 = vmatpush1.bf16.msra.mxu0 0
    %3619 = vmatprep.mubr.bf16.mxu0 0
    %3620 = vmatmul.mubr.bf16.gmra.mrb[0].mxu0 %v3582
    %v3621 = vpop.f32.mrb[0].mxu0
    %v3622 = vadd.f32 0.0, %v3621
    %v3623 = vpop.f32.mrb[0].mxu0
    %v3624 = vpop.f32.mrb[0].mxu0
    %v3625 = vpop.f32.mrb[0].mxu0
    %3626 = vdwg.mxu0
    %v3628 = vsel %vm1317, %v3349, 0
    %v3631 = vsel %vm1417, %v2869, 0
    %3633 = vmatprep.subr.bf16.mxu0 0
    %3634 = vmatpush1.bf16.msra.mxu0 %v3631
    %3635 = vmatprep.subr.bf16.mxu0 0
    %3636 = vmatpush1.bf16.msra.mxu0 0
    %3637 = vmatprep.subr.bf16.mxu0 0
    %3638 = vmatpush1.bf16.msra.mxu0 0
    %3639 = vmatprep.subr.bf16.mxu0 0
    %3640 = vmatpush1.bf16.msra.mxu0 0
    %3641 = vmatprep.subr.bf16.mxu0 0
    %3642 = vmatpush1.bf16.msra.mxu0 0
    %3643 = vmatprep.subr.bf16.mxu0 0
    %3644 = vmatpush1.bf16.msra.mxu0 0
    %3645 = vmatprep.subr.bf16.mxu0 0
    %3646 = vmatpush1.bf16.msra.mxu0 0
    %3647 = vmatprep.subr.bf16.mxu0 0
    %3648 = vmatpush1.bf16.msra.mxu0 0
    %3649 = vmatprep.subr.bf16.mxu0 0
    %3650 = vmatpush1.bf16.msra.mxu0 0
    %3651 = vmatprep.subr.bf16.mxu0 0
    %3652 = vmatpush1.bf16.msra.mxu0 0
    %3653 = vmatprep.subr.bf16.mxu0 0
    %3654 = vmatpush1.bf16.msra.mxu0 0
    %3655 = vmatprep.subr.bf16.mxu0 0
    %3656 = vmatpush1.bf16.msra.mxu0 0
    %3657 = vmatprep.subr.bf16.mxu0 0
    %3658 = vmatpush1.bf16.msra.mxu0 0
    %3659 = vmatprep.subr.bf16.mxu0 0
    %3660 = vmatpush1.bf16.msra.mxu0 0
    %3661 = vmatprep.subr.bf16.mxu0 0
    %3662 = vmatpush1.bf16.msra.mxu0 0
    %3663 = vmatprep.subr.bf16.mxu0 0
    %3664 = vmatpush1.bf16.msra.mxu0 0
    %3665 = vmatprep.mubr.bf16.mxu0 0
    %3666 = vmatmul.mubr.bf16.gmra.mrb[0].mxu0 %v3628
    %v3667 = vpop.f32.mrb[0].mxu0
    %v3668 = vadd.f32 0.0, %v3667
    %v3669 = vpop.f32.mrb[0].mxu0
    %v3670 = vpop.f32.mrb[0].mxu0
    %v3671 = vpop.f32.mrb[0].mxu0
    %3672 = vdwg.mxu0
    %v3674 = vsel %vm1317, %v3350, 0
    %v3677 = vsel %vm1417, %v2870, 0
    %3679 = vmatprep.subr.bf16.mxu0 0
    %3680 = vmatpush1.bf16.msra.mxu0 %v3677
    %3681 = vmatprep.subr.bf16.mxu0 0
    %3682 = vmatpush1.bf16.msra.mxu0 0
    %3683 = vmatprep.subr.bf16.mxu0 0
    %3684 = vmatpush1.bf16.msra.mxu0 0
    %3685 = vmatprep.subr.bf16.mxu0 0
    %3686 = vmatpush1.bf16.msra.mxu0 0
    %3687 = vmatprep.subr.bf16.mxu0 0
    %3688 = vmatpush1.bf16.msra.mxu0 0
    %3689 = vmatprep.subr.bf16.mxu0 0
    %3690 = vmatpush1.bf16.msra.mxu0 0
    %3691 = vmatprep.subr.bf16.mxu0 0
    %3692 = vmatpush1.bf16.msra.mxu0 0
    %3693 = vmatprep.subr.bf16.mxu0 0
    %3694 = vmatpush1.bf16.msra.mxu0 0
    %3695 = vmatprep.subr.bf16.mxu0 0
    %3696 = vmatpush1.bf16.msra.mxu0 0
    %3697 = vmatprep.subr.bf16.mxu0 0
    %3698 = vmatpush1.bf16.msra.mxu0 0
    %3699 = vmatprep.subr.bf16.mxu0 0
    %3700 = vmatpush1.bf16.msra.mxu0 0
    %3701 = vmatprep.subr.bf16.mxu0 0
    %3702 = vmatpush1.bf16.msra.mxu0 0
    %3703 = vmatprep.subr.bf16.mxu0 0
    %3704 = vmatpush1.bf16.msra.mxu0 0
    %3705 = vmatprep.subr.bf16.mxu0 0
    %3706 = vmatpush1.bf16.msra.mxu0 0
    %3707 = vmatprep.subr.bf16.mxu0 0
    %3708 = vmatpush1.bf16.msra.mxu0 0
    %3709 = vmatprep.subr.bf16.mxu0 0
    %3710 = vmatpush1.bf16.msra.mxu0 0
    %3711 = vmatprep.mubr.bf16.mxu0 0
    %3712 = vmatmul.mubr.bf16.gmra.mrb[0].mxu0 %v3674
    %v3713 = vpop.f32.mrb[0].mxu0
    %v3714 = vadd.f32 0.0, %v3713
    %v3715 = vpop.f32.mrb[0].mxu0
    %v3716 = vpop.f32.mrb[0].mxu0
    %v3717 = vpop.f32.mrb[0].mxu0
    %3718 = vdwg.mxu0
    %v3719 = vpack.c.bf16 %v3392, %v3392
    %v3720 = vpack.c.bf16 %v3438, %v3438
    %v3721 = vpack.c.bf16 %v3484, %v3484
    %v3722 = vpack.c.bf16 %v3530, %v3530
    %v3723 = vpack.c.bf16 %v3576, %v3576
    %v3724 = vpack.c.bf16 %v3622, %v3622
    %v3725 = vpack.c.bf16 %v3668, %v3668
    %v3726 = vpack.c.bf16 %v3714, %v3714
    %v3729 = vunpack.c.l.b16 %v3721
    %v3730 = vunpack.c.l.b16 %v3722
    %v3731 = vpack.c.b16 %v3730, %v3729
    %v3736 = vunpack.c.l.b16 %v2511
    %v3737 = vunpack.c.l.b16 %v2512
    %v3738 = vunpack.c.l.b16 %v2513
    %v3739 = vunpack.c.l.b16 %v2514
    %v3740 = vpack.c.b16 %v3737, %v3736
    %v3741 = vpack.c.b16 %v3739, %v3738
    %v3745 = vsel %vm367, %v3731, 0
    %3747 = vmatprep.subr.bf16.mxu0 0
    %3748 = vmatpush1.bf16.msra.mxu0 %v3740
    %3749 = vmatprep.subr.bf16.mxu0 0
    %3750 = vmatpush1.bf16.msra.mxu0 %v3741
    %3751 = vmatprep.subr.bf16.mxu0 0
    %3752 = vmatpush1.bf16.msra.mxu0 0
    %3753 = vmatprep.subr.bf16.mxu0 0
    %3754 = vmatpush1.bf16.msra.mxu0 0
    %3755 = vmatprep.subr.bf16.mxu0 0
    %3756 = vmatpush1.bf16.msra.mxu0 0
    %3757 = vmatprep.subr.bf16.mxu0 0
    %3758 = vmatpush1.bf16.msra.mxu0 0
    %3759 = vmatprep.subr.bf16.mxu0 0
    %3760 = vmatpush1.bf16.msra.mxu0 0
    %3761 = vmatprep.subr.bf16.mxu0 0
    %3762 = vmatpush1.bf16.msra.mxu0 0
    %3763 = vmatprep.subr.bf16.mxu0 0
    %3764 = vmatpush1.bf16.msra.mxu0 0
    %3765 = vmatprep.subr.bf16.mxu0 0
    %3766 = vmatpush1.bf16.msra.mxu0 0
    %3767 = vmatprep.subr.bf16.mxu0 0
    %3768 = vmatpush1.bf16.msra.mxu0 0
    %3769 = vmatprep.subr.bf16.mxu0 0
    %3770 = vmatpush1.bf16.msra.mxu0 0
    %3771 = vmatprep.subr.bf16.mxu0 0
    %3772 = vmatpush1.bf16.msra.mxu0 0
    %3773 = vmatprep.subr.bf16.mxu0 0
    %3774 = vmatpush1.bf16.msra.mxu0 0
    %3775 = vmatprep.subr.bf16.mxu0 0
    %3776 = vmatpush1.bf16.msra.mxu0 0
    %3777 = vmatprep.subr.bf16.mxu0 0
    %3778 = vmatpush1.bf16.msra.mxu0 0
    %3779 = vmatprep.mubr.bf16.mxu0 0
    %3780 = vmatmul.mubr.bf16.gmra.mrb[0].mxu0 %v3745
    %v3781 = vpop.f32.mrb[0].mxu0
    %v3782 = vadd.f32 0.0, %v3781
    %v3783 = vpop.f32.mrb[0].mxu0
    %v3784 = vpop.f32.mrb[0].mxu0
    %v3785 = vadd.f32 0.0, %v3784
    %v3786 = vpop.f32.mrb[0].mxu0
    %3787 = vdwg.mxu0
    %v3790 = vunpack.c.l.b16 %v3719
    %v3791 = vunpack.c.l.b16 %v3720
    %v3792 = vpack.c.b16 %v3791, %v3790
    %v3797 = vunpack.c.l.b16 %v2507
    %v3798 = vunpack.c.l.b16 %v2508
    %v3799 = vunpack.c.l.b16 %v2509
    %v3800 = vunpack.c.l.b16 %v2510
    %v3801 = vpack.c.b16 %v3798, %v3797
    %v3802 = vpack.c.b16 %v3800, %v3799
    %v3806 = vsel %vm367, %v3792, 0
    %3808 = vmatprep.subr.bf16.mxu0 0
    %3809 = vmatpush1.bf16.msra.mxu0 %v3801
    %3810 = vmatprep.subr.bf16.mxu0 0
    %3811 = vmatpush1.bf16.msra.mxu0 %v3802
    %3812 = vmatprep.subr.bf16.mxu0 0
    %3813 = vmatpush1.bf16.msra.mxu0 0
    %3814 = vmatprep.subr.bf16.mxu0 0
    %3815 = vmatpush1.bf16.msra.mxu0 0
    %3816 = vmatprep.subr.bf16.mxu0 0
    %3817 = vmatpush1.bf16.msra.mxu0 0
    %3818 = vmatprep.subr.bf16.mxu0 0
    %3819 = vmatpush1.bf16.msra.mxu0 0
    %3820 = vmatprep.subr.bf16.mxu0 0
    %3821 = vmatpush1.bf16.msra.mxu0 0
    %3822 = vmatprep.subr.bf16.mxu0 0
    %3823 = vmatpush1.bf16.msra.mxu0 0
    %3824 = vmatprep.subr.bf16.mxu0 0
    %3825 = vmatpush1.bf16.msra.mxu0 0
    %3826 = vmatprep.subr.bf16.mxu0 0
    %3827 = vmatpush1.bf16.msra.mxu0 0
    %3828 = vmatprep.subr.bf16.mxu0 0
    %3829 = vmatpush1.bf16.msra.mxu0 0
    %3830 = vmatprep.subr.bf16.mxu0 0
    %3831 = vmatpush1.bf16.msra.mxu0 0
    %3832 = vmatprep.subr.bf16.mxu0 0
    %3833 = vmatpush1.bf16.msra.mxu0 0
    %3834 = vmatprep.subr.bf16.mxu0 0
    %3835 = vmatpush1.bf16.msra.mxu0 0
    %3836 = vmatprep.subr.bf16.mxu0 0
    %3837 = vmatpush1.bf16.msra.mxu0 0
    %3838 = vmatprep.subr.bf16.mxu0 0
    %3839 = vmatpush1.bf16.msra.mxu0 0
    %3840 = vmatprep.mubr.bf16.mxu0 0
    %3841 = vmatmul.mubr.bf16.gmra.mrb[0].mxu0 %v3806
    %v3842 = vpop.f32.mrb[0].mxu0
    %v3843 = vadd.f32 %v3782, %v3842
    %v3844 = vpop.f32.mrb[0].mxu0
    %v3845 = vpop.f32.mrb[0].mxu0
    %v3846 = vadd.f32 %v3785, %v3845
    %v3847 = vpop.f32.mrb[0].mxu0
    %3848 = vdwg.mxu0
    %v3851 = vunpack.c.l.b16 %v3723
    %v3852 = vunpack.c.l.b16 %v3724
    %v3853 = vpack.c.b16 %v3852, %v3851
    %v3858 = vunpack.c.l.b16 %v2515
    %v3859 = vunpack.c.l.b16 %v2516
    %v3860 = vunpack.c.l.b16 %v2517
    %v3861 = vunpack.c.l.b16 %v2518
    %v3862 = vpack.c.b16 %v3859, %v3858
    %v3863 = vpack.c.b16 %v3861, %v3860
    %v3867 = vsel %vm367, %v3853, 0
    %3869 = vmatprep.subr.bf16.mxu0 0
    %3870 = vmatpush1.bf16.msra.mxu0 %v3862
    %3871 = vmatprep.subr.bf16.mxu0 0
    %3872 = vmatpush1.bf16.msra.mxu0 %v3863
    %3873 = vmatprep.subr.bf16.mxu0 0
    %3874 = vmatpush1.bf16.msra.mxu0 0
    %3875 = vmatprep.subr.bf16.mxu0 0
    %3876 = vmatpush1.bf16.msra.mxu0 0
    %3877 = vmatprep.subr.bf16.mxu0 0
    %3878 = vmatpush1.bf16.msra.mxu0 0
    %3879 = vmatprep.subr.bf16.mxu0 0
    %3880 = vmatpush1.bf16.msra.mxu0 0
    %3881 = vmatprep.subr.bf16.mxu0 0
    %3882 = vmatpush1.bf16.msra.mxu0 0
    %3883 = vmatprep.subr.bf16.mxu0 0
    %3884 = vmatpush1.bf16.msra.mxu0 0
    %3885 = vmatprep.subr.bf16.mxu0 0
    %3886 = vmatpush1.bf16.msra.mxu0 0
    %3887 = vmatprep.subr.bf16.mxu0 0
    %3888 = vmatpush1.bf16.msra.mxu0 0
    %3889 = vmatprep.subr.bf16.mxu0 0
    %3890 = vmatpush1.bf16.msra.mxu0 0
    %3891 = vmatprep.subr.bf16.mxu0 0
    %3892 = vmatpush1.bf16.msra.mxu0 0
    %3893 = vmatprep.subr.bf16.mxu0 0
    %3894 = vmatpush1.bf16.msra.mxu0 0
    %3895 = vmatprep.subr.bf16.mxu0 0
    %3896 = vmatpush1.bf16.msra.mxu0 0
    %3897 = vmatprep.subr.bf16.mxu0 0
    %3898 = vmatpush1.bf16.msra.mxu0 0
    %3899 = vmatprep.subr.bf16.mxu0 0
    %3900 = vmatpush1.bf16.msra.mxu0 0
    %3901 = vmatprep.mubr.bf16.mxu0 0
    %3902 = vmatmul.mubr.bf16.gmra.mrb[0].mxu0 %v3867
    %v3903 = vpop.f32.mrb[0].mxu0
    %v3904 = vadd.f32 0.0, %v3903
    %v3905 = vpop.f32.mrb[0].mxu0
    %v3906 = vpop.f32.mrb[0].mxu0
    %v3907 = vadd.f32 0.0, %v3906
    %v3908 = vpop.f32.mrb[0].mxu0
    %3909 = vdwg.mxu0
    %v3910 = vadd.f32 %v3843, %v3904
    %v3911 = vadd.f32 %v3846, %v3907
    %v3914 = vunpack.c.l.b16 %v3725
    %v3915 = vunpack.c.l.b16 %v3726
    %v3916 = vpack.c.b16 %v3915, %v3914
    %v3921 = vunpack.c.l.b16 %v2519
    %v3922 = vunpack.c.l.b16 %v2520
    %v3923 = vunpack.c.l.b16 %v2521
    %v3924 = vunpack.c.l.b16 %v2522
    %v3925 = vpack.c.b16 %v3922, %v3921
    %v3926 = vpack.c.b16 %v3924, %v3923
    %v3930 = vsel %vm367, %v3916, 0
    %3932 = vmatprep.subr.bf16.mxu0 0
    %3933 = vmatpush1.bf16.msra.mxu0 %v3925
    %3934 = vmatprep.subr.bf16.mxu0 0
    %3935 = vmatpush1.bf16.msra.mxu0 %v3926
    %3936 = vmatprep.subr.bf16.mxu0 0
    %3937 = vmatpush1.bf16.msra.mxu0 0
    %3938 = vmatprep.subr.bf16.mxu0 0
    %3939 = vmatpush1.bf16.msra.mxu0 0
    %3940 = vmatprep.subr.bf16.mxu0 0
    %3941 = vmatpush1.bf16.msra.mxu0 0
    %3942 = vmatprep.subr.bf16.mxu0 0
    %3943 = vmatpush1.bf16.msra.mxu0 0
    %3944 = vmatprep.subr.bf16.mxu0 0
    %3945 = vmatpush1.bf16.msra.mxu0 0
    %3946 = vmatprep.subr.bf16.mxu0 0
    %3947 = vmatpush1.bf16.msra.mxu0 0
    %3948 = vmatprep.subr.bf16.mxu0 0
    %3949 = vmatpush1.bf16.msra.mxu0 0
    %3950 = vmatprep.subr.bf16.mxu0 0
    %3951 = vmatpush1.bf16.msra.mxu0 0
    %3952 = vmatprep.subr.bf16.mxu0 0
    %3953 = vmatpush1.bf16.msra.mxu0 0
    %3954 = vmatprep.subr.bf16.mxu0 0
    %3955 = vmatpush1.bf16.msra.mxu0 0
    %3956 = vmatprep.subr.bf16.mxu0 0
    %3957 = vmatpush1.bf16.msra.mxu0 0
    %3958 = vmatprep.subr.bf16.mxu0 0
    %3959 = vmatpush1.bf16.msra.mxu0 0
    %3960 = vmatprep.subr.bf16.mxu0 0
    %3961 = vmatpush1.bf16.msra.mxu0 0
    %3962 = vmatprep.subr.bf16.mxu0 0
    %3963 = vmatpush1.bf16.msra.mxu0 0
    %3964 = vmatprep.mubr.bf16.mxu0 0
    %3965 = vmatmul.mubr.bf16.gmra.mrb[0].mxu0 %v3930
    %v3966 = vpop.f32.mrb[0].mxu0
    %v3967 = vadd.f32 0.0, %v3966
    %v3968 = vpop.f32.mrb[0].mxu0
    %v3969 = vpop.f32.mrb[0].mxu0
    %v3970 = vadd.f32 0.0, %v3969
    %v3971 = vpop.f32.mrb[0].mxu0
    %3972 = vdwg.mxu0
    %v3973 = vadd.f32 %v3910, %v3967
    %v3974 = vadd.f32 %v3911, %v3970
    %s3975 = scalar_lea.vmem [#allocation13], 1
    %v3976 = vld [vmem:[%s3975] sm:$0x1]
    %v3978 = vlaneseq
    %v3979 = vshrl.u32 %v3978, 7
    %v3980 = vsub.s32 0, %v3979
    %v3981 = vrot.slane %v3976, %v3980
    %v3983 = vadd.f32 %v3973, %v3981
    %v3984 = vadd.f32 %v3974, %v3981
    %v3985 = vadd.f32 %v3983, %v2504
    %v3986 = vadd.f32 %v3984, %v2505
    %s3987 = scalar_lea.vmem [#allocation14], 1
    %v3988 = vld [vmem:[%s3987] sm:$0x1]
    %s3989 = scalar_lea.vmem [#allocation16], 1
    %v3990 = vld [vmem:[%s3989] sm:$0x1]
    %3991 = vadd.xlane.f32.xlu0 %v3985
    %v3992 = vpop.xlane.xlu0 %3991
    %3993 = vadd.xlane.f32.xlu0 %v3986
    %v3994 = vpop.xlane.xlu0 %3993
    %v3995 = vmul.f32 %v3992, %v496
    %v3996 = vmul.f32 %v3994, %v496
    %v3997 = vmul.f32 %v3985, %v3985
    %v3998 = vmul.f32 %v3986, %v3986
    %3999 = vadd.xlane.f32.xlu0 %v3997
    %v4000 = vpop.xlane.xlu0 %3999
    %4001 = vadd.xlane.f32.xlu0 %v3998
    %v4002 = vpop.xlane.xlu0 %4001
    %v4003 = vmul.f32 %v4000, %v496
    %v4004 = vmul.f32 %v4002, %v496
    %v4005 = vmul.f32 %v3995, %v3995
    %v4006 = vmul.f32 %v3996, %v3996
    %v4007 = vsub.f32 %v4003, %v4005
    %v4008 = vsub.f32 %v4004, %v4006
    %v4009 = vsub.f32 %v3985, %v3995
    %v4010 = vsub.f32 %v3986, %v3996
    %v4011 = vadd.f32 %v4007, 1e-05
    %v4012 = vadd.f32 %v4008, 1e-05
    %v4013 = vrsqrt.pop %v4011
    %v4014 = vrsqrt.pop %v4012
    %v4015 = vmul.f32 %v4009, %v4013
    %v4016 = vmul.f32 %v4010, %v4014
    %v4018 = vlaneseq
    %v4019 = vshrl.u32 %v4018, 7
    %v4020 = vsub.s32 0, %v4019
    %v4021 = vrot.slane %v3988, %v4020
    %v4023 = vmul.f32 %v4015, %v4021
    %v4024 = vmul.f32 %v4016, %v4021
    %v4026 = vlaneseq
    %v4027 = vshrl.u32 %v4026, 7
    %v4028 = vsub.s32 0, %v4027
    %v4029 = vrot.slane %v3990, %v4028
    %v4031 = vadd.f32 %v4023, %v4029
    %v4032 = vadd.f32 %v4024, %v4029
    %v4033 = vpack.c.bf16 %v4032, %v4031
    %s4034 = scalar_lea.vmem [#allocation17], 128
    %v4035 = vld [vmem:[%s4034] sm:$0xff]
    %v4036 = vld [vmem:[%s4034 + $0x8] sm:$0xff]
    %v4037 = vld [vmem:[%s4034 + $0x10] sm:$0xff]
    %v4038 = vld [vmem:[%s4034 + $0x18] sm:$0xff]
    %v4039 = vld [vmem:[%s4034 + $0x20] sm:$0xff]
    %v4040 = vld [vmem:[%s4034 + $0x28] sm:$0xff]
    %v4041 = vld [vmem:[%s4034 + $0x30] sm:$0xff]
    %v4042 = vld [vmem:[%s4034 + $0x38] sm:$0xff]
    %v4043 = vld [vmem:[%s4034 + $0x40] sm:$0xff]
    %v4044 = vld [vmem:[%s4034 + $0x48] sm:$0xff]
    %v4045 = vld [vmem:[%s4034 + $0x50] sm:$0xff]
    %v4046 = vld [vmem:[%s4034 + $0x58] sm:$0xff]
    %v4047 = vld [vmem:[%s4034 + $0x60] sm:$0xff]
    %v4048 = vld [vmem:[%s4034 + $0x68] sm:$0xff]
    %v4049 = vld [vmem:[%s4034 + $0x70] sm:$0xff]
    %v4050 = vld [vmem:[%s4034 + $0x78] sm:$0xff]
    %s4051 = scalar_lea.vmem [#allocation19], 2
    %v4052 = vld [vmem:[%s4051] sm:$0x3]
    %v4054 = vlaneseq
    %v4055 = vshrl.u32 %v4054, 7
    %v4056 = vsub.s32 0, %v4055
    %v4057 = vrot.slane %v4052, %v4056
    %v4058 = vlaneseq
    %v4059 = vshrl.u32 %v4058, 7
    %v4060 = vsub.s32 1, %v4059
    %v4061 = vrot.slane %v4052, %v4060
    %v4080 = vunpack.c.l.b16 %v4035
    %v4081 = vunpack.c.h.b16 %v4035
    %v4082 = vunpack.c.l.b16 %v4036
    %v4083 = vunpack.c.h.b16 %v4036
    %v4084 = vunpack.c.l.b16 %v4037
    %v4085 = vunpack.c.h.b16 %v4037
    %v4086 = vunpack.c.l.b16 %v4038
    %v4087 = vunpack.c.h.b16 %v4038
    %v4088 = vunpack.c.l.b16 %v4039
    %v4089 = vunpack.c.h.b16 %v4039
    %v4090 = vunpack.c.l.b16 %v4040
    %v4091 = vunpack.c.h.b16 %v4040
    %v4092 = vunpack.c.l.b16 %v4041
    %v4093 = vunpack.c.h.b16 %v4041
    %v4094 = vunpack.c.l.b16 %v4042
    %v4095 = vunpack.c.h.b16 %v4042
    %v4096 = vunpack.c.l.b16 %v4043
    %v4097 = vunpack.c.h.b16 %v4043
    %v4098 = vunpack.c.l.b16 %v4044
    %v4099 = vunpack.c.h.b16 %v4044
    %v4100 = vunpack.c.l.b16 %v4045
    %v4101 = vunpack.c.h.b16 %v4045
    %v4102 = vunpack.c.l.b16 %v4046
    %v4103 = vunpack.c.h.b16 %v4046
    %v4104 = vunpack.c.l.b16 %v4047
    %v4105 = vunpack.c.h.b16 %v4047
    %v4106 = vunpack.c.l.b16 %v4048
    %v4107 = vunpack.c.h.b16 %v4048
    %v4108 = vunpack.c.l.b16 %v4049
    %v4109 = vunpack.c.h.b16 %v4049
    %v4110 = vunpack.c.l.b16 %v4050
    %v4111 = vunpack.c.h.b16 %v4050
    %v4112 = vpack.c.b16 %v4082, %v4080
    %v4113 = vpack.c.b16 %v4083, %v4081
    %v4114 = vpack.c.b16 %v4086, %v4084
    %v4115 = vpack.c.b16 %v4087, %v4085
    %v4116 = vpack.c.b16 %v4090, %v4088
    %v4117 = vpack.c.b16 %v4091, %v4089
    %v4118 = vpack.c.b16 %v4094, %v4092
    %v4119 = vpack.c.b16 %v4095, %v4093
    %v4120 = vpack.c.b16 %v4098, %v4096
    %v4121 = vpack.c.b16 %v4099, %v4097
    %v4122 = vpack.c.b16 %v4102, %v4100
    %v4123 = vpack.c.b16 %v4103, %v4101
    %v4124 = vpack.c.b16 %v4106, %v4104
    %v4125 = vpack.c.b16 %v4107, %v4105
    %v4126 = vpack.c.b16 %v4110, %v4108
    %v4127 = vpack.c.b16 %v4111, %v4109
    %4144 = vmatprep.subr.bf16.mxu0 %v4113
    %4145 = vmatpush1.bf16.msra.mxu0 %v4112
    %4146 = vmatprep.subr.bf16.mxu0 %v4115
    %4147 = vmatpush1.bf16.msra.mxu0 %v4114
    %4148 = vmatprep.subr.bf16.mxu0 %v4117
    %4149 = vmatpush1.bf16.msra.mxu0 %v4116
    %4150 = vmatprep.subr.bf16.mxu0 %v4119
    %4151 = vmatpush1.bf16.msra.mxu0 %v4118
    %4152 = vmatprep.subr.bf16.mxu0 %v4121
    %4153 = vmatpush1.bf16.msra.mxu0 %v4120
    %4154 = vmatprep.subr.bf16.mxu0 %v4123
    %4155 = vmatpush1.bf16.msra.mxu0 %v4122
    %4156 = vmatprep.subr.bf16.mxu0 %v4125
    %4157 = vmatpush1.bf16.msra.mxu0 %v4124
    %4158 = vmatprep.subr.bf16.mxu0 %v4127
    %4159 = vmatpush1.bf16.msra.mxu0 %v4126
    %4160 = vmatprep.subr.bf16.mxu0 0
    %4161 = vmatpush1.bf16.msra.mxu0 0
    %4162 = vmatprep.subr.bf16.mxu0 0
    %4163 = vmatpush1.bf16.msra.mxu0 0
    %4164 = vmatprep.subr.bf16.mxu0 0
    %4165 = vmatpush1.bf16.msra.mxu0 0
    %4166 = vmatprep.subr.bf16.mxu0 0
    %4167 = vmatpush1.bf16.msra.mxu0 0
    %4168 = vmatprep.subr.bf16.mxu0 0
    %4169 = vmatpush1.bf16.msra.mxu0 0
    %4170 = vmatprep.subr.bf16.mxu0 0
    %4171 = vmatpush1.bf16.msra.mxu0 0
    %4172 = vmatprep.subr.bf16.mxu0 0
    %4173 = vmatpush1.bf16.msra.mxu0 0
    %4174 = vmatprep.subr.bf16.mxu0 0
    %4175 = vmatpush1.bf16.msra.mxu0 0
    %4176 = vmatprep.mubr.bf16.mxu0 0
    %4177 = vmatmul.mubr.bf16.gmra.mrb[0].mxu0 %v4033
    %v4178 = vpop.f32.mrb[0].mxu0
    %v4179 = vadd.f32 %v4057, %v4178
    %v4180 = vpop.f32.mrb[0].mxu0
    %v4181 = vadd.f32 %v4061, %v4180
    %v4182 = vpop.f32.mrb[0].mxu0
    %v4183 = vadd.f32 %v4057, %v4182
    %v4184 = vpop.f32.mrb[0].mxu0
    %v4185 = vadd.f32 %v4061, %v4184
    %4186 = vdwg.mxu0
    %v4187 = vmul.f32 %v4179, %v4179
    %v4188 = vmul.f32 %v4181, %v4181
    %v4189 = vmul.f32 %v4183, %v4183
    %v4190 = vmul.f32 %v4185, %v4185
    %v4191 = vmul.f32 %v4179, %v4187
    %v4192 = vmul.f32 %v4181, %v4188
    %v4193 = vmul.f32 %v4183, %v4189
    %v4194 = vmul.f32 %v4185, %v4190
    %v4195 = vmul.f32 %v4191, 0.044715
    %v4196 = vmul.f32 %v4192, 0.044715
    %v4197 = vmul.f32 %v4193, 0.044715
    %v4198 = vmul.f32 %v4194, 0.044715
    %v4199 = vadd.f32 %v4179, %v4195
    %v4200 = vadd.f32 %v4181, %v4196
    %v4201 = vadd.f32 %v4183, %v4197
    %v4202 = vadd.f32 %v4185, %v4198
    %v4203 = vmul.f32 %v4199, 0.7978846
    %v4204 = vmul.f32 %v4200, 0.7978846
    %v4205 = vmul.f32 %v4201, 0.7978846
    %v4206 = vmul.f32 %v4202, 0.7978846
    %v4207 = vtanh.pop %v4203
    %v4208 = vtanh.pop %v4204
    %v4209 = vtanh.pop %v4205
    %v4210 = vtanh.pop %v4206
    %v4211 = vadd.f32 %v4207, 1.0
    %v4212 = vadd.f32 %v4208, 1.0
    %v4213 = vadd.f32 %v4209, 1.0
    %v4214 = vadd.f32 %v4210, 1.0
    %v4215 = vmul.f32 %v4211, 0.5
    %v4216 = vmul.f32 %v4212, 0.5
    %v4217 = vmul.f32 %v4213, 0.5
    %v4218 = vmul.f32 %v4214, 0.5
    %v4219 = vmul.f32 %v4179, %v4215
    %v4220 = vmul.f32 %v4181, %v4216
    %v4221 = vmul.f32 %v4183, %v4217
    %v4222 = vmul.f32 %v4185, %v4218
    %v4223 = vpack.c.bf16 %v4221, %v4219
    %v4224 = vpack.c.bf16 %v4222, %v4220
    %s4225 = scalar_lea.vmem [#allocation20], 128
    %v4226 = vld [vmem:[%s4225] sm:$0xf]
    %v4227 = vld [vmem:[%s4225 + $0x4] sm:$0xf]
    %v4228 = vld [vmem:[%s4225 + $0x8] sm:$0xf]
    %v4229 = vld [vmem:[%s4225 + $0xc] sm:$0xf]
    %v4230 = vld [vmem:[%s4225 + $0x10] sm:$0xf]
    %v4231 = vld [vmem:[%s4225 + $0x14] sm:$0xf]
    %v4232 = vld [vmem:[%s4225 + $0x18] sm:$0xf]
    %v4233 = vld [vmem:[%s4225 + $0x1c] sm:$0xf]
    %v4234 = vld [vmem:[%s4225 + $0x20] sm:$0xf]
    %v4235 = vld [vmem:[%s4225 + $0x24] sm:$0xf]
    %v4236 = vld [vmem:[%s4225 + $0x28] sm:$0xf]
    %v4237 = vld [vmem:[%s4225 + $0x2c] sm:$0xf]
    %v4238 = vld [vmem:[%s4225 + $0x30] sm:$0xf]
    %v4239 = vld [vmem:[%s4225 + $0x34] sm:$0xf]
    %v4240 = vld [vmem:[%s4225 + $0x38] sm:$0xf]
    %v4241 = vld [vmem:[%s4225 + $0x3c] sm:$0xf]
    %v4242 = vld [vmem:[%s4225 + $0x40] sm:$0xf]
    %v4243 = vld [vmem:[%s4225 + $0x44] sm:$0xf]
    %v4244 = vld [vmem:[%s4225 + $0x48] sm:$0xf]
    %v4245 = vld [vmem:[%s4225 + $0x4c] sm:$0xf]
    %v4246 = vld [vmem:[%s4225 + $0x50] sm:$0xf]
    %v4247 = vld [vmem:[%s4225 + $0x54] sm:$0xf]
    %v4248 = vld [vmem:[%s4225 + $0x58] sm:$0xf]
    %v4249 = vld [vmem:[%s4225 + $0x5c] sm:$0xf]
    %v4250 = vld [vmem:[%s4225 + $0x60] sm:$0xf]
    %v4251 = vld [vmem:[%s4225 + $0x64] sm:$0xf]
    %v4252 = vld [vmem:[%s4225 + $0x68] sm:$0xf]
    %v4253 = vld [vmem:[%s4225 + $0x6c] sm:$0xf]
    %v4254 = vld [vmem:[%s4225 + $0x70] sm:$0xf]
    %v4255 = vld [vmem:[%s4225 + $0x74] sm:$0xf]
    %v4256 = vld [vmem:[%s4225 + $0x78] sm:$0xf]
    %v4257 = vld [vmem:[%s4225 + $0x7c] sm:$0xf]
    %s4258 = scalar_lea.vmem [#allocation22], 1
    %v4259 = vld [vmem:[%s4258] sm:$0x1]
    %v4261 = vlaneseq
    %v4262 = vshrl.u32 %v4261, 7
    %v4263 = vsub.s32 0, %v4262
    %v4264 = vrot.slane %v4259, %v4263
    %v4298 = vunpack.c.l.b16 %v4226
    %v4299 = vunpack.c.l.b16 %v4227
    %v4300 = vunpack.c.l.b16 %v4228
    %v4301 = vunpack.c.l.b16 %v4229
    %v4302 = vunpack.c.l.b16 %v4230
    %v4303 = vunpack.c.l.b16 %v4231
    %v4304 = vunpack.c.l.b16 %v4232
    %v4305 = vunpack.c.l.b16 %v4233
    %v4306 = vunpack.c.l.b16 %v4234
    %v4307 = vunpack.c.l.b16 %v4235
    %v4308 = vunpack.c.l.b16 %v4236
    %v4309 = vunpack.c.l.b16 %v4237
    %v4310 = vunpack.c.l.b16 %v4238
    %v4311 = vunpack.c.l.b16 %v4239
    %v4312 = vunpack.c.l.b16 %v4240
    %v4313 = vunpack.c.l.b16 %v4241
    %v4314 = vunpack.c.l.b16 %v4242
    %v4315 = vunpack.c.l.b16 %v4243
    %v4316 = vunpack.c.l.b16 %v4244
    %v4317 = vunpack.c.l.b16 %v4245
    %v4318 = vunpack.c.l.b16 %v4246
    %v4319 = vunpack.c.l.b16 %v4247
    %v4320 = vunpack.c.l.b16 %v4248
    %v4321 = vunpack.c.l.b16 %v4249
    %v4322 = vunpack.c.l.b16 %v4250
    %v4323 = vunpack.c.l.b16 %v4251
    %v4324 = vunpack.c.l.b16 %v4252
    %v4325 = vunpack.c.l.b16 %v4253
    %v4326 = vunpack.c.l.b16 %v4254
    %v4327 = vunpack.c.l.b16 %v4255
    %v4328 = vunpack.c.l.b16 %v4256
    %v4329 = vunpack.c.l.b16 %v4257
    %v4330 = vpack.c.b16 %v4299, %v4298
    %v4331 = vpack.c.b16 %v4301, %v4300
    %v4332 = vpack.c.b16 %v4303, %v4302
    %v4333 = vpack.c.b16 %v4305, %v4304
    %v4334 = vpack.c.b16 %v4307, %v4306
    %v4335 = vpack.c.b16 %v4309, %v4308
    %v4336 = vpack.c.b16 %v4311, %v4310
    %v4337 = vpack.c.b16 %v4313, %v4312
    %v4338 = vpack.c.b16 %v4315, %v4314
    %v4339 = vpack.c.b16 %v4317, %v4316
    %v4340 = vpack.c.b16 %v4319, %v4318
    %v4341 = vpack.c.b16 %v4321, %v4320
    %v4342 = vpack.c.b16 %v4323, %v4322
    %v4343 = vpack.c.b16 %v4325, %v4324
    %v4344 = vpack.c.b16 %v4327, %v4326
    %v4345 = vpack.c.b16 %v4329, %v4328
    %4362 = vmatprep.subr.bf16.mxu0 0
    %4363 = vmatpush1.bf16.msra.mxu0 %v4330
    %4364 = vmatprep.subr.bf16.mxu0 0
    %4365 = vmatpush1.bf16.msra.mxu0 %v4331
    %4366 = vmatprep.subr.bf16.mxu0 0
    %4367 = vmatpush1.bf16.msra.mxu0 %v4332
    %4368 = vmatprep.subr.bf16.mxu0 0
    %4369 = vmatpush1.bf16.msra.mxu0 %v4333
    %4370 = vmatprep.subr.bf16.mxu0 0
    %4371 = vmatpush1.bf16.msra.mxu0 %v4334
    %4372 = vmatprep.subr.bf16.mxu0 0
    %4373 = vmatpush1.bf16.msra.mxu0 %v4335
    %4374 = vmatprep.subr.bf16.mxu0 0
    %4375 = vmatpush1.bf16.msra.mxu0 %v4336
    %4376 = vmatprep.subr.bf16.mxu0 0
    %4377 = vmatpush1.bf16.msra.mxu0 %v4337
    %4378 = vmatprep.subr.bf16.mxu0 0
    %4379 = vmatpush1.bf16.msra.mxu0 %v4338
    %4380 = vmatprep.subr.bf16.mxu0 0
    %4381 = vmatpush1.bf16.msra.mxu0 %v4339
    %4382 = vmatprep.subr.bf16.mxu0 0
    %4383 = vmatpush1.bf16.msra.mxu0 %v4340
    %4384 = vmatprep.subr.bf16.mxu0 0
    %4385 = vmatpush1.bf16.msra.mxu0 %v4341
    %4386 = vmatprep.subr.bf16.mxu0 0
    %4387 = vmatpush1.bf16.msra.mxu0 %v4342
    %4388 = vmatprep.subr.bf16.mxu0 0
    %4389 = vmatpush1.bf16.msra.mxu0 %v4343
    %4390 = vmatprep.subr.bf16.mxu0 0
    %4391 = vmatpush1.bf16.msra.mxu0 %v4344
    %4392 = vmatprep.subr.bf16.mxu0 0
    %4393 = vmatpush1.bf16.msra.mxu0 %v4345
    %4394 = vmatprep.mubr.bf16.mxu0 %v4224
    %4395 = vmatmul.mubr.bf16.gmra.mrb[0].mxu0 %v4223
    %v4396 = vpop.f32.mrb[0].mxu0
    %v4397 = vadd.f32 %v4264, %v4396
    %v4398 = vpop.f32.mrb[0].mxu0
    %v4399 = vpop.f32.mrb[0].mxu0
    %v4400 = vadd.f32 %v4264, %v4399
    %v4401 = vpop.f32.mrb[0].mxu0
    %4402 = vdwg.mxu0
    %v4403 = vadd.f32 %v4397, %v4031
    %v4404 = vadd.f32 %v4400, %v4032
    %s4405 = scalar_lea.vmem [#allocation23], 1
    %v4406 = vld [vmem:[%s4405] sm:$0x1]
    %s4407 = scalar_lea.vmem [#allocation25], 1
    %v4408 = vld [vmem:[%s4407] sm:$0x1]
    %4409 = vadd.xlane.f32.xlu0 %v4403
    %v4410 = vpop.xlane.xlu0 %4409
    %4411 = vadd.xlane.f32.xlu0 %v4404
    %v4412 = vpop.xlane.xlu0 %4411
    %v4413 = vmul.f32 %v4410, %v496
    %v4414 = vmul.f32 %v4412, %v496
    %v4415 = vmul.f32 %v4403, %v4403
    %v4416 = vmul.f32 %v4404, %v4404
    %4417 = vadd.xlane.f32.xlu0 %v4415
    %v4418 = vpop.xlane.xlu0 %4417
    %4419 = vadd.xlane.f32.xlu0 %v4416
    %v4420 = vpop.xlane.xlu0 %4419
    %v4421 = vmul.f32 %v4418, %v496
    %v4422 = vmul.f32 %v4420, %v496
    %v4423 = vmul.f32 %v4413, %v4413
    %v4424 = vmul.f32 %v4414, %v4414
    %v4425 = vsub.f32 %v4421, %v4423
    %v4426 = vsub.f32 %v4422, %v4424
    %v4427 = vsub.f32 %v4403, %v4413
    %v4428 = vsub.f32 %v4404, %v4414
    %v4429 = vadd.f32 %v4425, 1e-05
    %v4430 = vadd.f32 %v4426, 1e-05
    %v4431 = vrsqrt.pop %v4429
    %v4432 = vrsqrt.pop %v4430
    %v4433 = vmul.f32 %v4427, %v4431
    %v4434 = vmul.f32 %v4428, %v4432
    %v4436 = vlaneseq
    %v4437 = vshrl.u32 %v4436, 7
    %v4438 = vsub.s32 0, %v4437
    %v4439 = vrot.slane %v4406, %v4438
    %v4441 = vmul.f32 %v4433, %v4439
    %v4442 = vmul.f32 %v4434, %v4439
    %v4444 = vlaneseq
    %v4445 = vshrl.u32 %v4444, 7
    %v4446 = vsub.s32 0, %v4445
    %v4447 = vrot.slane %v4408, %v4446
    %v4449 = vadd.f32 %v4441, %v4447
    %v4450 = vadd.f32 %v4442, %v4447
    %v4451 = vpack.c.bf16 %v4449, %v4449
    %v4452 = vpack.c.bf16 %v4450, %v4450
    %v4453 = vld [vmem:[%s20] sm:$0xf]
    %v4454 = vld [vmem:[%s20 + $0x4] sm:$0xf]
    %v4455 = vld [vmem:[%s20 + $0x8] sm:$0xf]
    %v4456 = vld [vmem:[%s20 + $0xc] sm:$0xf]
    %v4457 = vld [vmem:[%s20 + $0x10] sm:$0xf]
    %v4458 = vld [vmem:[%s20 + $0x14] sm:$0xf]
    %v4459 = vld [vmem:[%s20 + $0x18] sm:$0xf]
    %v4460 = vld [vmem:[%s20 + $0x1c] sm:$0xf]
    %v4461 = vld [vmem:[%s20 + $0x20] sm:$0xf]
    %v4462 = vld [vmem:[%s20 + $0x24] sm:$0xf]
    %v4463 = vld [vmem:[%s20 + $0x28] sm:$0xf]
    %v4464 = vld [vmem:[%s20 + $0x2c] sm:$0xf]
    %v4465 = vld [vmem:[%s20 + $0x30] sm:$0xf]
    %v4466 = vld [vmem:[%s20 + $0x34] sm:$0xf]
    %v4467 = vld [vmem:[%s20 + $0x38] sm:$0xf]
    %v4468 = vld [vmem:[%s20 + $0x3c] sm:$0xf]
    %v4469 = vld [vmem:[#allocation26] sm:$0x1]
    %v4471 = vlaneseq
    %v4472 = vshrl.u32 %v4471, 7
    %v4473 = vsub.s32 0, %v4472
    %v4474 = vrot.slane %v4469, %v4473
    %v4478 = vunpack.c.l.b16 %v4451
    %v4479 = vunpack.c.l.b16 %v4452
    %v4480 = vrot.slane %v4479, 7
    %vm4481 = vcmask 1041409
    %v4482 = vsel %vm4481, %v4480, %v4478
    %v4483 = vpack.c.b16 %v4482, %v4482
    %v4501 = vunpack.c.l.b16 %v4453
    %v4502 = vunpack.c.l.b16 %v4454
    %v4503 = vunpack.c.l.b16 %v4455
    %v4504 = vunpack.c.l.b16 %v4456
    %v4505 = vunpack.c.l.b16 %v4457
    %v4506 = vunpack.c.l.b16 %v4458
    %v4507 = vunpack.c.l.b16 %v4459
    %v4508 = vunpack.c.l.b16 %v4460
    %v4509 = vunpack.c.l.b16 %v4461
    %v4510 = vunpack.c.l.b16 %v4462
    %v4511 = vunpack.c.l.b16 %v4463
    %v4512 = vunpack.c.l.b16 %v4464
    %v4513 = vunpack.c.l.b16 %v4465
    %v4514 = vunpack.c.l.b16 %v4466
    %v4515 = vunpack.c.l.b16 %v4467
    %v4516 = vunpack.c.l.b16 %v4468
    %v4517 = vpack.c.b16 %v4502, %v4501
    %v4518 = vpack.c.b16 %v4504, %v4503
    %v4519 = vpack.c.b16 %v4506, %v4505
    %v4520 = vpack.c.b16 %v4508, %v4507
    %v4521 = vpack.c.b16 %v4510, %v4509
    %v4522 = vpack.c.b16 %v4512, %v4511
    %v4523 = vpack.c.b16 %v4514, %v4513
    %v4524 = vpack.c.b16 %v4516, %v4515
    %4533 = vmatprep.subr.bf16.mxu0 0
    %4534 = vmatpush1.bf16.msra.mxu0 %v4517
    %4535 = vmatprep.subr.bf16.mxu0 0
    %4536 = vmatpush1.bf16.msra.mxu0 %v4518
    %4537 = vmatprep.subr.bf16.mxu0 0
    %4538 = vmatpush1.bf16.msra.mxu0 %v4519
    %4539 = vmatprep.subr.bf16.mxu0 0
    %4540 = vmatpush1.bf16.msra.mxu0 %v4520
    %4541 = vmatprep.subr.bf16.mxu0 0
    %4542 = vmatpush1.bf16.msra.mxu0 %v4521
    %4543 = vmatprep.subr.bf16.mxu0 0
    %4544 = vmatpush1.bf16.msra.mxu0 %v4522
    %4545 = vmatprep.subr.bf16.mxu0 0
    %4546 = vmatpush1.bf16.msra.mxu0 %v4523
    %4547 = vmatprep.subr.bf16.mxu0 0
    %4548 = vmatpush1.bf16.msra.mxu0 %v4524
    %4549 = vmatprep.subr.bf16.mxu0 0
    %4550 = vmatpush1.bf16.msra.mxu0 0
    %4551 = vmatprep.subr.bf16.mxu0 0
    %4552 = vmatpush1.bf16.msra.mxu0 0
    %4553 = vmatprep.subr.bf16.mxu0 0
    %4554 = vmatpush1.bf16.msra.mxu0 0
    %4555 = vmatprep.subr.bf16.mxu0 0
    %4556 = vmatpush1.bf16.msra.mxu0 0
    %4557 = vmatprep.subr.bf16.mxu0 0
    %4558 = vmatpush1.bf16.msra.mxu0 0
    %4559 = vmatprep.subr.bf16.mxu0 0
    %4560 = vmatpush1.bf16.msra.mxu0 0
    %4561 = vmatprep.subr.bf16.mxu0 0
    %4562 = vmatpush1.bf16.msra.mxu0 0
    %4563 = vmatprep.subr.bf16.mxu0 0
    %4564 = vmatpush1.bf16.msra.mxu0 0
    %4565 = vmatprep.mubr.bf16.mxu0 0
    %4566 = vmatmul.mubr.bf16.gmra.mrb[0].mxu0 %v4483
    %v4567 = vpop.f32.mrb[0].mxu0
    %v4568 = vadd.f32 %v4474, %v4567
    %v4569 = vpop.f32.mrb[0].mxu0
    %v4570 = vpop.f32.mrb[0].mxu0
    %v4571 = vpop.f32.mrb[0].mxu0
    %4572 = vdwg.mxu0
    %v4573 = vtanh.pop %v4568
    %v4574 = vpack.c.bf16 %v4573, %v4573
    %v4575 = vld [vmem:[#allocation28] sm:$0xf]
    %v4576 = vld [vmem:[#allocation28 + $0x4] sm:$0xf]
    %v4577 = vld [vmem:[#allocation28 + $0x8] sm:$0xf]
    %v4578 = vld [vmem:[#allocation28 + $0xc] sm:$0xf]
    %v4579 = vld [vmem:[#allocation28 + $0x10] sm:$0xf]
    %v4580 = vld [vmem:[#allocation28 + $0x14] sm:$0xf]
    %v4581 = vld [vmem:[#allocation28 + $0x18] sm:$0xf]
    %v4582 = vld [vmem:[#allocation28 + $0x1c] sm:$0xf]
    %v4583 = vld [vmem:[#allocation28 + $0x20] sm:$0xf]
    %v4584 = vld [vmem:[#allocation28 + $0x24] sm:$0xf]
    %v4585 = vld [vmem:[#allocation28 + $0x28] sm:$0xf]
    %v4586 = vld [vmem:[#allocation28 + $0x2c] sm:$0xf]
    %v4587 = vld [vmem:[#allocation28 + $0x30] sm:$0xf]
    %v4588 = vld [vmem:[#allocation28 + $0x34] sm:$0xf]
    %v4589 = vld [vmem:[#allocation28 + $0x38] sm:$0xf]
    %v4590 = vld [vmem:[#allocation28 + $0x3c] sm:$0xf]
    %v4591 = vld [vmem:[#allocation29] sm:$0x1]
    %v4593 = vlaneseq
    %v4594 = vshrl.u32 %v4593, 7
    %v4595 = vsub.s32 0, %v4594
    %v4596 = vrot.slane %v4591, %v4595
    %v4614 = vunpack.c.l.b16 %v4575
    %v4615 = vunpack.c.l.b16 %v4576
    %v4616 = vunpack.c.l.b16 %v4577
    %v4617 = vunpack.c.l.b16 %v4578
    %v4618 = vunpack.c.l.b16 %v4579
    %v4619 = vunpack.c.l.b16 %v4580
    %v4620 = vunpack.c.l.b16 %v4581
    %v4621 = vunpack.c.l.b16 %v4582
    %v4622 = vunpack.c.l.b16 %v4583
    %v4623 = vunpack.c.l.b16 %v4584
    %v4624 = vunpack.c.l.b16 %v4585
    %v4625 = vunpack.c.l.b16 %v4586
    %v4626 = vunpack.c.l.b16 %v4587
    %v4627 = vunpack.c.l.b16 %v4588
    %v4628 = vunpack.c.l.b16 %v4589
    %v4629 = vunpack.c.l.b16 %v4590
    %v4630 = vpack.c.b16 %v4615, %v4614
    %v4631 = vpack.c.b16 %v4617, %v4616
    %v4632 = vpack.c.b16 %v4619, %v4618
    %v4633 = vpack.c.b16 %v4621, %v4620
    %v4634 = vpack.c.b16 %v4623, %v4622
    %v4635 = vpack.c.b16 %v4625, %v4624
    %v4636 = vpack.c.b16 %v4627, %v4626
    %v4637 = vpack.c.b16 %v4629, %v4628
    %4646 = vmatprep.subr.bf16.mxu0 0
    %4647 = vmatpush1.bf16.msra.mxu0 %v4630
    %4648 = vmatprep.subr.bf16.mxu0 0
    %4649 = vmatpush1.bf16.msra.mxu0 %v4631
    %4650 = vmatprep.subr.bf16.mxu0 0
    %4651 = vmatpush1.bf16.msra.mxu0 %v4632
    %4652 = vmatprep.subr.bf16.mxu0 0
    %4653 = vmatpush1.bf16.msra.mxu0 %v4633
    %4654 = vmatprep.subr.bf16.mxu0 0
    %4655 = vmatpush1.bf16.msra.mxu0 %v4634
    %4656 = vmatprep.subr.bf16.mxu0 0
    %4657 = vmatpush1.bf16.msra.mxu0 %v4635
    %4658 = vmatprep.subr.bf16.mxu0 0
    %4659 = vmatpush1.bf16.msra.mxu0 %v4636
    %4660 = vmatprep.subr.bf16.mxu0 0
    %4661 = vmatpush1.bf16.msra.mxu0 %v4637
    %4662 = vmatprep.subr.bf16.mxu0 0
    %4663 = vmatpush1.bf16.msra.mxu0 0
    %4664 = vmatprep.subr.bf16.mxu0 0
    %4665 = vmatpush1.bf16.msra.mxu0 0
    %4666 = vmatprep.subr.bf16.mxu0 0
    %4667 = vmatpush1.bf16.msra.mxu0 0
    %4668 = vmatprep.subr.bf16.mxu0 0
    %4669 = vmatpush1.bf16.msra.mxu0 0
    %4670 = vmatprep.subr.bf16.mxu0 0
    %4671 = vmatpush1.bf16.msra.mxu0 0
    %4672 = vmatprep.subr.bf16.mxu0 0
    %4673 = vmatpush1.bf16.msra.mxu0 0
    %4674 = vmatprep.subr.bf16.mxu0 0
    %4675 = vmatpush1.bf16.msra.mxu0 0
    %4676 = vmatprep.subr.bf16.mxu0 0
    %4677 = vmatpush1.bf16.msra.mxu0 0
    %4678 = vmatprep.mubr.bf16.mxu0 0
    %4679 = vmatmul.mubr.bf16.gmra.mrb[0].mxu0 %v4574
    %v4680 = vpop.f32.mrb[0].mxu0
    %v4681 = vadd.f32 %v4596, %v4680
    %v4682 = vpop.f32.mrb[0].mxu0
    %v4683 = vpop.f32.mrb[0].mxu0
    %v4684 = vpop.f32.mrb[0].mxu0
    %4685 = vdwg.mxu0
    %4686 = vst [vmem:[#allocation31] sm:$0x3] %v4681
    // Predicated region
    $region170: #{forward.1} parent=1 // pred_check
      _
    $region171: #{forward.1} parent=1 // pred_check_branch
      %4688 = sbr.rel (0) target = $region173
    $region172: #{forward.1} parent=1 // pred_region
      %s4690 = ssub.s32 32, 32
      %4691 = vsyncadd [#allocation4], %s4690
      %s4693 = sshll.u32 [#allocation31], 4
      %s4694 = int_to_ptr.vmem [resolvable:$true] %s4693
      %4696 = dma.vmem_to_hbm [thread:$0]  %s4694, 32, %s24, [#allocation4]
    $region173: #{forward.1} parent=1 // pred_fallthru
      _
    // Predicated region
    $region174: #{forward.1} parent=1 // pred_check
      _
    $region175: #{forward.1} parent=1 // pred_check_branch
      %4698 = sbr.rel (0) target = $region177
    $region176: #{forward.1} parent=1 // pred_region
      %4699 = dma.done [#allocation4], 32
    $region177: #{forward.1} parent=1 // pred_fallthru
      _
    %4700 = vsyncpa [#allocation3], 1
    %4701 = vsyncpa [#allocation6], 1
    %4702 = vsyncpa [#allocation9], 1
    %4703 = vsyncpa [#allocation12], 1
    %4704 = vsyncpa [#allocation15], 1
    %4705 = vsyncpa [#allocation18], 1
    %4706 = vsyncpa [#allocation21], 1
    %4707 = vsyncpa [#allocation24], 1
    %4708 = vsyncpa [#allocation27], 1
    %4709 = vsyncpa [#allocation30], 1
    %4710 = vsyncpa [#allocation4], 1

</llo_original>
